<compile_context>
chip_gen: v7x
topology: tpu7x:2x2x1
jax: 0.10.0
libtpu: 0.0.40
codegen_flags: <defaults>
</compile_context>

<pallas_src>
import functools

import jax
import jax.numpy as jnp
from jax.experimental import pallas as pl
from jax.experimental.pallas import tpu as pltpu

VEC_SIZE = 300        # Conv1d in_channels
COUT = 100            # Conv1d out_channels
COUT_PAD = 104        # out_channels padded to a sublane multiple of 8
CIN_PAD = 384         # 300 channels padded to a multiple of 128 lanes
MAXPAD = 2            # max conv padding; every frame carries 2 zeros on the left
NSHIFT = 5            # tap shifts needed: (MAXPAD - P) + k ranges over 0..4
CONVS = ((3, 1), (4, 2), (5, 2))   # (kernel_size, padding); applied to both channels

assert CIN_PAD % 128 == 0 and CIN_PAD >= VEC_SIZE
assert COUT_PAD % 8 == 0 and COUT_PAD >= COUT
assert all(0 <= MAXPAD - P and MAXPAD - P + K <= NSHIFT for K, P in CONVS)


def cnn_kernel(x1_ref, x2_ref,
               w11_ref, w12_ref, w13_ref, w21_ref, w22_ref, w23_ref,
               mask_ref, cb_ref, wl_ref, bl_ref, out_ref,
               *, tile_b, lf):
    """One batch tile: 6 convs + bias + ReLU + max-over-time + Linear(600, 1).

    x*_ref:   (tile_b*lf, NSHIFT*CIN_PAD) bf16 — rows are flattened (batch, time)
              positions, lanes hold the 5 tap-shifted copies of the 384-padded
              channel vector (wrapper-built im2col stack).
    w*_ref:   (K*CIN_PAD, COUT_PAD) bf16 conv weights, taps stacked along the
              contraction dim.
    mask_ref: (tile_b*lf, 3) f32, 1.0 on each conv shape's valid output rows.
    cb_ref:   (6, COUT_PAD) f32 conv biases.
    wl_ref:   (6, COUT_PAD) f32 final linear weight; bl_ref: (1, 1) f32 bias.
    out_ref:  (tile_b, 1) f32 logits.
    """
    w_refs = ((w11_ref, w12_ref, w13_ref), (w21_ref, w22_ref, w23_ref))
    z = jnp.zeros((tile_b, COUT_PAD), jnp.float32)

    for c, x_ref in enumerate((x1_ref, x2_ref)):
        for j, (K, P) in enumerate(CONVS):
            off = MAXPAD - P
            # 128-lane-aligned slice of the tap stack: taps off .. off+K-1.
            xs = x_ref[:, pl.ds(off * CIN_PAD, K * CIN_PAD)]          # (rows, K*384)
            y = jnp.dot(xs, w_refs[c][j][...],
                        preferred_element_type=jnp.float32)           # (rows, 104) f32
            y = jnp.maximum(y + cb_ref[pl.ds(3 * c + j, 1), :], 0.0)  # bias + ReLU
            # Zeroing invalid rows is max-safe only because ReLU output >= 0.
            y = y * mask_ref[:, pl.ds(j, 1)]
            # Max over time = sublane-group reduce (no transpose needed).
            pooled = jnp.max(y.reshape(tile_b, lf, COUT_PAD), axis=1)  # (tile_b, 104)
            # Accumulate this conv's 100-wide slice of the final Linear(600, 1).
            z = z + pooled * wl_ref[pl.ds(3 * c + j, 1), :]

    # TODO(synk): nn.Dropout(p=0.5) is identity at inference (eval mode); no RNG here.
    out_ref[...] = jnp.sum(z, axis=1, keepdims=True) + bl_ref[...]


def _round_up(x, m):
    return ((x + m - 1) // m) * m


def _choose_tile_b(batch, lf, target_rows=1024):
    """Rows per grid step (tile_b * lf) ~ 1024; keep nT >= 2 when batch allows."""
    cap = max(1, target_rows // lf)
    tile_b = max(1, min(cap, batch))
    if batch >= 2:
        # v7x has two TensorCores and the batch-tile axis is the only parallel
        # grid dimension: keep at least two grid steps so neither core idles.
        tile_b = min(tile_b, -(-batch // 2))
    return tile_b


def cnn_2channel_forward(tokens, params):
    """tokens: (B, L) int32 token ids (i.e. batch.text.t()).  Returns (B,) f32 logits."""
    B, L = tokens.shape
    Lf = _round_up(L + 2 * MAXPAD, 8)          # per-sample frame length (multiple of 8)
    # Taps for valid output positions must never read past their own frame.
    assert Lf >= L + MAXPAD + max(P for _, P in CONVS), "frame too short for conv taps"

    tile_b = _choose_tile_b(B, Lf)
    Bp = _round_up(B, tile_b)
    nT = Bp // tile_b
    NV = tile_b * Lf                            # matmul M (rows) per grid step

    def prep_channel(emb_table):
        # bf16 right after the gather so all wrapper layout work moves half the bytes.
        e = emb_table[tokens].astype(jnp.bfloat16)                     # (B, L, 300)
        x = jnp.pad(e, ((0, Bp - B), (MAXPAD, Lf - L - MAXPAD),
                        (0, CIN_PAD - VEC_SIZE)))                      # (Bp, Lf, 384)
        xf = x.reshape(Bp * Lf, CIN_PAD)
        xf = jnp.pad(xf, ((0, NSHIFT), (0, 0)))                        # room for tap shifts
        # im2col tap stack: lane band s holds rows shifted up by s (tap reads row r+s).
        stk = jnp.concatenate([xf[s:s + Bp * Lf] for s in range(NSHIFT)], axis=-1)
        return stk.reshape(nT, NV, NSHIFT * CIN_PAD)                   # bf16

    x1 = prep_channel(params['emb_w'])
    x2 = prep_channel(params['emb_s'])

    def pack_w(w, K):
        # torch Conv1d weight (100, 300, K) -> (K*CIN_PAD, COUT_PAD) bf16,
        # taps stacked along the contraction (rows), out-channels on lanes.
        wp = jnp.zeros((K * CIN_PAD, COUT_PAD), jnp.float32)
        for k in range(K):
            wp = wp.at[k * CIN_PAD:k * CIN_PAD + VEC_SIZE, :COUT].set(
                jnp.transpose(w[:, :, k]))
        return wp.astype(jnp.bfloat16)

    ws = []
    for idx, (K, P) in enumerate(CONVS):       # channel 1: conv1..conv3
        ws.append(pack_w(params[f'w{idx + 1}'], K))
    for idx, (K, P) in enumerate(CONVS):       # channel 2: conv4..conv6
        ws.append(pack_w(params[f'w{idx + 4}'], K))

    # Conv biases, f32, padded out-channels are zero.
    cb = jnp.zeros((6, COUT_PAD), jnp.float32)
    for i in range(6):
        cb = cb.at[i, :COUT].set(params[f'b{i + 1}'].astype(jnp.float32))

    # Valid-output masks per conv shape: row r is a real PyTorch conv output iff
    # (r mod Lf) < Lout.  Same for every batch tile.
    pos = jnp.arange(NV, dtype=jnp.int32) % Lf
    mask = jnp.stack([(pos < (L + 2 * P - K + 1)).astype(jnp.float32)
                      for K, P in CONVS], axis=1)                      # (NV, 3)

    wl = params['wl'].reshape(6, COUT).astype(jnp.float32)
    wl = jnp.pad(wl, ((0, 0), (0, COUT_PAD - COUT)))                   # (6, 104)
    bl = params['bl'].reshape(1, 1).astype(jnp.float32)

    kernel = functools.partial(cnn_kernel, tile_b=tile_b, lf=Lf)

    # VMEM budget computed from actual buffer sizes (safe on v7x's 64 MiB/TC).
    x_block_bytes = NV * NSHIFT * CIN_PAD * 2
    w_bytes = sum(int(w.size) for w in ws) * 2
    vmem_est = (2 * 2 * x_block_bytes          # x1/x2 tiles, double-buffered
                + 2 * w_bytes                  # resident conv weights
                + x_block_bytes                # matmul operand temporaries
                + 6 * NV * COUT_PAD * 4        # f32 result / pooling temporaries
                + (4 << 20))                   # compiler scratch headroom
    vmem_limit = int(min(max(vmem_est, 32 << 20), 96 << 20))

    total_k = sum(K for K, _ in CONVS) * CIN_PAD
    cost = pl.CostEstimate(
        flops=int(2 * 2 * Bp * Lf * total_k * COUT_PAD),
        transcendentals=0,
        bytes_accessed=int((x1.size + x2.size) * 2 + sum(int(w.size) for w in ws) * 2
                           + mask.size * 4 + Bp * 4))

    grid_spec = pltpu.PrefetchScalarGridSpec(
        num_scalar_prefetch=0,
        grid=(nT,),
        in_specs=[
            pl.BlockSpec((None, NV, NSHIFT * CIN_PAD), lambda i: (i, 0, 0)),  # x1 tile
            pl.BlockSpec((None, NV, NSHIFT * CIN_PAD), lambda i: (i, 0, 0)),  # x2 tile
            *[pl.BlockSpec(w.shape, lambda i: (0, 0)) for w in ws],           # weights resident
            pl.BlockSpec((NV, 3), lambda i: (0, 0)),                          # masks
            pl.BlockSpec((6, COUT_PAD), lambda i: (0, 0)),                    # conv biases
            pl.BlockSpec((6, COUT_PAD), lambda i: (0, 0)),                    # linear weight
            pl.BlockSpec((1, 1), lambda i: (0, 0)),                           # linear bias
        ],
        out_specs=pl.BlockSpec((None, tile_b, 1), lambda i: (i, 0, 0)),
    )

    out = pl.pallas_call(
        kernel,
        grid_spec=grid_spec,
        out_shape=jax.ShapeDtypeStruct((nT, tile_b, 1), jnp.float32),
        compiler_params=pltpu.CompilerParams(
            dimension_semantics=("parallel",),
            vmem_limit_bytes=vmem_limit,
        ),
        cost_estimate=cost,
    )(x1, x2, *ws, mask, cb, wl, bl)

    return out.reshape(Bp)[:B]                                         # .squeeze()


def reference_forward(tokens, params):
    """Pure-JAX f32 reference mirroring the PyTorch forward (eval mode)."""
    e1 = jnp.transpose(params['emb_w'][tokens], (0, 2, 1))
    e2 = jnp.transpose(params['emb_s'][tokens], (0, 2, 1))

    def crm(x, w, b, pad):
        c = jax.lax.conv_general_dilated(
            x, w, window_strides=(1,), padding=[(pad, pad)],
            dimension_numbers=('NCH', 'OIH', 'NCH')) + b[None, :, None]
        c = jnp.maximum(c, 0.0)
        return jnp.max(c, axis=2)

    p = jnp.concatenate([
        crm(e1, params['w1'], params['b1'], 1),
        crm(e1, params['w2'], params['b2'], 2),
        crm(e1, params['w3'], params['b3'], 2),
        crm(e2, params['w4'], params['b4'], 1),
        crm(e2, params['w5'], params['b5'], 2),
        crm(e2, params['w6'], params['b6'], 2),
    ], axis=1)                                               # (B, 600)
    return (p @ params['wl'].T + params['bl'])[:, 0]


def init_params(key, vocab_size):
    ks = jax.random.split(key, 16)
    s = 0.1
    p = {
        'emb_w': s * jax.random.normal(ks[0], (vocab_size, VEC_SIZE), jnp.float32),
        'emb_s': s * jax.random.normal(ks[1], (vocab_size, VEC_SIZE), jnp.float32),
        'wl':    s * jax.random.normal(ks[2], (1, 6 * COUT), jnp.float32),
        'bl':    s * jax.random.normal(ks[3], (1,), jnp.float32),
    }
    ksizes = [3, 4, 5, 3, 4, 5]
    for i, K in enumerate(ksizes, start=1):
        p[f'w{i}'] = s * jax.random.normal(ks[3 + 2 * i], (COUT, VEC_SIZE, K), jnp.float32)
        p[f'b{i}'] = s * jax.random.normal(ks[4 + 2 * i], (COUT,), jnp.float32)
    return p


if __name__ == "__main__":
    key = jax.random.PRNGKey(0)
    k_par, k_tok = jax.random.split(key)

    vocab_size = 50
    seq_len = 8
    batch = 2

    params = init_params(k_par, vocab_size)
    # Emulate torchtext: batch.text has shape (seq_len, batch); forward does .t()
    text = jax.random.randint(k_tok, (seq_len, batch), 0, vocab_size, dtype=jnp.int32)
    tokens = text.T                                          # (batch, seq_len)

    out = jax.block_until_ready(cnn_2channel_forward(tokens, params))
    ref = jax.block_until_ready(reference_forward(tokens, params))

    assert out.shape == (batch,)
    # bf16 MXU operands / bf16 embeddings (f32 accumulation + f32 biases) vs. the
    # f32 reference -> relaxed tolerance.
    assert jnp.allclose(out, ref, atol=5e-2, rtol=5e-2), (out, ref)
    print("KERNEL_OK")
</pallas_src>

<mosaic_0001>
module attributes {stable_mosaic.version = 11 : i64} {
  func.func @cnn_kernel(%arg0: i32, %arg1: memref<1x16x1920xbf16, #tpu.memory_space<vmem>>, %arg2: memref<1x16x1920xbf16, #tpu.memory_space<vmem>>, %arg3: memref<1152x104xbf16, #tpu.memory_space<vmem>>, %arg4: memref<1536x104xbf16, #tpu.memory_space<vmem>>, %arg5: memref<1920x104xbf16, #tpu.memory_space<vmem>>, %arg6: memref<1152x104xbf16, #tpu.memory_space<vmem>>, %arg7: memref<1536x104xbf16, #tpu.memory_space<vmem>>, %arg8: memref<1920x104xbf16, #tpu.memory_space<vmem>>, %arg9: memref<16x3xf32, #tpu.memory_space<vmem>>, %arg10: memref<6x104xf32, #tpu.memory_space<vmem>>, %arg11: memref<6x104xf32, #tpu.memory_space<vmem>>, %arg12: memref<1x1xf32, #tpu.memory_space<vmem>>, %arg13: memref<1x1x1xf32, #tpu.memory_space<vmem>>) attributes {dimension_semantics = [#tpu.dimension_semantics<parallel>], iteration_bounds = array<i64: 2>, scalar_prefetch = 0 : i64, scratch_operands = 0 : i64, tpu.core_type = #tpu.core_type<tc>, window_params = [{transform_indices = @transform_0, window_bounds = array<i64: 1, 16, 1920>}, {transform_indices = @transform_1, window_bounds = array<i64: 1, 16, 1920>}, {pipeline_mode = #tpu.pipeline_mode<synchronous>, transform_indices = @transform_2, window_bounds = array<i64: 1152, 104>}, {pipeline_mode = #tpu.pipeline_mode<synchronous>, transform_indices = @transform_3, window_bounds = array<i64: 1536, 104>}, {pipeline_mode = #tpu.pipeline_mode<synchronous>, transform_indices = @transform_4, window_bounds = array<i64: 1920, 104>}, {pipeline_mode = #tpu.pipeline_mode<synchronous>, transform_indices = @transform_5, window_bounds = array<i64: 1152, 104>}, {pipeline_mode = #tpu.pipeline_mode<synchronous>, transform_indices = @transform_6, window_bounds = array<i64: 1536, 104>}, {pipeline_mode = #tpu.pipeline_mode<synchronous>, transform_indices = @transform_7, window_bounds = array<i64: 1920, 104>}, {pipeline_mode = #tpu.pipeline_mode<synchronous>, transform_indices = @transform_8, window_bounds = array<i64: 16, 3>}, {pipeline_mode = #tpu.pipeline_mode<synchronous>, transform_indices = @transform_9, window_bounds = array<i64: 6, 104>}, {pipeline_mode = #tpu.pipeline_mode<synchronous>, transform_indices = @transform_10, window_bounds = array<i64: 6, 104>}, {pipeline_mode = #tpu.pipeline_mode<synchronous>, transform_indices = @transform_11, window_bounds = array<i64: 1, 1>}, {transform_indices = @transform_12, window_bounds = array<i64: 1, 1, 1>}]} {
    %cst = arith.constant 0.000000e+00 : f32
    %0 = vector.broadcast %cst : f32 to vector<1x104xf32>
    %c0 = arith.constant 0 : index
    %c0_0 = arith.constant 0 : index
    %c384 = arith.constant 384 : index
    %1 = vector.load %arg1[%c0, %c0_0, %c384] : memref<1x16x1920xbf16, #tpu.memory_space<vmem>>, vector<1x16x1152xbf16>
    %2 = vector.shape_cast %1 : vector<1x16x1152xbf16> to vector<16x1152xbf16>
    %c0_1 = arith.constant 0 : index
    %c0_2 = arith.constant 0 : index
    %3 = vector.load %arg3[%c0_1, %c0_2] : memref<1152x104xbf16, #tpu.memory_space<vmem>>, vector<1152x104xbf16>
    %cst_3 = arith.constant dense<0.000000e+00> : vector<16x104xf32>
    %4 = tpu.matmul %2, %3, %cst_3 {dimension_numbers = #tpu.dot_dimension_numbers<[1], [0], [0], [1], [0, 0, 1, 1], [], []>} : vector<16x1152xbf16>, vector<1152x104xbf16>, vector<16x104xf32> -> vector<16x104xf32>
    %c0_4 = arith.constant 0 : index
    %c0_5 = arith.constant 0 : index
    %5 = vector.load %arg10[%c0_4, %c0_5] : memref<6x104xf32, #tpu.memory_space<vmem>>, vector<1x104xf32>
    %6 = vector.broadcast %5 : vector<1x104xf32> to vector<16x104xf32>
    %7 = arith.addf %4, %6 : vector<16x104xf32>
    %cst_6 = arith.constant 0.000000e+00 : f32
    %8 = vector.broadcast %cst_6 : f32 to vector<16x104xf32>
    %9 = arith.maximumf %7, %8 : vector<16x104xf32>
    %c0_7 = arith.constant 0 : index
    %c0_8 = arith.constant 0 : index
    %10 = vector.load %arg9[%c0_7, %c0_8] : memref<16x3xf32, #tpu.memory_space<vmem>>, vector<16x1xf32>
    %11 = vector.broadcast %10 : vector<16x1xf32> to vector<16x104xf32>
    %12 = arith.mulf %9, %11 : vector<16x104xf32>
    %13 = vector.shape_cast %12 : vector<16x104xf32> to vector<1x16x104xf32>
    %cst_9 = arith.constant dense<0xFF800000> : vector<1x104xf32>
    %14 = vector.multi_reduction <maximumf>, %13, %cst_9 [1] : vector<1x16x104xf32> to vector<1x104xf32>
    %c0_10 = arith.constant 0 : index
    %c0_11 = arith.constant 0 : index
    %15 = vector.load %arg11[%c0_10, %c0_11] : memref<6x104xf32, #tpu.memory_space<vmem>>, vector<1x104xf32>
    %16 = arith.mulf %14, %15 : vector<1x104xf32>
    %17 = arith.addf %0, %16 : vector<1x104xf32>
    %c0_12 = arith.constant 0 : index
    %c0_13 = arith.constant 0 : index
    %c0_14 = arith.constant 0 : index
    %18 = vector.load %arg1[%c0_12, %c0_13, %c0_14] : memref<1x16x1920xbf16, #tpu.memory_space<vmem>>, vector<1x16x1536xbf16>
    %19 = vector.shape_cast %18 : vector<1x16x1536xbf16> to vector<16x1536xbf16>
    %c0_15 = arith.constant 0 : index
    %c0_16 = arith.constant 0 : index
    %20 = vector.load %arg4[%c0_15, %c0_16] : memref<1536x104xbf16, #tpu.memory_space<vmem>>, vector<1536x104xbf16>
    %cst_17 = arith.constant dense<0.000000e+00> : vector<16x104xf32>
    %21 = tpu.matmul %19, %20, %cst_17 {dimension_numbers = #tpu.dot_dimension_numbers<[1], [0], [0], [1], [0, 0, 1, 1], [], []>} : vector<16x1536xbf16>, vector<1536x104xbf16>, vector<16x104xf32> -> vector<16x104xf32>
    %c1 = arith.constant 1 : index
    %c0_18 = arith.constant 0 : index
    %22 = vector.load %arg10[%c1, %c0_18] : memref<6x104xf32, #tpu.memory_space<vmem>>, vector<1x104xf32>
    %23 = vector.broadcast %22 : vector<1x104xf32> to vector<16x104xf32>
    %24 = arith.addf %21, %23 : vector<16x104xf32>
    %cst_19 = arith.constant 0.000000e+00 : f32
    %25 = vector.broadcast %cst_19 : f32 to vector<16x104xf32>
    %26 = arith.maximumf %24, %25 : vector<16x104xf32>
    %c0_20 = arith.constant 0 : index
    %c1_21 = arith.constant 1 : index
    %27 = vector.load %arg9[%c0_20, %c1_21] : memref<16x3xf32, #tpu.memory_space<vmem>>, vector<16x1xf32>
    %28 = vector.broadcast %27 : vector<16x1xf32> to vector<16x104xf32>
    %29 = arith.mulf %26, %28 : vector<16x104xf32>
    %30 = vector.shape_cast %29 : vector<16x104xf32> to vector<1x16x104xf32>
    %cst_22 = arith.constant dense<0xFF800000> : vector<1x104xf32>
    %31 = vector.multi_reduction <maximumf>, %30, %cst_22 [1] : vector<1x16x104xf32> to vector<1x104xf32>
    %c1_23 = arith.constant 1 : index
    %c0_24 = arith.constant 0 : index
    %32 = vector.load %arg11[%c1_23, %c0_24] : memref<6x104xf32, #tpu.memory_space<vmem>>, vector<1x104xf32>
    %33 = arith.mulf %31, %32 : vector<1x104xf32>
    %34 = arith.addf %17, %33 : vector<1x104xf32>
    %c0_25 = arith.constant 0 : index
    %c0_26 = arith.constant 0 : index
    %c0_27 = arith.constant 0 : index
    %35 = vector.load %arg1[%c0_25, %c0_26, %c0_27] : memref<1x16x1920xbf16, #tpu.memory_space<vmem>>, vector<1x16x1920xbf16>
    %36 = vector.shape_cast %35 : vector<1x16x1920xbf16> to vector<16x1920xbf16>
    %c0_28 = arith.constant 0 : index
    %c0_29 = arith.constant 0 : index
    %37 = vector.load %arg5[%c0_28, %c0_29] : memref<1920x104xbf16, #tpu.memory_space<vmem>>, vector<1920x104xbf16>
    %cst_30 = arith.constant dense<0.000000e+00> : vector<16x104xf32>
    %38 = tpu.matmul %36, %37, %cst_30 {dimension_numbers = #tpu.dot_dimension_numbers<[1], [0], [0], [1], [0, 0, 1, 1], [], []>} : vector<16x1920xbf16>, vector<1920x104xbf16>, vector<16x104xf32> -> vector<16x104xf32>
    %c2 = arith.constant 2 : index
    %c0_31 = arith.constant 0 : index
    %39 = vector.load %arg10[%c2, %c0_31] : memref<6x104xf32, #tpu.memory_space<vmem>>, vector<1x104xf32>
    %40 = vector.broadcast %39 : vector<1x104xf32> to vector<16x104xf32>
    %41 = arith.addf %38, %40 : vector<16x104xf32>
    %cst_32 = arith.constant 0.000000e+00 : f32
    %42 = vector.broadcast %cst_32 : f32 to vector<16x104xf32>
    %43 = arith.maximumf %41, %42 : vector<16x104xf32>
    %c0_33 = arith.constant 0 : index
    %c2_34 = arith.constant 2 : index
    %44 = vector.load %arg9[%c0_33, %c2_34] : memref<16x3xf32, #tpu.memory_space<vmem>>, vector<16x1xf32>
    %45 = vector.broadcast %44 : vector<16x1xf32> to vector<16x104xf32>
    %46 = arith.mulf %43, %45 : vector<16x104xf32>
    %47 = vector.shape_cast %46 : vector<16x104xf32> to vector<1x16x104xf32>
    %cst_35 = arith.constant dense<0xFF800000> : vector<1x104xf32>
    %48 = vector.multi_reduction <maximumf>, %47, %cst_35 [1] : vector<1x16x104xf32> to vector<1x104xf32>
    %c2_36 = arith.constant 2 : index
    %c0_37 = arith.constant 0 : index
    %49 = vector.load %arg11[%c2_36, %c0_37] : memref<6x104xf32, #tpu.memory_space<vmem>>, vector<1x104xf32>
    %50 = arith.mulf %48, %49 : vector<1x104xf32>
    %51 = arith.addf %34, %50 : vector<1x104xf32>
    %c0_38 = arith.constant 0 : index
    %c0_39 = arith.constant 0 : index
    %c384_40 = arith.constant 384 : index
    %52 = vector.load %arg2[%c0_38, %c0_39, %c384_40] : memref<1x16x1920xbf16, #tpu.memory_space<vmem>>, vector<1x16x1152xbf16>
    %53 = vector.shape_cast %52 : vector<1x16x1152xbf16> to vector<16x1152xbf16>
    %c0_41 = arith.constant 0 : index
    %c0_42 = arith.constant 0 : index
    %54 = vector.load %arg6[%c0_41, %c0_42] : memref<1152x104xbf16, #tpu.memory_space<vmem>>, vector<1152x104xbf16>
    %cst_43 = arith.constant dense<0.000000e+00> : vector<16x104xf32>
    %55 = tpu.matmul %53, %54, %cst_43 {dimension_numbers = #tpu.dot_dimension_numbers<[1], [0], [0], [1], [0, 0, 1, 1], [], []>} : vector<16x1152xbf16>, vector<1152x104xbf16>, vector<16x104xf32> -> vector<16x104xf32>
    %c3 = arith.constant 3 : index
    %c0_44 = arith.constant 0 : index
    %56 = vector.load %arg10[%c3, %c0_44] : memref<6x104xf32, #tpu.memory_space<vmem>>, vector<1x104xf32>
    %57 = vector.broadcast %56 : vector<1x104xf32> to vector<16x104xf32>
    %58 = arith.addf %55, %57 : vector<16x104xf32>
    %cst_45 = arith.constant 0.000000e+00 : f32
    %59 = vector.broadcast %cst_45 : f32 to vector<16x104xf32>
    %60 = arith.maximumf %58, %59 : vector<16x104xf32>
    %c0_46 = arith.constant 0 : index
    %c0_47 = arith.constant 0 : index
    %61 = vector.load %arg9[%c0_46, %c0_47] : memref<16x3xf32, #tpu.memory_space<vmem>>, vector<16x1xf32>
    %62 = vector.broadcast %61 : vector<16x1xf32> to vector<16x104xf32>
    %63 = arith.mulf %60, %62 : vector<16x104xf32>
    %64 = vector.shape_cast %63 : vector<16x104xf32> to vector<1x16x104xf32>
    %cst_48 = arith.constant dense<0xFF800000> : vector<1x104xf32>
    %65 = vector.multi_reduction <maximumf>, %64, %cst_48 [1] : vector<1x16x104xf32> to vector<1x104xf32>
    %c3_49 = arith.constant 3 : index
    %c0_50 = arith.constant 0 : index
    %66 = vector.load %arg11[%c3_49, %c0_50] : memref<6x104xf32, #tpu.memory_space<vmem>>, vector<1x104xf32>
    %67 = arith.mulf %65, %66 : vector<1x104xf32>
    %68 = arith.addf %51, %67 : vector<1x104xf32>
    %c0_51 = arith.constant 0 : index
    %c0_52 = arith.constant 0 : index
    %c0_53 = arith.constant 0 : index
    %69 = vector.load %arg2[%c0_51, %c0_52, %c0_53] : memref<1x16x1920xbf16, #tpu.memory_space<vmem>>, vector<1x16x1536xbf16>
    %70 = vector.shape_cast %69 : vector<1x16x1536xbf16> to vector<16x1536xbf16>
    %c0_54 = arith.constant 0 : index
    %c0_55 = arith.constant 0 : index
    %71 = vector.load %arg7[%c0_54, %c0_55] : memref<1536x104xbf16, #tpu.memory_space<vmem>>, vector<1536x104xbf16>
    %cst_56 = arith.constant dense<0.000000e+00> : vector<16x104xf32>
    %72 = tpu.matmul %70, %71, %cst_56 {dimension_numbers = #tpu.dot_dimension_numbers<[1], [0], [0], [1], [0, 0, 1, 1], [], []>} : vector<16x1536xbf16>, vector<1536x104xbf16>, vector<16x104xf32> -> vector<16x104xf32>
    %c4 = arith.constant 4 : index
    %c0_57 = arith.constant 0 : index
    %73 = vector.load %arg10[%c4, %c0_57] : memref<6x104xf32, #tpu.memory_space<vmem>>, vector<1x104xf32>
    %74 = vector.broadcast %73 : vector<1x104xf32> to vector<16x104xf32>
    %75 = arith.addf %72, %74 : vector<16x104xf32>
    %cst_58 = arith.constant 0.000000e+00 : f32
    %76 = vector.broadcast %cst_58 : f32 to vector<16x104xf32>
    %77 = arith.maximumf %75, %76 : vector<16x104xf32>
    %c0_59 = arith.constant 0 : index
    %c1_60 = arith.constant 1 : index
    %78 = vector.load %arg9[%c0_59, %c1_60] : memref<16x3xf32, #tpu.memory_space<vmem>>, vector<16x1xf32>
    %79 = vector.broadcast %78 : vector<16x1xf32> to vector<16x104xf32>
    %80 = arith.mulf %77, %79 : vector<16x104xf32>
    %81 = vector.shape_cast %80 : vector<16x104xf32> to vector<1x16x104xf32>
    %cst_61 = arith.constant dense<0xFF800000> : vector<1x104xf32>
    %82 = vector.multi_reduction <maximumf>, %81, %cst_61 [1] : vector<1x16x104xf32> to vector<1x104xf32>
    %c4_62 = arith.constant 4 : index
    %c0_63 = arith.constant 0 : index
    %83 = vector.load %arg11[%c4_62, %c0_63] : memref<6x104xf32, #tpu.memory_space<vmem>>, vector<1x104xf32>
    %84 = arith.mulf %82, %83 : vector<1x104xf32>
    %85 = arith.addf %68, %84 : vector<1x104xf32>
    %c0_64 = arith.constant 0 : index
    %c0_65 = arith.constant 0 : index
    %c0_66 = arith.constant 0 : index
    %86 = vector.load %arg2[%c0_64, %c0_65, %c0_66] : memref<1x16x1920xbf16, #tpu.memory_space<vmem>>, vector<1x16x1920xbf16>
    %87 = vector.shape_cast %86 : vector<1x16x1920xbf16> to vector<16x1920xbf16>
    %c0_67 = arith.constant 0 : index
    %c0_68 = arith.constant 0 : index
    %88 = vector.load %arg8[%c0_67, %c0_68] : memref<1920x104xbf16, #tpu.memory_space<vmem>>, vector<1920x104xbf16>
    %cst_69 = arith.constant dense<0.000000e+00> : vector<16x104xf32>
    %89 = tpu.matmul %87, %88, %cst_69 {dimension_numbers = #tpu.dot_dimension_numbers<[1], [0], [0], [1], [0, 0, 1, 1], [], []>} : vector<16x1920xbf16>, vector<1920x104xbf16>, vector<16x104xf32> -> vector<16x104xf32>
    %c5 = arith.constant 5 : index
    %c0_70 = arith.constant 0 : index
    %90 = vector.load %arg10[%c5, %c0_70] : memref<6x104xf32, #tpu.memory_space<vmem>>, vector<1x104xf32>
    %91 = vector.broadcast %90 : vector<1x104xf32> to vector<16x104xf32>
    %92 = arith.addf %89, %91 : vector<16x104xf32>
    %cst_71 = arith.constant 0.000000e+00 : f32
    %93 = vector.broadcast %cst_71 : f32 to vector<16x104xf32>
    %94 = arith.maximumf %92, %93 : vector<16x104xf32>
    %c0_72 = arith.constant 0 : index
    %c2_73 = arith.constant 2 : index
    %95 = vector.load %arg9[%c0_72, %c2_73] : memref<16x3xf32, #tpu.memory_space<vmem>>, vector<16x1xf32>
    %96 = vector.broadcast %95 : vector<16x1xf32> to vector<16x104xf32>
    %97 = arith.mulf %94, %96 : vector<16x104xf32>
    %98 = vector.shape_cast %97 : vector<16x104xf32> to vector<1x16x104xf32>
    %cst_74 = arith.constant dense<0xFF800000> : vector<1x104xf32>
    %99 = vector.multi_reduction <maximumf>, %98, %cst_74 [1] : vector<1x16x104xf32> to vector<1x104xf32>
    %c5_75 = arith.constant 5 : index
    %c0_76 = arith.constant 0 : index
    %100 = vector.load %arg11[%c5_75, %c0_76] : memref<6x104xf32, #tpu.memory_space<vmem>>, vector<1x104xf32>
    %101 = arith.mulf %99, %100 : vector<1x104xf32>
    %102 = arith.addf %85, %101 : vector<1x104xf32>
    %cst_77 = arith.constant dense<0.000000e+00> : vector<1xf32>
    %103 = vector.multi_reduction <add>, %102, %cst_77 [1] : vector<1x104xf32> to vector<1xf32>
    %104 = vector.shape_cast %103 : vector<1xf32> to vector<1x1xf32>
    %c0_78 = arith.constant 0 : index
    %c0_79 = arith.constant 0 : index
    %105 = vector.load %arg12[%c0_78, %c0_79] : memref<1x1xf32, #tpu.memory_space<vmem>>, vector<1x1xf32>
    %106 = arith.addf %104, %105 : vector<1x1xf32>
    %c0_80 = arith.constant 0 : index
    %c0_81 = arith.constant 0 : index
    %c0_82 = arith.constant 0 : index
    %107 = vector.load %arg13[%c0_80, %c0_81, %c0_82] : memref<1x1x1xf32, #tpu.memory_space<vmem>>, vector<1x1x1xf32>
    %108 = vector.shape_cast %107 : vector<1x1x1xf32> to vector<1x1xf32>
    %109 = vector.shape_cast %106 : vector<1x1xf32> to vector<1x1x1xf32>
    tpu.vector_store %arg13[%c0_80, %c0_81, %c0_82], %109 {strides = array<i32>} : memref<1x1x1xf32, #tpu.memory_space<vmem>>, vector<1x1x1xf32>,
    return
  }
  func.func @transform_0(%arg0: i32) -> (i32, i32, i32) {
    %c0_i32 = arith.constant 0 : i32
    %c0_i32_0 = arith.constant 0 : i32
    %c0_i32_1 = arith.constant 0 : i32
    return %arg0, %c0_i32, %c0_i32_0 : i32, i32, i32
  }
  func.func @transform_1(%arg0: i32) -> (i32, i32, i32) {
    %c0_i32 = arith.constant 0 : i32
    %c0_i32_0 = arith.constant 0 : i32
    %c0_i32_1 = arith.constant 0 : i32
    return %arg0, %c0_i32, %c0_i32_0 : i32, i32, i32
  }
  func.func @transform_2(%arg0: i32) -> (i32, i32) {
    %c0_i32 = arith.constant 0 : i32
    %c0_i32_0 = arith.constant 0 : i32
    %c0_i32_1 = arith.constant 0 : i32
    return %c0_i32, %c0_i32_0 : i32, i32
  }
  func.func @transform_3(%arg0: i32) -> (i32, i32) {
    %c0_i32 = arith.constant 0 : i32
    %c0_i32_0 = arith.constant 0 : i32
    %c0_i32_1 = arith.constant 0 : i32
    return %c0_i32, %c0_i32_0 : i32, i32
  }
  func.func @transform_4(%arg0: i32) -> (i32, i32) {
    %c0_i32 = arith.constant 0 : i32
    %c0_i32_0 = arith.constant 0 : i32
    %c0_i32_1 = arith.constant 0 : i32
    return %c0_i32, %c0_i32_0 : i32, i32
  }
  func.func @transform_5(%arg0: i32) -> (i32, i32) {
    %c0_i32 = arith.constant 0 : i32
    %c0_i32_0 = arith.constant 0 : i32
    %c0_i32_1 = arith.constant 0 : i32
    return %c0_i32, %c0_i32_0 : i32, i32
  }
  func.func @transform_6(%arg0: i32) -> (i32, i32) {
    %c0_i32 = arith.constant 0 : i32
    %c0_i32_0 = arith.constant 0 : i32
    %c0_i32_1 = arith.constant 0 : i32
    return %c0_i32, %c0_i32_0 : i32, i32
  }
  func.func @transform_7(%arg0: i32) -> (i32, i32) {
    %c0_i32 = arith.constant 0 : i32
    %c0_i32_0 = arith.constant 0 : i32
    %c0_i32_1 = arith.constant 0 : i32
    return %c0_i32, %c0_i32_0 : i32, i32
  }
  func.func @transform_8(%arg0: i32) -> (i32, i32) {
    %c0_i32 = arith.constant 0 : i32
    %c0_i32_0 = arith.constant 0 : i32
    %c0_i32_1 = arith.constant 0 : i32
    return %c0_i32, %c0_i32_0 : i32, i32
  }
  func.func @transform_9(%arg0: i32) -> (i32, i32) {
    %c0_i32 = arith.constant 0 : i32
    %c0_i32_0 = arith.constant 0 : i32
    %c0_i32_1 = arith.constant 0 : i32
    return %c0_i32, %c0_i32_0 : i32, i32
  }
  func.func @transform_10(%arg0: i32) -> (i32, i32) {
    %c0_i32 = arith.constant 0 : i32
    %c0_i32_0 = arith.constant 0 : i32
    %c0_i32_1 = arith.constant 0 : i32
    return %c0_i32, %c0_i32_0 : i32, i32
  }
  func.func @transform_11(%arg0: i32) -> (i32, i32) {
    %c0_i32 = arith.constant 0 : i32
    %c0_i32_0 = arith.constant 0 : i32
    %c0_i32_1 = arith.constant 0 : i32
    return %c0_i32, %c0_i32_0 : i32, i32
  }
  func.func @transform_12(%arg0: i32) -> (i32, i32, i32) {
    %c0_i32 = arith.constant 0 : i32
    %c0_i32_0 = arith.constant 0 : i32
    %c0_i32_1 = arith.constant 0 : i32
    return %arg0, %c0_i32, %c0_i32_0 : i32, i32, i32
  }
}

</mosaic_0001>

<llo_original>
// kernel: tpu_custom_call.1
$region0: #{tpu_custom_call.1}
  #allocation0 [shape = 'u32[]', space=smem, size = 0x4, offset = 0x4, fixed_abs, tag = 'smem constant byte address 0x4 - core index']
  #allocation1 [shape = 'u32[144,128]{1,0:T(1,128)}', space=vmem, size = 0x12000, scoped, tag = 'internal scratch']
  #allocation2 [shape = 'f32[1,1]{1,0:T(1,128)S(1)}', space=vmem, size = 0x200, scoped, tag = 'scoped memory for tpu_custom_call.1']
  %s0 = inlined_call_operand.vmem [shape: bf16[2,16,1920], index: 0, kind: input, shape index: {}]
  %s1 = inlined_call_operand.vmem [shape: bf16[2,16,1920], index: 1, kind: input, shape index: {}]
  %s2 = inlined_call_operand.vmem [shape: bf16[1152,104], index: 2, kind: input, shape index: {}]
  %s3 = inlined_call_operand.vmem [shape: bf16[1536,104], index: 3, kind: input, shape index: {}]
  %s4 = inlined_call_operand.vmem [shape: bf16[1920,104], index: 4, kind: input, shape index: {}]
  %s5 = inlined_call_operand.vmem [shape: bf16[1152,104], index: 5, kind: input, shape index: {}]
  %s6 = inlined_call_operand.vmem [shape: bf16[1536,104], index: 6, kind: input, shape index: {}]
  %s7 = inlined_call_operand.vmem [shape: bf16[1920,104], index: 7, kind: input, shape index: {}]
  %s8 = inlined_call_operand.vmem [shape: f32[16,3], index: 8, kind: input, shape index: {}]
  %s9 = inlined_call_operand.vmem [shape: f32[6,104], index: 9, kind: input, shape index: {}]
  %s10 = inlined_call_operand.vmem [shape: f32[6,104], index: 10, kind: input, shape index: {}]
  %s11 = inlined_call_operand.<no memory space> [shape: f32[1,1], index: 11, kind: input, shape index: {}]
  %s12 = inlined_call_operand.vmem [shape: f32[2,1,1], index: 12, kind: output, shape index: {}]
  %s13 = sld [smem:[#allocation0]]
  $region81: #{tpu_custom_call.1} parent=0
    _
  %s15 = ssub.s32 1, %s13
  %s16 = scalar_select 0, %s15, %s13
  %v17 = vstv %s11
  %18 = vst [vmem:[#allocation2] sm:$0x1] %v17
  loop: start=0, step=1, limit=4
  $region2: #{tpu_custom_call.1} parent=0 // loop_pre_header
    _
  $region3: #{tpu_custom_call.1} parent=0 // loop_header
    %s20 = sphi 0, %s24
    %p21 = scmp.ge.s32.totalorder %s20, 4
    %s30 = sphi 0, %s32
    %s33 = sphi 0, %s30
    %s34 = sphi 0, %s33
    %s50 = sphi 0, %s34
    %s56 = sphi 0, %s58
    %s59 = sphi 0, %s56
    %s60 = sphi 0, %s59
    %s76 = sphi 0, %s60
    %s80 = sphi 0, %s80
    %s82 = sphi 0, %s80
    %s83 = sphi 0, %s82
    %s97 = sphi 0, %s83
    %s101 = sphi 0, %s101
    %s103 = sphi 0, %s101
    %s104 = sphi 0, %s103
    %s118 = sphi 0, %s104
    %s122 = sphi 0, %s122
    %s124 = sphi 0, %s122
    %s125 = sphi 0, %s124
    %s139 = sphi 0, %s125
    %s143 = sphi 0, %s143
    %s145 = sphi 0, %s143
    %s146 = sphi 0, %s145
    %s160 = sphi 0, %s146
    %s164 = sphi 0, %s164
    %s166 = sphi 0, %s164
    %s167 = sphi 0, %s166
    %s181 = sphi 0, %s167
    %s185 = sphi 0, %s185
    %s187 = sphi 0, %s185
    %s188 = sphi 0, %s187
    %s202 = sphi 0, %s188
    %s206 = sphi 0, %s206
    %s208 = sphi 0, %s206
    %s209 = sphi 0, %s208
    %s223 = sphi 0, %s209
    %s227 = sphi 0, %s227
    %s229 = sphi 0, %s227
    %s230 = sphi 0, %s229
    %s244 = sphi 0, %s230
    %s248 = sphi 0, %s248
    %s250 = sphi 0, %s248
    %s251 = sphi 0, %s250
    %s265 = sphi 0, %s251
    %s269 = sphi 0, %s269
    %s271 = sphi 0, %s269
    %s272 = sphi 0, %s271
    %s286 = sphi 0, %s272
    %s292 = sphi 0, %s294
    %s295 = sphi 0, %s292
    %s296 = sphi 0, %s295
    %s312 = sphi 0, %s296
  $region4: #{tpu_custom_call.1} parent=0 // loop_header_branch
    %23 = sbr.rel (%p21) target = $region8
  $region5: #{tpu_custom_call.1} parent=0 // loop_body
    %s25 = ssub.s32 %s20, 1
    %s26 = ssub.s32 %s20, 2
    %s27 = sadd.s32 %s20, 1
    %s28 = ssub.s32 %s20, %s27
    %p29 = scmp.eq.s32.totalorder %s28, 0
    %s31 = sadd.s32 %s30, 1
    %s32 = scalar_select %p29, %s30, %s31
    %p35 = pneg %p29
    %p36 = scmp.eq.s32.totalorder %s20, 1
    %p37 = por %p35, %p36
    %p38 = scmp.ne.s32.totalorder %s30, %s33
    %p39 = scmp.eq.s32.totalorder %s20, 0
    %p40 = por %p38, %p39
    %p41 = scmp.ne.s32.totalorder %s30, %s33
    %p42 = scmp.eq.s32.totalorder %s25, 1
    %p43 = por %p41, %p42
    %p44 = scmp.ne.s32.totalorder %s33, %s34
    %p45 = scmp.eq.s32.totalorder %s25, 0
    %p46 = por %p44, %p45
    %p47 = scmp.ne.s32.totalorder %s33, %s34
    %p48 = scmp.eq.s32.totalorder %s26, 1
    %p49 = por %p47, %p48
    %p51 = scmp.ne.s32.totalorder %s34, %s50
    %p52 = scmp.eq.s32.totalorder %s26, 0
    %p53 = por %p51, %p52
    %s54 = ssub.s32 %s20, %s27
    %p55 = scmp.eq.s32.totalorder %s54, 0
    %s57 = sadd.s32 %s56, 1
    %s58 = scalar_select %p55, %s56, %s57
    %p61 = pneg %p55
    %p62 = scmp.eq.s32.totalorder %s20, 1
    %p63 = por %p61, %p62
    %p64 = scmp.ne.s32.totalorder %s56, %s59
    %p65 = scmp.eq.s32.totalorder %s20, 0
    %p66 = por %p64, %p65
    %p67 = scmp.ne.s32.totalorder %s56, %s59
    %p68 = scmp.eq.s32.totalorder %s25, 1
    %p69 = por %p67, %p68
    %p70 = scmp.ne.s32.totalorder %s59, %s60
    %p71 = scmp.eq.s32.totalorder %s25, 0
    %p72 = por %p70, %p71
    %p73 = scmp.ne.s32.totalorder %s59, %s60
    %p74 = scmp.eq.s32.totalorder %s26, 1
    %p75 = por %p73, %p74
    %p77 = scmp.ne.s32.totalorder %s60, %s76
    %p78 = scmp.eq.s32.totalorder %s26, 0
    %p79 = por %p77, %p78
    %s81 = sadd.s32 %s80, 1
    %p84 = scmp.eq.s32.totalorder %s20, 1
    %p85 = scmp.ne.s32.totalorder %s80, %s82
    %p86 = scmp.eq.s32.totalorder %s20, 0
    %p87 = por %p85, %p86
    %p88 = scmp.ne.s32.totalorder %s80, %s82
    %p89 = scmp.eq.s32.totalorder %s25, 1
    %p90 = por %p88, %p89
    %p91 = scmp.ne.s32.totalorder %s82, %s83
    %p92 = scmp.eq.s32.totalorder %s25, 0
    %p93 = por %p91, %p92
    %p94 = scmp.ne.s32.totalorder %s82, %s83
    %p95 = scmp.eq.s32.totalorder %s26, 1
    %p96 = por %p94, %p95
    %p98 = scmp.ne.s32.totalorder %s83, %s97
    %p99 = scmp.eq.s32.totalorder %s26, 0
    %p100 = por %p98, %p99
    %s102 = sadd.s32 %s101, 1
    %p105 = scmp.eq.s32.totalorder %s20, 1
    %p106 = scmp.ne.s32.totalorder %s101, %s103
    %p107 = scmp.eq.s32.totalorder %s20, 0
    %p108 = por %p106, %p107
    %p109 = scmp.ne.s32.totalorder %s101, %s103
    %p110 = scmp.eq.s32.totalorder %s25, 1
    %p111 = por %p109, %p110
    %p112 = scmp.ne.s32.totalorder %s103, %s104
    %p113 = scmp.eq.s32.totalorder %s25, 0
    %p114 = por %p112, %p113
    %p115 = scmp.ne.s32.totalorder %s103, %s104
    %p116 = scmp.eq.s32.totalorder %s26, 1
    %p117 = por %p115, %p116
    %p119 = scmp.ne.s32.totalorder %s104, %s118
    %p120 = scmp.eq.s32.totalorder %s26, 0
    %p121 = por %p119, %p120
    %s123 = sadd.s32 %s122, 1
    %p126 = scmp.eq.s32.totalorder %s20, 1
    %p127 = scmp.ne.s32.totalorder %s122, %s124
    %p128 = scmp.eq.s32.totalorder %s20, 0
    %p129 = por %p127, %p128
    %p130 = scmp.ne.s32.totalorder %s122, %s124
    %p131 = scmp.eq.s32.totalorder %s25, 1
    %p132 = por %p130, %p131
    %p133 = scmp.ne.s32.totalorder %s124, %s125
    %p134 = scmp.eq.s32.totalorder %s25, 0
    %p135 = por %p133, %p134
    %p136 = scmp.ne.s32.totalorder %s124, %s125
    %p137 = scmp.eq.s32.totalorder %s26, 1
    %p138 = por %p136, %p137
    %p140 = scmp.ne.s32.totalorder %s125, %s139
    %p141 = scmp.eq.s32.totalorder %s26, 0
    %p142 = por %p140, %p141
    %s144 = sadd.s32 %s143, 1
    %p147 = scmp.eq.s32.totalorder %s20, 1
    %p148 = scmp.ne.s32.totalorder %s143, %s145
    %p149 = scmp.eq.s32.totalorder %s20, 0
    %p150 = por %p148, %p149
    %p151 = scmp.ne.s32.totalorder %s143, %s145
    %p152 = scmp.eq.s32.totalorder %s25, 1
    %p153 = por %p151, %p152
    %p154 = scmp.ne.s32.totalorder %s145, %s146
    %p155 = scmp.eq.s32.totalorder %s25, 0
    %p156 = por %p154, %p155
    %p157 = scmp.ne.s32.totalorder %s145, %s146
    %p158 = scmp.eq.s32.totalorder %s26, 1
    %p159 = por %p157, %p158
    %p161 = scmp.ne.s32.totalorder %s146, %s160
    %p162 = scmp.eq.s32.totalorder %s26, 0
    %p163 = por %p161, %p162
    %s165 = sadd.s32 %s164, 1
    %p168 = scmp.eq.s32.totalorder %s20, 1
    %p169 = scmp.ne.s32.totalorder %s164, %s166
    %p170 = scmp.eq.s32.totalorder %s20, 0
    %p171 = por %p169, %p170
    %p172 = scmp.ne.s32.totalorder %s164, %s166
    %p173 = scmp.eq.s32.totalorder %s25, 1
    %p174 = por %p172, %p173
    %p175 = scmp.ne.s32.totalorder %s166, %s167
    %p176 = scmp.eq.s32.totalorder %s25, 0
    %p177 = por %p175, %p176
    %p178 = scmp.ne.s32.totalorder %s166, %s167
    %p179 = scmp.eq.s32.totalorder %s26, 1
    %p180 = por %p178, %p179
    %p182 = scmp.ne.s32.totalorder %s167, %s181
    %p183 = scmp.eq.s32.totalorder %s26, 0
    %p184 = por %p182, %p183
    %s186 = sadd.s32 %s185, 1
    %p189 = scmp.eq.s32.totalorder %s20, 1
    %p190 = scmp.ne.s32.totalorder %s185, %s187
    %p191 = scmp.eq.s32.totalorder %s20, 0
    %p192 = por %p190, %p191
    %p193 = scmp.ne.s32.totalorder %s185, %s187
    %p194 = scmp.eq.s32.totalorder %s25, 1
    %p195 = por %p193, %p194
    %p196 = scmp.ne.s32.totalorder %s187, %s188
    %p197 = scmp.eq.s32.totalorder %s25, 0
    %p198 = por %p196, %p197
    %p199 = scmp.ne.s32.totalorder %s187, %s188
    %p200 = scmp.eq.s32.totalorder %s26, 1
    %p201 = por %p199, %p200
    %p203 = scmp.ne.s32.totalorder %s188, %s202
    %p204 = scmp.eq.s32.totalorder %s26, 0
    %p205 = por %p203, %p204
    %s207 = sadd.s32 %s206, 1
    %p210 = scmp.eq.s32.totalorder %s20, 1
    %p211 = scmp.ne.s32.totalorder %s206, %s208
    %p212 = scmp.eq.s32.totalorder %s20, 0
    %p213 = por %p211, %p212
    %p214 = scmp.ne.s32.totalorder %s206, %s208
    %p215 = scmp.eq.s32.totalorder %s25, 1
    %p216 = por %p214, %p215
    %p217 = scmp.ne.s32.totalorder %s208, %s209
    %p218 = scmp.eq.s32.totalorder %s25, 0
    %p219 = por %p217, %p218
    %p220 = scmp.ne.s32.totalorder %s208, %s209
    %p221 = scmp.eq.s32.totalorder %s26, 1
    %p222 = por %p220, %p221
    %p224 = scmp.ne.s32.totalorder %s209, %s223
    %p225 = scmp.eq.s32.totalorder %s26, 0
    %p226 = por %p224, %p225
    %s228 = sadd.s32 %s227, 1
    %p231 = scmp.eq.s32.totalorder %s20, 1
    %p232 = scmp.ne.s32.totalorder %s227, %s229
    %p233 = scmp.eq.s32.totalorder %s20, 0
    %p234 = por %p232, %p233
    %p235 = scmp.ne.s32.totalorder %s227, %s229
    %p236 = scmp.eq.s32.totalorder %s25, 1
    %p237 = por %p235, %p236
    %p238 = scmp.ne.s32.totalorder %s229, %s230
    %p239 = scmp.eq.s32.totalorder %s25, 0
    %p240 = por %p238, %p239
    %p241 = scmp.ne.s32.totalorder %s229, %s230
    %p242 = scmp.eq.s32.totalorder %s26, 1
    %p243 = por %p241, %p242
    %p245 = scmp.ne.s32.totalorder %s230, %s244
    %p246 = scmp.eq.s32.totalorder %s26, 0
    %p247 = por %p245, %p246
    %s249 = sadd.s32 %s248, 1
    %p252 = scmp.eq.s32.totalorder %s20, 1
    %p253 = scmp.ne.s32.totalorder %s248, %s250
    %p254 = scmp.eq.s32.totalorder %s20, 0
    %p255 = por %p253, %p254
    %p256 = scmp.ne.s32.totalorder %s248, %s250
    %p257 = scmp.eq.s32.totalorder %s25, 1
    %p258 = por %p256, %p257
    %p259 = scmp.ne.s32.totalorder %s250, %s251
    %p260 = scmp.eq.s32.totalorder %s25, 0
    %p261 = por %p259, %p260
    %p262 = scmp.ne.s32.totalorder %s250, %s251
    %p263 = scmp.eq.s32.totalorder %s26, 1
    %p264 = por %p262, %p263
    %p266 = scmp.ne.s32.totalorder %s251, %s265
    %p267 = scmp.eq.s32.totalorder %s26, 0
    %p268 = por %p266, %p267
    %s270 = sadd.s32 %s269, 1
    %p273 = scmp.eq.s32.totalorder %s20, 1
    %p274 = scmp.ne.s32.totalorder %s269, %s271
    %p275 = scmp.eq.s32.totalorder %s20, 0
    %p276 = por %p274, %p275
    %p277 = scmp.ne.s32.totalorder %s269, %s271
    %p278 = scmp.eq.s32.totalorder %s25, 1
    %p279 = por %p277, %p278
    %p280 = scmp.ne.s32.totalorder %s271, %s272
    %p281 = scmp.eq.s32.totalorder %s25, 0
    %p282 = por %p280, %p281
    %p283 = scmp.ne.s32.totalorder %s271, %s272
    %p284 = scmp.eq.s32.totalorder %s26, 1
    %p285 = por %p283, %p284
    %p287 = scmp.ne.s32.totalorder %s272, %s286
    %p288 = scmp.eq.s32.totalorder %s26, 0
    %p289 = por %p287, %p288
    %s290 = ssub.s32 %s20, %s27
    %p291 = scmp.eq.s32.totalorder %s290, 0
    %s293 = sadd.s32 %s292, 1
    %s294 = scalar_select %p291, %s292, %s293
    %p297 = pneg %p291
    %p298 = scmp.eq.s32.totalorder %s20, 1
    %p299 = por %p297, %p298
    %p300 = scmp.ne.s32.totalorder %s292, %s295
    %p301 = scmp.eq.s32.totalorder %s20, 0
    %p302 = por %p300, %p301
    %p303 = scmp.ne.s32.totalorder %s292, %s295
    %p304 = scmp.eq.s32.totalorder %s25, 1
    %p305 = por %p303, %p304
    %p306 = scmp.ne.s32.totalorder %s295, %s296
    %p307 = scmp.eq.s32.totalorder %s25, 0
    %p308 = por %p306, %p307
    %p309 = scmp.ne.s32.totalorder %s295, %s296
    %p310 = scmp.eq.s32.totalorder %s26, 1
    %p311 = por %p309, %p310
    %p313 = scmp.ne.s32.totalorder %s296, %s312
    %p314 = scmp.eq.s32.totalorder %s26, 0
    %p315 = por %p313, %p314
    %p316 = scmp.le.s32.totalorder 1, %s20
    %p317 = scmp.lt.s32.totalorder %s20, 3
    %p318 = pnand %p316, %p317
    %p319 = pneg %p318
    // Predicated region
    $region9: #{tpu_custom_call.1} parent=5 // pred_check
      _
    $region10: #{tpu_custom_call.1} parent=5 // pred_check_branch
      %321 = sbr.rel (%p318) target = $region12
    $region11: #{tpu_custom_call.1} parent=5 // pred_region
      %s322 = ssub.s32 %s20, 1
      // Predicated region
      $region13: #{tpu_custom_call.1} parent=11 // pred_check
        %p323 = pneg %p93
      $region14: #{tpu_custom_call.1} parent=11 // pred_check_branch
        %325 = sbr.rel (%p323) target = $region16
      $region15: #{tpu_custom_call.1} parent=11 // pred_region
        _
      $region16: #{tpu_custom_call.1} parent=11 // pred_fallthru
        _
      // Predicated region
      $region17: #{tpu_custom_call.1} parent=11 // pred_check
        %p326 = pneg %p114
      $region18: #{tpu_custom_call.1} parent=11 // pred_check_branch
        %328 = sbr.rel (%p326) target = $region20
      $region19: #{tpu_custom_call.1} parent=11 // pred_region
        _
      $region20: #{tpu_custom_call.1} parent=11 // pred_fallthru
        _
      // Predicated region
      $region21: #{tpu_custom_call.1} parent=11 // pred_check
        %p329 = pneg %p135
      $region22: #{tpu_custom_call.1} parent=11 // pred_check_branch
        %331 = sbr.rel (%p329) target = $region24
      $region23: #{tpu_custom_call.1} parent=11 // pred_region
        _
      $region24: #{tpu_custom_call.1} parent=11 // pred_fallthru
        _
      // Predicated region
      $region25: #{tpu_custom_call.1} parent=11 // pred_check
        %p332 = pneg %p156
      $region26: #{tpu_custom_call.1} parent=11 // pred_check_branch
        %334 = sbr.rel (%p332) target = $region28
      $region27: #{tpu_custom_call.1} parent=11 // pred_region
        _
      $region28: #{tpu_custom_call.1} parent=11 // pred_fallthru
        _
      // Predicated region
      $region29: #{tpu_custom_call.1} parent=11 // pred_check
        %p335 = pneg %p177
      $region30: #{tpu_custom_call.1} parent=11 // pred_check_branch
        %337 = sbr.rel (%p335) target = $region32
      $region31: #{tpu_custom_call.1} parent=11 // pred_region
        _
      $region32: #{tpu_custom_call.1} parent=11 // pred_fallthru
        _
      // Predicated region
      $region33: #{tpu_custom_call.1} parent=11 // pred_check
        %p338 = pneg %p198
      $region34: #{tpu_custom_call.1} parent=11 // pred_check_branch
        %340 = sbr.rel (%p338) target = $region36
      $region35: #{tpu_custom_call.1} parent=11 // pred_region
        _
      $region36: #{tpu_custom_call.1} parent=11 // pred_fallthru
        _
      // Predicated region
      $region37: #{tpu_custom_call.1} parent=11 // pred_check
        %p341 = pneg %p219
      $region38: #{tpu_custom_call.1} parent=11 // pred_check_branch
        %343 = sbr.rel (%p341) target = $region40
      $region39: #{tpu_custom_call.1} parent=11 // pred_region
        _
      $region40: #{tpu_custom_call.1} parent=11 // pred_fallthru
        _
      // Predicated region
      $region41: #{tpu_custom_call.1} parent=11 // pred_check
        %p344 = pneg %p240
      $region42: #{tpu_custom_call.1} parent=11 // pred_check_branch
        %346 = sbr.rel (%p344) target = $region44
      $region43: #{tpu_custom_call.1} parent=11 // pred_region
        _
      $region44: #{tpu_custom_call.1} parent=11 // pred_fallthru
        _
      // Predicated region
      $region45: #{tpu_custom_call.1} parent=11 // pred_check
        %p347 = pneg %p261
      $region46: #{tpu_custom_call.1} parent=11 // pred_check_branch
        %349 = sbr.rel (%p347) target = $region48
      $region47: #{tpu_custom_call.1} parent=11 // pred_region
        _
      $region48: #{tpu_custom_call.1} parent=11 // pred_fallthru
        _
      // Predicated region
      $region49: #{tpu_custom_call.1} parent=11 // pred_check
        %p350 = pneg %p282
      $region50: #{tpu_custom_call.1} parent=11 // pred_check_branch
        %352 = sbr.rel (%p350) target = $region52
      $region51: #{tpu_custom_call.1} parent=11 // pred_region
        _
      $region52: #{tpu_custom_call.1} parent=11 // pred_fallthru
        _
    $region12: #{tpu_custom_call.1} parent=5 // pred_fallthru
      _
    %p353 = scmp.lt.s32.totalorder %s20, 2
    // Predicated region
    $region53: #{tpu_custom_call.1} parent=5 // pred_check
      %p354 = pneg %p353
    $region54: #{tpu_custom_call.1} parent=5 // pred_check_branch
      %356 = sbr.rel (%p354) target = $region56
    $region55: #{tpu_custom_call.1} parent=5 // pred_region
      // Predicated region
      $region57: #{tpu_custom_call.1} parent=55 // pred_check
        %p357 = pneg %p40
      $region58: #{tpu_custom_call.1} parent=55 // pred_check_branch
        %359 = sbr.rel (%p357) target = $region60
      $region59: #{tpu_custom_call.1} parent=55 // pred_region
        %p360 = scmp.lt.s32.totalorder %s20, 1
        %s361 = scalar_select %p360, %s20, 1
        %s362 = smul.addr %s361, 30
        %s363 = smul.addr %s362, 4
        %s364 = scalar_lea.vmem %s0, %s363
      $region60: #{tpu_custom_call.1} parent=55 // pred_fallthru
        _
      // Predicated region
      $region61: #{tpu_custom_call.1} parent=55 // pred_check
        %p365 = pneg %p66
      $region62: #{tpu_custom_call.1} parent=55 // pred_check_branch
        %367 = sbr.rel (%p365) target = $region64
      $region63: #{tpu_custom_call.1} parent=55 // pred_region
        %p368 = scmp.lt.s32.totalorder %s20, 1
        %s369 = scalar_select %p368, %s20, 1
        %s370 = smul.addr %s369, 30
        %s371 = smul.addr %s370, 4
        %s372 = scalar_lea.vmem %s1, %s371
      $region64: #{tpu_custom_call.1} parent=55 // pred_fallthru
        _
    $region56: #{tpu_custom_call.1} parent=5 // pred_fallthru
      _
    %p373 = scmp.le.s32.totalorder 1, %s20
    %p374 = scmp.lt.s32.totalorder %s20, 3
    %p375 = pnand %p373, %p374
    %p376 = pneg %p375
    // Predicated region
    $region65: #{tpu_custom_call.1} parent=5 // pred_check
      _
    $region66: #{tpu_custom_call.1} parent=5 // pred_check_branch
      %378 = sbr.rel (%p375) target = $region68
    $region67: #{tpu_custom_call.1} parent=5 // pred_region
      %s379 = ssub.s32 %s20, 1
      %p380 = scmp.lt.s32.totalorder %s25, 1
      %s381 = scalar_select %p380, %s25, 1
      %s382 = smul.addr %s381, 30
      %s383 = smul.addr %s382, 4
      %s384 = scalar_lea.vmem %s0, %s383
      %p385 = pneg %p46
      %p386 = pneg %p43
      %p387 = scmp.lt.s32.totalorder %s25, 1
      %s388 = scalar_select %p387, %s25, 1
      %s389 = smul.addr %s388, 30
      %s390 = smul.addr %s389, 4
      %s391 = scalar_lea.vmem %s1, %s390
      %p392 = pneg %p72
      %p393 = pneg %p69
      %p394 = pneg %p93
      %p395 = pneg %p90
      %p396 = pneg %p114
      %p397 = pneg %p111
      %p398 = pneg %p135
      %p399 = pneg %p132
      %p400 = pneg %p156
      %p401 = pneg %p153
      %p402 = pneg %p177
      %p403 = pneg %p174
      %p404 = pneg %p198
      %p405 = pneg %p195
      %p406 = pneg %p219
      %p407 = pneg %p216
      %p408 = pneg %p240
      %p409 = pneg %p237
      %p410 = pneg %p261
      %p411 = pneg %p258
      %p412 = pneg %p282
      %p413 = pneg %p279
      %p414 = pneg %p308
      %p415 = pneg %p305
      %p416 = scmp.lt.s32.totalorder %s25, 1
      %s417 = scalar_select %p416, %s25, 1
      %s418 = scalar_lea.vmem %s12, %s417
      %p419 = scmp.lt.s32.totalorder %s25, 1
      %s420 = scalar_select %p419, %s25, 1
      %s421 = smul.addr %s420, 30
      %s422 = smul.addr %s421, 4
      %s423 = scalar_lea.vmem %s0, %s422
      %p424 = scmp.lt.s32.totalorder %s25, 1
      %s425 = scalar_select %p424, %s25, 1
      %s426 = smul.addr %s425, 30
      %s427 = smul.addr %s426, 4
      %s428 = scalar_lea.vmem %s1, %s427
      %p429 = scmp.lt.s32.totalorder %s25, 1
      %s430 = scalar_select %p429, %s25, 1
      %s431 = scalar_lea.vmem %s12, %s430
      %v433 = vld [vmem:[%s423 + $0xc] sm:$0xff]
      %v434 = vld [vmem:[%s423 + $0x14] sm:$0xff]
      %v435 = vld [vmem:[%s423 + $0x1c] sm:$0xff]
      %v436 = vld [vmem:[%s423 + $0x24] sm:$0xff]
      %v437 = vld [vmem:[%s423 + $0x2c] sm:$0xf]
      %v438 = vld [vmem:[%s423 + $0x48] sm:$0xff]
      %v439 = vld [vmem:[%s423 + $0x50] sm:$0xff]
      %v440 = vld [vmem:[%s423 + $0x58] sm:$0xff]
      %v441 = vld [vmem:[%s423 + $0x60] sm:$0xff]
      %v442 = vld [vmem:[%s423 + $0x68] sm:$0xf]
      %v443 = vld [vmem:[%s2] sm:$0xf]
      %v444 = vld [vmem:[%s2 + $0x4] sm:$0xf]
      %v445 = vld [vmem:[%s2 + $0x8] sm:$0xf]
      %v446 = vld [vmem:[%s2 + $0xc] sm:$0xf]
      %v447 = vld [vmem:[%s2 + $0x10] sm:$0xf]
      %v448 = vld [vmem:[%s2 + $0x14] sm:$0xf]
      %v449 = vld [vmem:[%s2 + $0x18] sm:$0xf]
      %v450 = vld [vmem:[%s2 + $0x1c] sm:$0xf]
      %v451 = vld [vmem:[%s2 + $0x20] sm:$0xf]
      %v452 = vld [vmem:[%s2 + $0x24] sm:$0xf]
      %v453 = vld [vmem:[%s2 + $0x28] sm:$0xf]
      %v454 = vld [vmem:[%s2 + $0x2c] sm:$0xf]
      %v455 = vld [vmem:[%s2 + $0x30] sm:$0xf]
      %v456 = vld [vmem:[%s2 + $0x34] sm:$0xf]
      %v457 = vld [vmem:[%s2 + $0x38] sm:$0xf]
      %v458 = vld [vmem:[%s2 + $0x3c] sm:$0xf]
      %v459 = vld [vmem:[%s2 + $0x40] sm:$0xf]
      %v460 = vld [vmem:[%s2 + $0x44] sm:$0xf]
      %v461 = vld [vmem:[%s2 + $0x48] sm:$0xf]
      %v462 = vld [vmem:[%s2 + $0x4c] sm:$0xf]
      %v463 = vld [vmem:[%s2 + $0x50] sm:$0xf]
      %v464 = vld [vmem:[%s2 + $0x54] sm:$0xf]
      %v465 = vld [vmem:[%s2 + $0x58] sm:$0xf]
      %v466 = vld [vmem:[%s2 + $0x5c] sm:$0xf]
      %v467 = vld [vmem:[%s2 + $0x60] sm:$0xf]
      %v468 = vld [vmem:[%s2 + $0x64] sm:$0xf]
      %v469 = vld [vmem:[%s2 + $0x68] sm:$0xf]
      %v470 = vld [vmem:[%s2 + $0x6c] sm:$0xf]
      %v471 = vld [vmem:[%s2 + $0x70] sm:$0xf]
      %v472 = vld [vmem:[%s2 + $0x74] sm:$0xf]
      %v473 = vld [vmem:[%s2 + $0x78] sm:$0xf]
      %v474 = vld [vmem:[%s2 + $0x7c] sm:$0xf]
      %v475 = vld [vmem:[%s2 + $0x80] sm:$0xf]
      %v476 = vld [vmem:[%s2 + $0x84] sm:$0xf]
      %v477 = vld [vmem:[%s2 + $0x88] sm:$0xf]
      %v478 = vld [vmem:[%s2 + $0x8c] sm:$0xf]
      %v479 = vld [vmem:[%s2 + $0x90] sm:$0xf]
      %v480 = vld [vmem:[%s2 + $0x94] sm:$0xf]
      %v481 = vld [vmem:[%s2 + $0x98] sm:$0xf]
      %v482 = vld [vmem:[%s2 + $0x9c] sm:$0xf]
      %v483 = vld [vmem:[%s2 + $0xa0] sm:$0xf]
      %v484 = vld [vmem:[%s2 + $0xa4] sm:$0xf]
      %v485 = vld [vmem:[%s2 + $0xa8] sm:$0xf]
      %v486 = vld [vmem:[%s2 + $0xac] sm:$0xf]
      %v487 = vld [vmem:[%s2 + $0xb0] sm:$0xf]
      %v488 = vld [vmem:[%s2 + $0xb4] sm:$0xf]
      %v489 = vld [vmem:[%s2 + $0xb8] sm:$0xf]
      %v490 = vld [vmem:[%s2 + $0xbc] sm:$0xf]
      %v491 = vld [vmem:[%s2 + $0xc0] sm:$0xf]
      %v492 = vld [vmem:[%s2 + $0xc4] sm:$0xf]
      %v493 = vld [vmem:[%s2 + $0xc8] sm:$0xf]
      %v494 = vld [vmem:[%s2 + $0xcc] sm:$0xf]
      %v495 = vld [vmem:[%s2 + $0xd0] sm:$0xf]
      %v496 = vld [vmem:[%s2 + $0xd4] sm:$0xf]
      %v497 = vld [vmem:[%s2 + $0xd8] sm:$0xf]
      %v498 = vld [vmem:[%s2 + $0xdc] sm:$0xf]
      %v499 = vld [vmem:[%s2 + $0xe0] sm:$0xf]
      %v500 = vld [vmem:[%s2 + $0xe4] sm:$0xf]
      %v501 = vld [vmem:[%s2 + $0xe8] sm:$0xf]
      %v502 = vld [vmem:[%s2 + $0xec] sm:$0xf]
      %v503 = vld [vmem:[%s2 + $0xf0] sm:$0xf]
      %v504 = vld [vmem:[%s2 + $0xf4] sm:$0xf]
      %v505 = vld [vmem:[%s2 + $0xf8] sm:$0xf]
      %v506 = vld [vmem:[%s2 + $0xfc] sm:$0xf]
      %v507 = vld [vmem:[%s2 + $0x100] sm:$0xf]
      %v508 = vld [vmem:[%s2 + $0x104] sm:$0xf]
      %v509 = vld [vmem:[%s2 + $0x108] sm:$0xf]
      %v510 = vld [vmem:[%s2 + $0x10c] sm:$0xf]
      %v511 = vld [vmem:[%s2 + $0x110] sm:$0xf]
      %v512 = vld [vmem:[%s2 + $0x114] sm:$0xf]
      %v513 = vld [vmem:[%s2 + $0x118] sm:$0xf]
      %v514 = vld [vmem:[%s2 + $0x11c] sm:$0xf]
      %v515 = vld [vmem:[%s2 + $0x120] sm:$0xf]
      %v516 = vld [vmem:[%s2 + $0x124] sm:$0xf]
      %v517 = vld [vmem:[%s2 + $0x128] sm:$0xf]
      %v518 = vld [vmem:[%s2 + $0x12c] sm:$0xf]
      %v519 = vld [vmem:[%s2 + $0x130] sm:$0xf]
      %v520 = vld [vmem:[%s2 + $0x134] sm:$0xf]
      %v521 = vld [vmem:[%s2 + $0x138] sm:$0xf]
      %v522 = vld [vmem:[%s2 + $0x13c] sm:$0xf]
      %v523 = vld [vmem:[%s2 + $0x140] sm:$0xf]
      %v524 = vld [vmem:[%s2 + $0x144] sm:$0xf]
      %v525 = vld [vmem:[%s2 + $0x148] sm:$0xf]
      %v526 = vld [vmem:[%s2 + $0x14c] sm:$0xf]
      %v527 = vld [vmem:[%s2 + $0x150] sm:$0xf]
      %v528 = vld [vmem:[%s2 + $0x154] sm:$0xf]
      %v529 = vld [vmem:[%s2 + $0x158] sm:$0xf]
      %v530 = vld [vmem:[%s2 + $0x15c] sm:$0xf]
      %v531 = vld [vmem:[%s2 + $0x160] sm:$0xf]
      %v532 = vld [vmem:[%s2 + $0x164] sm:$0xf]
      %v533 = vld [vmem:[%s2 + $0x168] sm:$0xf]
      %v534 = vld [vmem:[%s2 + $0x16c] sm:$0xf]
      %v535 = vld [vmem:[%s2 + $0x170] sm:$0xf]
      %v536 = vld [vmem:[%s2 + $0x174] sm:$0xf]
      %v537 = vld [vmem:[%s2 + $0x178] sm:$0xf]
      %v538 = vld [vmem:[%s2 + $0x17c] sm:$0xf]
      %v539 = vld [vmem:[%s2 + $0x180] sm:$0xf]
      %v540 = vld [vmem:[%s2 + $0x184] sm:$0xf]
      %v541 = vld [vmem:[%s2 + $0x188] sm:$0xf]
      %v542 = vld [vmem:[%s2 + $0x18c] sm:$0xf]
      %v543 = vld [vmem:[%s2 + $0x190] sm:$0xf]
      %v544 = vld [vmem:[%s2 + $0x194] sm:$0xf]
      %v545 = vld [vmem:[%s2 + $0x198] sm:$0xf]
      %v546 = vld [vmem:[%s2 + $0x19c] sm:$0xf]
      %v547 = vld [vmem:[%s2 + $0x1a0] sm:$0xf]
      %v548 = vld [vmem:[%s2 + $0x1a4] sm:$0xf]
      %v549 = vld [vmem:[%s2 + $0x1a8] sm:$0xf]
      %v550 = vld [vmem:[%s2 + $0x1ac] sm:$0xf]
      %v551 = vld [vmem:[%s2 + $0x1b0] sm:$0xf]
      %v552 = vld [vmem:[%s2 + $0x1b4] sm:$0xf]
      %v553 = vld [vmem:[%s2 + $0x1b8] sm:$0xf]
      %v554 = vld [vmem:[%s2 + $0x1bc] sm:$0xf]
      %v555 = vld [vmem:[%s2 + $0x1c0] sm:$0xf]
      %v556 = vld [vmem:[%s2 + $0x1c4] sm:$0xf]
      %v557 = vld [vmem:[%s2 + $0x1c8] sm:$0xf]
      %v558 = vld [vmem:[%s2 + $0x1cc] sm:$0xf]
      %v559 = vld [vmem:[%s2 + $0x1d0] sm:$0xf]
      %v560 = vld [vmem:[%s2 + $0x1d4] sm:$0xf]
      %v561 = vld [vmem:[%s2 + $0x1d8] sm:$0xf]
      %v562 = vld [vmem:[%s2 + $0x1dc] sm:$0xf]
      %v563 = vld [vmem:[%s2 + $0x1e0] sm:$0xf]
      %v564 = vld [vmem:[%s2 + $0x1e4] sm:$0xf]
      %v565 = vld [vmem:[%s2 + $0x1e8] sm:$0xf]
      %v566 = vld [vmem:[%s2 + $0x1ec] sm:$0xf]
      %v567 = vld [vmem:[%s2 + $0x1f0] sm:$0xf]
      %v568 = vld [vmem:[%s2 + $0x1f4] sm:$0xf]
      %v569 = vld [vmem:[%s2 + $0x1f8] sm:$0xf]
      %v570 = vld [vmem:[%s2 + $0x1fc] sm:$0xf]
      %v571 = vld [vmem:[%s2 + $0x200] sm:$0xf]
      %v572 = vld [vmem:[%s2 + $0x204] sm:$0xf]
      %v573 = vld [vmem:[%s2 + $0x208] sm:$0xf]
      %v574 = vld [vmem:[%s2 + $0x20c] sm:$0xf]
      %v575 = vld [vmem:[%s2 + $0x210] sm:$0xf]
      %v576 = vld [vmem:[%s2 + $0x214] sm:$0xf]
      %v577 = vld [vmem:[%s2 + $0x218] sm:$0xf]
      %v578 = vld [vmem:[%s2 + $0x21c] sm:$0xf]
      %v579 = vld [vmem:[%s2 + $0x220] sm:$0xf]
      %v580 = vld [vmem:[%s2 + $0x224] sm:$0xf]
      %v581 = vld [vmem:[%s2 + $0x228] sm:$0xf]
      %v582 = vld [vmem:[%s2 + $0x22c] sm:$0xf]
      %v583 = vld [vmem:[%s2 + $0x230] sm:$0xf]
      %v584 = vld [vmem:[%s2 + $0x234] sm:$0xf]
      %v585 = vld [vmem:[%s2 + $0x238] sm:$0xf]
      %v586 = vld [vmem:[%s2 + $0x23c] sm:$0xf]
      %v587 = vld [vmem:[%s9] sm:$0x1]
      %v588 = vlaneseq
      %v589 = vshrl.u32 %v588, 7
      %v590 = vsub.s32 0, %v589
      %v591 = vrot.slane %v587, %v590
      %v602 = vunpack.c.l.b16 %v433
      %v603 = vunpack.c.h.b16 %v433
      %v604 = vunpack.c.l.b16 %v434
      %v605 = vunpack.c.h.b16 %v434
      %v606 = vunpack.c.l.b16 %v435
      %v607 = vunpack.c.h.b16 %v435
      %v608 = vunpack.c.l.b16 %v436
      %v609 = vunpack.c.h.b16 %v436
      %v610 = vunpack.c.l.b16 %v437
      %v611 = vunpack.c.l.b16 %v438
      %v612 = vunpack.c.h.b16 %v438
      %v613 = vunpack.c.l.b16 %v439
      %v614 = vunpack.c.h.b16 %v439
      %v615 = vunpack.c.l.b16 %v440
      %v616 = vunpack.c.h.b16 %v440
      %v617 = vunpack.c.l.b16 %v441
      %v618 = vunpack.c.h.b16 %v441
      %v619 = vunpack.c.l.b16 %v442
      %v620 = vpack.c.b16 %v611, %v602
      %v621 = vpack.c.b16 %v612, %v603
      %v622 = vpack.c.b16 %v613, %v604
      %v623 = vpack.c.b16 %v614, %v605
      %v624 = vpack.c.b16 %v615, %v606
      %v625 = vpack.c.b16 %v616, %v607
      %v626 = vpack.c.b16 %v617, %v608
      %v627 = vpack.c.b16 %v618, %v609
      %v628 = vpack.c.b16 %v619, %v610
      %v782 = vunpack.c.l.b16 %v443
      %v783 = vunpack.c.l.b16 %v444
      %v784 = vunpack.c.l.b16 %v445
      %v785 = vunpack.c.l.b16 %v446
      %v786 = vunpack.c.l.b16 %v447
      %v787 = vunpack.c.l.b16 %v448
      %v788 = vunpack.c.l.b16 %v449
      %v789 = vunpack.c.l.b16 %v450
      %v790 = vunpack.c.l.b16 %v451
      %v791 = vunpack.c.l.b16 %v452
      %v792 = vunpack.c.l.b16 %v453
      %v793 = vunpack.c.l.b16 %v454
      %v794 = vunpack.c.l.b16 %v455
      %v795 = vunpack.c.l.b16 %v456
      %v796 = vunpack.c.l.b16 %v457
      %v797 = vunpack.c.l.b16 %v458
      %v798 = vunpack.c.l.b16 %v459
      %v799 = vunpack.c.l.b16 %v460
      %v800 = vunpack.c.l.b16 %v461
      %v801 = vunpack.c.l.b16 %v462
      %v802 = vunpack.c.l.b16 %v463
      %v803 = vunpack.c.l.b16 %v464
      %v804 = vunpack.c.l.b16 %v465
      %v805 = vunpack.c.l.b16 %v466
      %v806 = vunpack.c.l.b16 %v467
      %v807 = vunpack.c.l.b16 %v468
      %v808 = vunpack.c.l.b16 %v469
      %v809 = vunpack.c.l.b16 %v470
      %v810 = vunpack.c.l.b16 %v471
      %v811 = vunpack.c.l.b16 %v472
      %v812 = vunpack.c.l.b16 %v473
      %v813 = vunpack.c.l.b16 %v474
      %v814 = vunpack.c.l.b16 %v475
      %v815 = vunpack.c.l.b16 %v476
      %v816 = vunpack.c.l.b16 %v477
      %v817 = vunpack.c.l.b16 %v478
      %v818 = vunpack.c.l.b16 %v479
      %v819 = vunpack.c.l.b16 %v480
      %v820 = vunpack.c.l.b16 %v481
      %v821 = vunpack.c.l.b16 %v482
      %v822 = vunpack.c.l.b16 %v483
      %v823 = vunpack.c.l.b16 %v484
      %v824 = vunpack.c.l.b16 %v485
      %v825 = vunpack.c.l.b16 %v486
      %v826 = vunpack.c.l.b16 %v487
      %v827 = vunpack.c.l.b16 %v488
      %v828 = vunpack.c.l.b16 %v489
      %v829 = vunpack.c.l.b16 %v490
      %v830 = vunpack.c.l.b16 %v491
      %v831 = vunpack.c.l.b16 %v492
      %v832 = vunpack.c.l.b16 %v493
      %v833 = vunpack.c.l.b16 %v494
      %v834 = vunpack.c.l.b16 %v495
      %v835 = vunpack.c.l.b16 %v496
      %v836 = vunpack.c.l.b16 %v497
      %v837 = vunpack.c.l.b16 %v498
      %v838 = vunpack.c.l.b16 %v499
      %v839 = vunpack.c.l.b16 %v500
      %v840 = vunpack.c.l.b16 %v501
      %v841 = vunpack.c.l.b16 %v502
      %v842 = vunpack.c.l.b16 %v503
      %v843 = vunpack.c.l.b16 %v504
      %v844 = vunpack.c.l.b16 %v505
      %v845 = vunpack.c.l.b16 %v506
      %v846 = vunpack.c.l.b16 %v507
      %v847 = vunpack.c.l.b16 %v508
      %v848 = vunpack.c.l.b16 %v509
      %v849 = vunpack.c.l.b16 %v510
      %v850 = vunpack.c.l.b16 %v511
      %v851 = vunpack.c.l.b16 %v512
      %v852 = vunpack.c.l.b16 %v513
      %v853 = vunpack.c.l.b16 %v514
      %v854 = vunpack.c.l.b16 %v515
      %v855 = vunpack.c.l.b16 %v516
      %v856 = vunpack.c.l.b16 %v517
      %v857 = vunpack.c.l.b16 %v518
      %v858 = vunpack.c.l.b16 %v519
      %v859 = vunpack.c.l.b16 %v520
      %v860 = vunpack.c.l.b16 %v521
      %v861 = vunpack.c.l.b16 %v522
      %v862 = vunpack.c.l.b16 %v523
      %v863 = vunpack.c.l.b16 %v524
      %v864 = vunpack.c.l.b16 %v525
      %v865 = vunpack.c.l.b16 %v526
      %v866 = vunpack.c.l.b16 %v527
      %v867 = vunpack.c.l.b16 %v528
      %v868 = vunpack.c.l.b16 %v529
      %v869 = vunpack.c.l.b16 %v530
      %v870 = vunpack.c.l.b16 %v531
      %v871 = vunpack.c.l.b16 %v532
      %v872 = vunpack.c.l.b16 %v533
      %v873 = vunpack.c.l.b16 %v534
      %v874 = vunpack.c.l.b16 %v535
      %v875 = vunpack.c.l.b16 %v536
      %v876 = vunpack.c.l.b16 %v537
      %v877 = vunpack.c.l.b16 %v538
      %v878 = vunpack.c.l.b16 %v539
      %v879 = vunpack.c.l.b16 %v540
      %v880 = vunpack.c.l.b16 %v541
      %v881 = vunpack.c.l.b16 %v542
      %v882 = vunpack.c.l.b16 %v543
      %v883 = vunpack.c.l.b16 %v544
      %v884 = vunpack.c.l.b16 %v545
      %v885 = vunpack.c.l.b16 %v546
      %v886 = vunpack.c.l.b16 %v547
      %v887 = vunpack.c.l.b16 %v548
      %v888 = vunpack.c.l.b16 %v549
      %v889 = vunpack.c.l.b16 %v550
      %v890 = vunpack.c.l.b16 %v551
      %v891 = vunpack.c.l.b16 %v552
      %v892 = vunpack.c.l.b16 %v553
      %v893 = vunpack.c.l.b16 %v554
      %v894 = vunpack.c.l.b16 %v555
      %v895 = vunpack.c.l.b16 %v556
      %v896 = vunpack.c.l.b16 %v557
      %v897 = vunpack.c.l.b16 %v558
      %v898 = vunpack.c.l.b16 %v559
      %v899 = vunpack.c.l.b16 %v560
      %v900 = vunpack.c.l.b16 %v561
      %v901 = vunpack.c.l.b16 %v562
      %v902 = vunpack.c.l.b16 %v563
      %v903 = vunpack.c.l.b16 %v564
      %v904 = vunpack.c.l.b16 %v565
      %v905 = vunpack.c.l.b16 %v566
      %v906 = vunpack.c.l.b16 %v567
      %v907 = vunpack.c.l.b16 %v568
      %v908 = vunpack.c.l.b16 %v569
      %v909 = vunpack.c.l.b16 %v570
      %v910 = vunpack.c.l.b16 %v571
      %v911 = vunpack.c.l.b16 %v572
      %v912 = vunpack.c.l.b16 %v573
      %v913 = vunpack.c.l.b16 %v574
      %v914 = vunpack.c.l.b16 %v575
      %v915 = vunpack.c.l.b16 %v576
      %v916 = vunpack.c.l.b16 %v577
      %v917 = vunpack.c.l.b16 %v578
      %v918 = vunpack.c.l.b16 %v579
      %v919 = vunpack.c.l.b16 %v580
      %v920 = vunpack.c.l.b16 %v581
      %v921 = vunpack.c.l.b16 %v582
      %v922 = vunpack.c.l.b16 %v583
      %v923 = vunpack.c.l.b16 %v584
      %v924 = vunpack.c.l.b16 %v585
      %v925 = vunpack.c.l.b16 %v586
      %v926 = vpack.c.b16 %v783, %v782
      %v927 = vpack.c.b16 %v785, %v784
      %v928 = vpack.c.b16 %v787, %v786
      %v929 = vpack.c.b16 %v789, %v788
      %v930 = vpack.c.b16 %v791, %v790
      %v931 = vpack.c.b16 %v793, %v792
      %v932 = vpack.c.b16 %v795, %v794
      %v933 = vpack.c.b16 %v797, %v796
      %v934 = vpack.c.b16 %v799, %v798
      %v935 = vpack.c.b16 %v801, %v800
      %v936 = vpack.c.b16 %v803, %v802
      %v937 = vpack.c.b16 %v805, %v804
      %v938 = vpack.c.b16 %v807, %v806
      %v939 = vpack.c.b16 %v809, %v808
      %v940 = vpack.c.b16 %v811, %v810
      %v941 = vpack.c.b16 %v813, %v812
      %v942 = vpack.c.b16 %v815, %v814
      %v943 = vpack.c.b16 %v817, %v816
      %v944 = vpack.c.b16 %v819, %v818
      %v945 = vpack.c.b16 %v821, %v820
      %v946 = vpack.c.b16 %v823, %v822
      %v947 = vpack.c.b16 %v825, %v824
      %v948 = vpack.c.b16 %v827, %v826
      %v949 = vpack.c.b16 %v829, %v828
      %v950 = vpack.c.b16 %v831, %v830
      %v951 = vpack.c.b16 %v833, %v832
      %v952 = vpack.c.b16 %v835, %v834
      %v953 = vpack.c.b16 %v837, %v836
      %v954 = vpack.c.b16 %v839, %v838
      %v955 = vpack.c.b16 %v841, %v840
      %v956 = vpack.c.b16 %v843, %v842
      %v957 = vpack.c.b16 %v845, %v844
      %v958 = vpack.c.b16 %v847, %v846
      %v959 = vpack.c.b16 %v849, %v848
      %v960 = vpack.c.b16 %v851, %v850
      %v961 = vpack.c.b16 %v853, %v852
      %v962 = vpack.c.b16 %v855, %v854
      %v963 = vpack.c.b16 %v857, %v856
      %v964 = vpack.c.b16 %v859, %v858
      %v965 = vpack.c.b16 %v861, %v860
      %v966 = vpack.c.b16 %v863, %v862
      %v967 = vpack.c.b16 %v865, %v864
      %v968 = vpack.c.b16 %v867, %v866
      %v969 = vpack.c.b16 %v869, %v868
      %v970 = vpack.c.b16 %v871, %v870
      %v971 = vpack.c.b16 %v873, %v872
      %v972 = vpack.c.b16 %v875, %v874
      %v973 = vpack.c.b16 %v877, %v876
      %v974 = vpack.c.b16 %v879, %v878
      %v975 = vpack.c.b16 %v881, %v880
      %v976 = vpack.c.b16 %v883, %v882
      %v977 = vpack.c.b16 %v885, %v884
      %v978 = vpack.c.b16 %v887, %v886
      %v979 = vpack.c.b16 %v889, %v888
      %v980 = vpack.c.b16 %v891, %v890
      %v981 = vpack.c.b16 %v893, %v892
      %v982 = vpack.c.b16 %v895, %v894
      %v983 = vpack.c.b16 %v897, %v896
      %v984 = vpack.c.b16 %v899, %v898
      %v985 = vpack.c.b16 %v901, %v900
      %v986 = vpack.c.b16 %v903, %v902
      %v987 = vpack.c.b16 %v905, %v904
      %v988 = vpack.c.b16 %v907, %v906
      %v989 = vpack.c.b16 %v909, %v908
      %v990 = vpack.c.b16 %v911, %v910
      %v991 = vpack.c.b16 %v913, %v912
      %v992 = vpack.c.b16 %v915, %v914
      %v993 = vpack.c.b16 %v917, %v916
      %v994 = vpack.c.b16 %v919, %v918
      %v995 = vpack.c.b16 %v921, %v920
      %v996 = vpack.c.b16 %v923, %v922
      %v997 = vpack.c.b16 %v925, %v924
      %1070 = vmatprep.subr.bf16.mxu0 0
      %1071 = vmatpush1.bf16.msra.mxu0 %v926
      %1072 = vmatprep.subr.bf16.mxu0 0
      %1073 = vmatpush1.bf16.msra.mxu0 %v927
      %1074 = vmatprep.subr.bf16.mxu0 0
      %1075 = vmatpush1.bf16.msra.mxu0 %v928
      %1076 = vmatprep.subr.bf16.mxu0 0
      %1077 = vmatpush1.bf16.msra.mxu0 %v929
      %1078 = vmatprep.subr.bf16.mxu0 0
      %1079 = vmatpush1.bf16.msra.mxu0 %v930
      %1080 = vmatprep.subr.bf16.mxu0 0
      %1081 = vmatpush1.bf16.msra.mxu0 %v931
      %1082 = vmatprep.subr.bf16.mxu0 0
      %1083 = vmatpush1.bf16.msra.mxu0 %v932
      %1084 = vmatprep.subr.bf16.mxu0 0
      %1085 = vmatpush1.bf16.msra.mxu0 %v933
      %1086 = vmatprep.subr.bf16.mxu0 0
      %1087 = vmatpush1.bf16.msra.mxu0 %v934
      %1088 = vmatprep.subr.bf16.mxu0 0
      %1089 = vmatpush1.bf16.msra.mxu0 %v935
      %1090 = vmatprep.subr.bf16.mxu0 0
      %1091 = vmatpush1.bf16.msra.mxu0 %v936
      %1092 = vmatprep.subr.bf16.mxu0 0
      %1093 = vmatpush1.bf16.msra.mxu0 %v937
      %1094 = vmatprep.subr.bf16.mxu0 0
      %1095 = vmatpush1.bf16.msra.mxu0 %v938
      %1096 = vmatprep.subr.bf16.mxu0 0
      %1097 = vmatpush1.bf16.msra.mxu0 %v939
      %1098 = vmatprep.subr.bf16.mxu0 0
      %1099 = vmatpush1.bf16.msra.mxu0 %v940
      %1100 = vmatprep.subr.bf16.mxu0 0
      %1101 = vmatpush1.bf16.msra.mxu0 %v941
      %1102 = vmatprep.mubr.bf16.mxu0 %v621
      %1103 = vmatmul.mubr.bf16.gmra.mrb[0].mxu0 %v620
      %v1104 = vpop.f32.mrb[0].mxu0
      %v1105 = vadd.f32 %v591, %v1104
      %v1106 = vpop.f32.mrb[0].mxu0
      %v1107 = vpop.f32.mrb[0].mxu0
      %v1108 = vadd.f32 %v591, %v1107
      %v1109 = vpop.f32.mrb[0].mxu0
      %1110 = vdwg.mxu0
      %1111 = vmatprep.subr.bf16.mxu0 0
      %1112 = vmatpush1.bf16.msra.mxu0 %v942
      %1113 = vmatprep.subr.bf16.mxu0 0
      %1114 = vmatpush1.bf16.msra.mxu0 %v943
      %1115 = vmatprep.subr.bf16.mxu0 0
      %1116 = vmatpush1.bf16.msra.mxu0 %v944
      %1117 = vmatprep.subr.bf16.mxu0 0
      %1118 = vmatpush1.bf16.msra.mxu0 %v945
      %1119 = vmatprep.subr.bf16.mxu0 0
      %1120 = vmatpush1.bf16.msra.mxu0 %v946
      %1121 = vmatprep.subr.bf16.mxu0 0
      %1122 = vmatpush1.bf16.msra.mxu0 %v947
      %1123 = vmatprep.subr.bf16.mxu0 0
      %1124 = vmatpush1.bf16.msra.mxu0 %v948
      %1125 = vmatprep.subr.bf16.mxu0 0
      %1126 = vmatpush1.bf16.msra.mxu0 %v949
      %1127 = vmatprep.subr.bf16.mxu0 0
      %1128 = vmatpush1.bf16.msra.mxu0 %v950
      %1129 = vmatprep.subr.bf16.mxu0 0
      %1130 = vmatpush1.bf16.msra.mxu0 %v951
      %1131 = vmatprep.subr.bf16.mxu0 0
      %1132 = vmatpush1.bf16.msra.mxu0 %v952
      %1133 = vmatprep.subr.bf16.mxu0 0
      %1134 = vmatpush1.bf16.msra.mxu0 %v953
      %1135 = vmatprep.subr.bf16.mxu0 0
      %1136 = vmatpush1.bf16.msra.mxu0 %v954
      %1137 = vmatprep.subr.bf16.mxu0 0
      %1138 = vmatpush1.bf16.msra.mxu0 %v955
      %1139 = vmatprep.subr.bf16.mxu0 0
      %1140 = vmatpush1.bf16.msra.mxu0 %v956
      %1141 = vmatprep.subr.bf16.mxu0 0
      %1142 = vmatpush1.bf16.msra.mxu0 %v957
      %1143 = vmatprep.mubr.bf16.mxu0 %v623
      %1144 = vmatmul.mubr.bf16.gmra.mrb[0].mxu0 %v622
      %v1145 = vpop.f32.mrb[0].mxu0
      %v1146 = vadd.f32 %v1105, %v1145
      %v1147 = vpop.f32.mrb[0].mxu0
      %v1148 = vpop.f32.mrb[0].mxu0
      %v1149 = vadd.f32 %v1108, %v1148
      %v1150 = vpop.f32.mrb[0].mxu0
      %1151 = vdwg.mxu0
      %1152 = vmatprep.subr.bf16.mxu0 0
      %1153 = vmatpush1.bf16.msra.mxu0 %v958
      %1154 = vmatprep.subr.bf16.mxu0 0
      %1155 = vmatpush1.bf16.msra.mxu0 %v959
      %1156 = vmatprep.subr.bf16.mxu0 0
      %1157 = vmatpush1.bf16.msra.mxu0 %v960
      %1158 = vmatprep.subr.bf16.mxu0 0
      %1159 = vmatpush1.bf16.msra.mxu0 %v961
      %1160 = vmatprep.subr.bf16.mxu0 0
      %1161 = vmatpush1.bf16.msra.mxu0 %v962
      %1162 = vmatprep.subr.bf16.mxu0 0
      %1163 = vmatpush1.bf16.msra.mxu0 %v963
      %1164 = vmatprep.subr.bf16.mxu0 0
      %1165 = vmatpush1.bf16.msra.mxu0 %v964
      %1166 = vmatprep.subr.bf16.mxu0 0
      %1167 = vmatpush1.bf16.msra.mxu0 %v965
      %1168 = vmatprep.subr.bf16.mxu0 0
      %1169 = vmatpush1.bf16.msra.mxu0 %v966
      %1170 = vmatprep.subr.bf16.mxu0 0
      %1171 = vmatpush1.bf16.msra.mxu0 %v967
      %1172 = vmatprep.subr.bf16.mxu0 0
      %1173 = vmatpush1.bf16.msra.mxu0 %v968
      %1174 = vmatprep.subr.bf16.mxu0 0
      %1175 = vmatpush1.bf16.msra.mxu0 %v969
      %1176 = vmatprep.subr.bf16.mxu0 0
      %1177 = vmatpush1.bf16.msra.mxu0 %v970
      %1178 = vmatprep.subr.bf16.mxu0 0
      %1179 = vmatpush1.bf16.msra.mxu0 %v971
      %1180 = vmatprep.subr.bf16.mxu0 0
      %1181 = vmatpush1.bf16.msra.mxu0 %v972
      %1182 = vmatprep.subr.bf16.mxu0 0
      %1183 = vmatpush1.bf16.msra.mxu0 %v973
      %1184 = vmatprep.mubr.bf16.mxu0 %v625
      %1185 = vmatmul.mubr.bf16.gmra.mrb[0].mxu0 %v624
      %v1186 = vpop.f32.mrb[0].mxu0
      %v1187 = vadd.f32 %v1146, %v1186
      %v1188 = vpop.f32.mrb[0].mxu0
      %v1189 = vpop.f32.mrb[0].mxu0
      %v1190 = vadd.f32 %v1149, %v1189
      %v1191 = vpop.f32.mrb[0].mxu0
      %1192 = vdwg.mxu0
      %1193 = vmatprep.subr.bf16.mxu0 0
      %1194 = vmatpush1.bf16.msra.mxu0 %v974
      %1195 = vmatprep.subr.bf16.mxu0 0
      %1196 = vmatpush1.bf16.msra.mxu0 %v975
      %1197 = vmatprep.subr.bf16.mxu0 0
      %1198 = vmatpush1.bf16.msra.mxu0 %v976
      %1199 = vmatprep.subr.bf16.mxu0 0
      %1200 = vmatpush1.bf16.msra.mxu0 %v977
      %1201 = vmatprep.subr.bf16.mxu0 0
      %1202 = vmatpush1.bf16.msra.mxu0 %v978
      %1203 = vmatprep.subr.bf16.mxu0 0
      %1204 = vmatpush1.bf16.msra.mxu0 %v979
      %1205 = vmatprep.subr.bf16.mxu0 0
      %1206 = vmatpush1.bf16.msra.mxu0 %v980
      %1207 = vmatprep.subr.bf16.mxu0 0
      %1208 = vmatpush1.bf16.msra.mxu0 %v981
      %1209 = vmatprep.subr.bf16.mxu0 0
      %1210 = vmatpush1.bf16.msra.mxu0 %v982
      %1211 = vmatprep.subr.bf16.mxu0 0
      %1212 = vmatpush1.bf16.msra.mxu0 %v983
      %1213 = vmatprep.subr.bf16.mxu0 0
      %1214 = vmatpush1.bf16.msra.mxu0 %v984
      %1215 = vmatprep.subr.bf16.mxu0 0
      %1216 = vmatpush1.bf16.msra.mxu0 %v985
      %1217 = vmatprep.subr.bf16.mxu0 0
      %1218 = vmatpush1.bf16.msra.mxu0 %v986
      %1219 = vmatprep.subr.bf16.mxu0 0
      %1220 = vmatpush1.bf16.msra.mxu0 %v987
      %1221 = vmatprep.subr.bf16.mxu0 0
      %1222 = vmatpush1.bf16.msra.mxu0 %v988
      %1223 = vmatprep.subr.bf16.mxu0 0
      %1224 = vmatpush1.bf16.msra.mxu0 %v989
      %1225 = vmatprep.mubr.bf16.mxu0 %v627
      %1226 = vmatmul.mubr.bf16.gmra.mrb[0].mxu0 %v626
      %v1227 = vpop.f32.mrb[0].mxu0
      %v1228 = vadd.f32 %v1187, %v1227
      %v1229 = vpop.f32.mrb[0].mxu0
      %v1230 = vpop.f32.mrb[0].mxu0
      %v1231 = vadd.f32 %v1190, %v1230
      %v1232 = vpop.f32.mrb[0].mxu0
      %1233 = vdwg.mxu0
      %1234 = vmatprep.subr.bf16.mxu0 0
      %1235 = vmatpush1.bf16.msra.mxu0 %v990
      %1236 = vmatprep.subr.bf16.mxu0 0
      %1237 = vmatpush1.bf16.msra.mxu0 %v991
      %1238 = vmatprep.subr.bf16.mxu0 0
      %1239 = vmatpush1.bf16.msra.mxu0 %v992
      %1240 = vmatprep.subr.bf16.mxu0 0
      %1241 = vmatpush1.bf16.msra.mxu0 %v993
      %1242 = vmatprep.subr.bf16.mxu0 0
      %1243 = vmatpush1.bf16.msra.mxu0 %v994
      %1244 = vmatprep.subr.bf16.mxu0 0
      %1245 = vmatpush1.bf16.msra.mxu0 %v995
      %1246 = vmatprep.subr.bf16.mxu0 0
      %1247 = vmatpush1.bf16.msra.mxu0 %v996
      %1248 = vmatprep.subr.bf16.mxu0 0
      %1249 = vmatpush1.bf16.msra.mxu0 %v997
      %1250 = vmatprep.subr.bf16.mxu0 0
      %1251 = vmatpush1.bf16.msra.mxu0 0
      %1252 = vmatprep.subr.bf16.mxu0 0
      %1253 = vmatpush1.bf16.msra.mxu0 0
      %1254 = vmatprep.subr.bf16.mxu0 0
      %1255 = vmatpush1.bf16.msra.mxu0 0
      %1256 = vmatprep.subr.bf16.mxu0 0
      %1257 = vmatpush1.bf16.msra.mxu0 0
      %1258 = vmatprep.subr.bf16.mxu0 0
      %1259 = vmatpush1.bf16.msra.mxu0 0
      %1260 = vmatprep.subr.bf16.mxu0 0
      %1261 = vmatpush1.bf16.msra.mxu0 0
      %1262 = vmatprep.subr.bf16.mxu0 0
      %1263 = vmatpush1.bf16.msra.mxu0 0
      %1264 = vmatprep.subr.bf16.mxu0 0
      %1265 = vmatpush1.bf16.msra.mxu0 0
      %1266 = vmatprep.mubr.bf16.mxu0 0
      %1267 = vmatmul.mubr.bf16.gmra.mrb[0].mxu0 %v628
      %v1268 = vpop.f32.mrb[0].mxu0
      %v1269 = vadd.f32 %v1228, %v1268
      %v1270 = vpop.f32.mrb[0].mxu0
      %v1271 = vpop.f32.mrb[0].mxu0
      %v1272 = vadd.f32 %v1231, %v1271
      %v1273 = vpop.f32.mrb[0].mxu0
      %1274 = vdwg.mxu0
      %v1275 = vmax.f32 %v1269, 0.0
      %v1276 = vmax.f32 %v1272, 0.0
      %v1277 = vld [vmem:[%s8] sm:$0xff]
      %v1278 = vld [vmem:[%s8 + $0x8] sm:$0xff]
      %1280 = vset.pattern.permute.xlu0 0
      %1281 = vperm.xlu0 %1280, %v1277
      %v1282 = vpop.permute.xlu0 %1281
      %1285 = vset.pattern.permute.xlu0 0
      %1286 = vperm.xlu0 %1285, %v1278
      %v1287 = vpop.permute.xlu0 %1286
      %v1289 = vmul.f32 %v1275, %v1282
      %v1290 = vmul.f32 %v1276, %v1287
      %vm1291 = vcmask 850944
      %v1292 = vsel %vm1291, %v1289, -inf
      %v1293 = vsel %vm1291, %v1290, -inf
      %v1294 = vmax.f32 %v1292, %v1293
      %v1295 = vrot.slane %v1294, 4
      %v1296 = vmax.f32 %v1294, %v1295
      %v1297 = vrot.slane %v1296, 2
      %v1298 = vmax.f32 %v1296, %v1297
      %v1299 = vrot.slane %v1298, 1
      %v1300 = vmax.f32 %v1298, %v1299
      %v1301 = vld [vmem:[%s10] sm:$0x1]
      %v1302 = vmul.f32 %v1300, %v1301
      %v1303 = vadd.f32 %v1302, 0.0
      %v1304 = vld [vmem:[%s423] sm:$0xff]
      %v1305 = vld [vmem:[%s423 + $0x8] sm:$0xff]
      %v1306 = vld [vmem:[%s423 + $0x10] sm:$0xff]
      %v1307 = vld [vmem:[%s423 + $0x18] sm:$0xff]
      %v1308 = vld [vmem:[%s423 + $0x20] sm:$0xff]
      %v1309 = vld [vmem:[%s423 + $0x28] sm:$0xff]
      %v1310 = vld [vmem:[%s423 + $0x3c] sm:$0xff]
      %v1311 = vld [vmem:[%s423 + $0x44] sm:$0xff]
      %v1312 = vld [vmem:[%s423 + $0x4c] sm:$0xff]
      %v1313 = vld [vmem:[%s423 + $0x54] sm:$0xff]
      %v1314 = vld [vmem:[%s423 + $0x5c] sm:$0xff]
      %v1315 = vld [vmem:[%s423 + $0x64] sm:$0xff]
      %v1316 = vld [vmem:[%s3] sm:$0xf]
      %v1317 = vld [vmem:[%s3 + $0x4] sm:$0xf]
      %v1318 = vld [vmem:[%s3 + $0x8] sm:$0xf]
      %v1319 = vld [vmem:[%s3 + $0xc] sm:$0xf]
      %v1320 = vld [vmem:[%s3 + $0x10] sm:$0xf]
      %v1321 = vld [vmem:[%s3 + $0x14] sm:$0xf]
      %v1322 = vld [vmem:[%s3 + $0x18] sm:$0xf]
      %v1323 = vld [vmem:[%s3 + $0x1c] sm:$0xf]
      %v1324 = vld [vmem:[%s3 + $0x20] sm:$0xf]
      %v1325 = vld [vmem:[%s3 + $0x24] sm:$0xf]
      %v1326 = vld [vmem:[%s3 + $0x28] sm:$0xf]
      %v1327 = vld [vmem:[%s3 + $0x2c] sm:$0xf]
      %v1328 = vld [vmem:[%s3 + $0x30] sm:$0xf]
      %v1329 = vld [vmem:[%s3 + $0x34] sm:$0xf]
      %v1330 = vld [vmem:[%s3 + $0x38] sm:$0xf]
      %v1331 = vld [vmem:[%s3 + $0x3c] sm:$0xf]
      %v1332 = vld [vmem:[%s3 + $0x40] sm:$0xf]
      %v1333 = vld [vmem:[%s3 + $0x44] sm:$0xf]
      %v1334 = vld [vmem:[%s3 + $0x48] sm:$0xf]
      %v1335 = vld [vmem:[%s3 + $0x4c] sm:$0xf]
      %v1336 = vld [vmem:[%s3 + $0x50] sm:$0xf]
      %v1337 = vld [vmem:[%s3 + $0x54] sm:$0xf]
      %v1338 = vld [vmem:[%s3 + $0x58] sm:$0xf]
      %v1339 = vld [vmem:[%s3 + $0x5c] sm:$0xf]
      %v1340 = vld [vmem:[%s3 + $0x60] sm:$0xf]
      %v1341 = vld [vmem:[%s3 + $0x64] sm:$0xf]
      %v1342 = vld [vmem:[%s3 + $0x68] sm:$0xf]
      %v1343 = vld [vmem:[%s3 + $0x6c] sm:$0xf]
      %v1344 = vld [vmem:[%s3 + $0x70] sm:$0xf]
      %v1345 = vld [vmem:[%s3 + $0x74] sm:$0xf]
      %v1346 = vld [vmem:[%s3 + $0x78] sm:$0xf]
      %v1347 = vld [vmem:[%s3 + $0x7c] sm:$0xf]
      %v1348 = vld [vmem:[%s3 + $0x80] sm:$0xf]
      %v1349 = vld [vmem:[%s3 + $0x84] sm:$0xf]
      %v1350 = vld [vmem:[%s3 + $0x88] sm:$0xf]
      %v1351 = vld [vmem:[%s3 + $0x8c] sm:$0xf]
      %v1352 = vld [vmem:[%s3 + $0x90] sm:$0xf]
      %v1353 = vld [vmem:[%s3 + $0x94] sm:$0xf]
      %v1354 = vld [vmem:[%s3 + $0x98] sm:$0xf]
      %v1355 = vld [vmem:[%s3 + $0x9c] sm:$0xf]
      %v1356 = vld [vmem:[%s3 + $0xa0] sm:$0xf]
      %v1357 = vld [vmem:[%s3 + $0xa4] sm:$0xf]
      %v1358 = vld [vmem:[%s3 + $0xa8] sm:$0xf]
      %v1359 = vld [vmem:[%s3 + $0xac] sm:$0xf]
      %v1360 = vld [vmem:[%s3 + $0xb0] sm:$0xf]
      %v1361 = vld [vmem:[%s3 + $0xb4] sm:$0xf]
      %v1362 = vld [vmem:[%s3 + $0xb8] sm:$0xf]
      %v1363 = vld [vmem:[%s3 + $0xbc] sm:$0xf]
      %v1364 = vld [vmem:[%s3 + $0xc0] sm:$0xf]
      %v1365 = vld [vmem:[%s3 + $0xc4] sm:$0xf]
      %v1366 = vld [vmem:[%s3 + $0xc8] sm:$0xf]
      %v1367 = vld [vmem:[%s3 + $0xcc] sm:$0xf]
      %v1368 = vld [vmem:[%s3 + $0xd0] sm:$0xf]
      %v1369 = vld [vmem:[%s3 + $0xd4] sm:$0xf]
      %v1370 = vld [vmem:[%s3 + $0xd8] sm:$0xf]
      %v1371 = vld [vmem:[%s3 + $0xdc] sm:$0xf]
      %v1372 = vld [vmem:[%s3 + $0xe0] sm:$0xf]
      %v1373 = vld [vmem:[%s3 + $0xe4] sm:$0xf]
      %v1374 = vld [vmem:[%s3 + $0xe8] sm:$0xf]
      %v1375 = vld [vmem:[%s3 + $0xec] sm:$0xf]
      %v1376 = vld [vmem:[%s3 + $0xf0] sm:$0xf]
      %v1377 = vld [vmem:[%s3 + $0xf4] sm:$0xf]
      %v1378 = vld [vmem:[%s3 + $0xf8] sm:$0xf]
      %v1379 = vld [vmem:[%s3 + $0xfc] sm:$0xf]
      %v1380 = vld [vmem:[%s3 + $0x100] sm:$0xf]
      %v1381 = vld [vmem:[%s3 + $0x104] sm:$0xf]
      %v1382 = vld [vmem:[%s3 + $0x108] sm:$0xf]
      %v1383 = vld [vmem:[%s3 + $0x10c] sm:$0xf]
      %v1384 = vld [vmem:[%s3 + $0x110] sm:$0xf]
      %v1385 = vld [vmem:[%s3 + $0x114] sm:$0xf]
      %v1386 = vld [vmem:[%s3 + $0x118] sm:$0xf]
      %v1387 = vld [vmem:[%s3 + $0x11c] sm:$0xf]
      %v1388 = vld [vmem:[%s3 + $0x120] sm:$0xf]
      %v1389 = vld [vmem:[%s3 + $0x124] sm:$0xf]
      %v1390 = vld [vmem:[%s3 + $0x128] sm:$0xf]
      %v1391 = vld [vmem:[%s3 + $0x12c] sm:$0xf]
      %v1392 = vld [vmem:[%s3 + $0x130] sm:$0xf]
      %v1393 = vld [vmem:[%s3 + $0x134] sm:$0xf]
      %v1394 = vld [vmem:[%s3 + $0x138] sm:$0xf]
      %v1395 = vld [vmem:[%s3 + $0x13c] sm:$0xf]
      %v1396 = vld [vmem:[%s3 + $0x140] sm:$0xf]
      %v1397 = vld [vmem:[%s3 + $0x144] sm:$0xf]
      %v1398 = vld [vmem:[%s3 + $0x148] sm:$0xf]
      %v1399 = vld [vmem:[%s3 + $0x14c] sm:$0xf]
      %v1400 = vld [vmem:[%s3 + $0x150] sm:$0xf]
      %v1401 = vld [vmem:[%s3 + $0x154] sm:$0xf]
      %v1402 = vld [vmem:[%s3 + $0x158] sm:$0xf]
      %v1403 = vld [vmem:[%s3 + $0x15c] sm:$0xf]
      %v1404 = vld [vmem:[%s3 + $0x160] sm:$0xf]
      %v1405 = vld [vmem:[%s3 + $0x164] sm:$0xf]
      %v1406 = vld [vmem:[%s3 + $0x168] sm:$0xf]
      %v1407 = vld [vmem:[%s3 + $0x16c] sm:$0xf]
      %v1408 = vld [vmem:[%s3 + $0x170] sm:$0xf]
      %v1409 = vld [vmem:[%s3 + $0x174] sm:$0xf]
      %v1410 = vld [vmem:[%s3 + $0x178] sm:$0xf]
      %v1411 = vld [vmem:[%s3 + $0x17c] sm:$0xf]
      %v1412 = vld [vmem:[%s3 + $0x180] sm:$0xf]
      %v1413 = vld [vmem:[%s3 + $0x184] sm:$0xf]
      %v1414 = vld [vmem:[%s3 + $0x188] sm:$0xf]
      %v1415 = vld [vmem:[%s3 + $0x18c] sm:$0xf]
      %v1416 = vld [vmem:[%s3 + $0x190] sm:$0xf]
      %v1417 = vld [vmem:[%s3 + $0x194] sm:$0xf]
      %v1418 = vld [vmem:[%s3 + $0x198] sm:$0xf]
      %v1419 = vld [vmem:[%s3 + $0x19c] sm:$0xf]
      %v1420 = vld [vmem:[%s3 + $0x1a0] sm:$0xf]
      %v1421 = vld [vmem:[%s3 + $0x1a4] sm:$0xf]
      %v1422 = vld [vmem:[%s3 + $0x1a8] sm:$0xf]
      %v1423 = vld [vmem:[%s3 + $0x1ac] sm:$0xf]
      %v1424 = vld [vmem:[%s3 + $0x1b0] sm:$0xf]
      %v1425 = vld [vmem:[%s3 + $0x1b4] sm:$0xf]
      %v1426 = vld [vmem:[%s3 + $0x1b8] sm:$0xf]
      %v1427 = vld [vmem:[%s3 + $0x1bc] sm:$0xf]
      %v1428 = vld [vmem:[%s3 + $0x1c0] sm:$0xf]
      %v1429 = vld [vmem:[%s3 + $0x1c4] sm:$0xf]
      %v1430 = vld [vmem:[%s3 + $0x1c8] sm:$0xf]
      %v1431 = vld [vmem:[%s3 + $0x1cc] sm:$0xf]
      %v1432 = vld [vmem:[%s3 + $0x1d0] sm:$0xf]
      %v1433 = vld [vmem:[%s3 + $0x1d4] sm:$0xf]
      %v1434 = vld [vmem:[%s3 + $0x1d8] sm:$0xf]
      %v1435 = vld [vmem:[%s3 + $0x1dc] sm:$0xf]
      %v1436 = vld [vmem:[%s3 + $0x1e0] sm:$0xf]
      %v1437 = vld [vmem:[%s3 + $0x1e4] sm:$0xf]
      %v1438 = vld [vmem:[%s3 + $0x1e8] sm:$0xf]
      %v1439 = vld [vmem:[%s3 + $0x1ec] sm:$0xf]
      %v1440 = vld [vmem:[%s3 + $0x1f0] sm:$0xf]
      %v1441 = vld [vmem:[%s3 + $0x1f4] sm:$0xf]
      %v1442 = vld [vmem:[%s3 + $0x1f8] sm:$0xf]
      %v1443 = vld [vmem:[%s3 + $0x1fc] sm:$0xf]
      %v1444 = vld [vmem:[%s3 + $0x200] sm:$0xf]
      %v1445 = vld [vmem:[%s3 + $0x204] sm:$0xf]
      %v1446 = vld [vmem:[%s3 + $0x208] sm:$0xf]
      %v1447 = vld [vmem:[%s3 + $0x20c] sm:$0xf]
      %v1448 = vld [vmem:[%s3 + $0x210] sm:$0xf]
      %v1449 = vld [vmem:[%s3 + $0x214] sm:$0xf]
      %v1450 = vld [vmem:[%s3 + $0x218] sm:$0xf]
      %v1451 = vld [vmem:[%s3 + $0x21c] sm:$0xf]
      %v1452 = vld [vmem:[%s3 + $0x220] sm:$0xf]
      %v1453 = vld [vmem:[%s3 + $0x224] sm:$0xf]
      %v1454 = vld [vmem:[%s3 + $0x228] sm:$0xf]
      %v1455 = vld [vmem:[%s3 + $0x22c] sm:$0xf]
      %v1456 = vld [vmem:[%s3 + $0x230] sm:$0xf]
      %v1457 = vld [vmem:[%s3 + $0x234] sm:$0xf]
      %v1458 = vld [vmem:[%s3 + $0x238] sm:$0xf]
      %v1459 = vld [vmem:[%s3 + $0x23c] sm:$0xf]
      %v1460 = vld [vmem:[%s3 + $0x240] sm:$0xf]
      %v1461 = vld [vmem:[%s3 + $0x244] sm:$0xf]
      %v1462 = vld [vmem:[%s3 + $0x248] sm:$0xf]
      %v1463 = vld [vmem:[%s3 + $0x24c] sm:$0xf]
      %v1464 = vld [vmem:[%s3 + $0x250] sm:$0xf]
      %v1465 = vld [vmem:[%s3 + $0x254] sm:$0xf]
      %v1466 = vld [vmem:[%s3 + $0x258] sm:$0xf]
      %v1467 = vld [vmem:[%s3 + $0x25c] sm:$0xf]
      %v1468 = vld [vmem:[%s3 + $0x260] sm:$0xf]
      %v1469 = vld [vmem:[%s3 + $0x264] sm:$0xf]
      %v1470 = vld [vmem:[%s3 + $0x268] sm:$0xf]
      %v1471 = vld [vmem:[%s3 + $0x26c] sm:$0xf]
      %v1472 = vld [vmem:[%s3 + $0x270] sm:$0xf]
      %v1473 = vld [vmem:[%s3 + $0x274] sm:$0xf]
      %v1474 = vld [vmem:[%s3 + $0x278] sm:$0xf]
      %v1475 = vld [vmem:[%s3 + $0x27c] sm:$0xf]
      %v1476 = vld [vmem:[%s3 + $0x280] sm:$0xf]
      %v1477 = vld [vmem:[%s3 + $0x284] sm:$0xf]
      %v1478 = vld [vmem:[%s3 + $0x288] sm:$0xf]
      %v1479 = vld [vmem:[%s3 + $0x28c] sm:$0xf]
      %v1480 = vld [vmem:[%s3 + $0x290] sm:$0xf]
      %v1481 = vld [vmem:[%s3 + $0x294] sm:$0xf]
      %v1482 = vld [vmem:[%s3 + $0x298] sm:$0xf]
      %v1483 = vld [vmem:[%s3 + $0x29c] sm:$0xf]
      %v1484 = vld [vmem:[%s3 + $0x2a0] sm:$0xf]
      %v1485 = vld [vmem:[%s3 + $0x2a4] sm:$0xf]
      %v1486 = vld [vmem:[%s3 + $0x2a8] sm:$0xf]
      %v1487 = vld [vmem:[%s3 + $0x2ac] sm:$0xf]
      %v1488 = vld [vmem:[%s3 + $0x2b0] sm:$0xf]
      %v1489 = vld [vmem:[%s3 + $0x2b4] sm:$0xf]
      %v1490 = vld [vmem:[%s3 + $0x2b8] sm:$0xf]
      %v1491 = vld [vmem:[%s3 + $0x2bc] sm:$0xf]
      %v1492 = vld [vmem:[%s3 + $0x2c0] sm:$0xf]
      %v1493 = vld [vmem:[%s3 + $0x2c4] sm:$0xf]
      %v1494 = vld [vmem:[%s3 + $0x2c8] sm:$0xf]
      %v1495 = vld [vmem:[%s3 + $0x2cc] sm:$0xf]
      %v1496 = vld [vmem:[%s3 + $0x2d0] sm:$0xf]
      %v1497 = vld [vmem:[%s3 + $0x2d4] sm:$0xf]
      %v1498 = vld [vmem:[%s3 + $0x2d8] sm:$0xf]
      %v1499 = vld [vmem:[%s3 + $0x2dc] sm:$0xf]
      %v1500 = vld [vmem:[%s3 + $0x2e0] sm:$0xf]
      %v1501 = vld [vmem:[%s3 + $0x2e4] sm:$0xf]
      %v1502 = vld [vmem:[%s3 + $0x2e8] sm:$0xf]
      %v1503 = vld [vmem:[%s3 + $0x2ec] sm:$0xf]
      %v1504 = vld [vmem:[%s3 + $0x2f0] sm:$0xf]
      %v1505 = vld [vmem:[%s3 + $0x2f4] sm:$0xf]
      %v1506 = vld [vmem:[%s3 + $0x2f8] sm:$0xf]
      %v1507 = vld [vmem:[%s3 + $0x2fc] sm:$0xf]
      %v1508 = vld [vmem:[%s9 + $0x1] sm:$0x1]
      %v1509 = vlaneseq
      %v1510 = vshrl.u32 %v1509, 7
      %v1511 = vsub.s32 0, %v1510
      %v1512 = vrot.slane %v1508, %v1511
      %v1525 = vunpack.c.l.b16 %v1304
      %v1526 = vunpack.c.h.b16 %v1304
      %v1527 = vunpack.c.l.b16 %v1305
      %v1528 = vunpack.c.h.b16 %v1305
      %v1529 = vunpack.c.l.b16 %v1306
      %v1530 = vunpack.c.h.b16 %v1306
      %v1531 = vunpack.c.l.b16 %v1307
      %v1532 = vunpack.c.h.b16 %v1307
      %v1533 = vunpack.c.l.b16 %v1308
      %v1534 = vunpack.c.h.b16 %v1308
      %v1535 = vunpack.c.l.b16 %v1309
      %v1536 = vunpack.c.h.b16 %v1309
      %v1537 = vunpack.c.l.b16 %v1310
      %v1538 = vunpack.c.h.b16 %v1310
      %v1539 = vunpack.c.l.b16 %v1311
      %v1540 = vunpack.c.h.b16 %v1311
      %v1541 = vunpack.c.l.b16 %v1312
      %v1542 = vunpack.c.h.b16 %v1312
      %v1543 = vunpack.c.l.b16 %v1313
      %v1544 = vunpack.c.h.b16 %v1313
      %v1545 = vunpack.c.l.b16 %v1314
      %v1546 = vunpack.c.h.b16 %v1314
      %v1547 = vunpack.c.l.b16 %v1315
      %v1548 = vunpack.c.h.b16 %v1315
      %v1549 = vpack.c.b16 %v1537, %v1525
      %v1550 = vpack.c.b16 %v1538, %v1526
      %v1551 = vpack.c.b16 %v1539, %v1527
      %v1552 = vpack.c.b16 %v1540, %v1528
      %v1553 = vpack.c.b16 %v1541, %v1529
      %v1554 = vpack.c.b16 %v1542, %v1530
      %v1555 = vpack.c.b16 %v1543, %v1531
      %v1556 = vpack.c.b16 %v1544, %v1532
      %v1557 = vpack.c.b16 %v1545, %v1533
      %v1558 = vpack.c.b16 %v1546, %v1534
      %v1559 = vpack.c.b16 %v1547, %v1535
      %v1560 = vpack.c.b16 %v1548, %v1536
      %v1765 = vunpack.c.l.b16 %v1316
      %v1766 = vunpack.c.l.b16 %v1317
      %v1767 = vunpack.c.l.b16 %v1318
      %v1768 = vunpack.c.l.b16 %v1319
      %v1769 = vunpack.c.l.b16 %v1320
      %v1770 = vunpack.c.l.b16 %v1321
      %v1771 = vunpack.c.l.b16 %v1322
      %v1772 = vunpack.c.l.b16 %v1323
      %v1773 = vunpack.c.l.b16 %v1324
      %v1774 = vunpack.c.l.b16 %v1325
      %v1775 = vunpack.c.l.b16 %v1326
      %v1776 = vunpack.c.l.b16 %v1327
      %v1777 = vunpack.c.l.b16 %v1328
      %v1778 = vunpack.c.l.b16 %v1329
      %v1779 = vunpack.c.l.b16 %v1330
      %v1780 = vunpack.c.l.b16 %v1331
      %v1781 = vunpack.c.l.b16 %v1332
      %v1782 = vunpack.c.l.b16 %v1333
      %v1783 = vunpack.c.l.b16 %v1334
      %v1784 = vunpack.c.l.b16 %v1335
      %v1785 = vunpack.c.l.b16 %v1336
      %v1786 = vunpack.c.l.b16 %v1337
      %v1787 = vunpack.c.l.b16 %v1338
      %v1788 = vunpack.c.l.b16 %v1339
      %v1789 = vunpack.c.l.b16 %v1340
      %v1790 = vunpack.c.l.b16 %v1341
      %v1791 = vunpack.c.l.b16 %v1342
      %v1792 = vunpack.c.l.b16 %v1343
      %v1793 = vunpack.c.l.b16 %v1344
      %v1794 = vunpack.c.l.b16 %v1345
      %v1795 = vunpack.c.l.b16 %v1346
      %v1796 = vunpack.c.l.b16 %v1347
      %v1797 = vunpack.c.l.b16 %v1348
      %v1798 = vunpack.c.l.b16 %v1349
      %v1799 = vunpack.c.l.b16 %v1350
      %v1800 = vunpack.c.l.b16 %v1351
      %v1801 = vunpack.c.l.b16 %v1352
      %v1802 = vunpack.c.l.b16 %v1353
      %v1803 = vunpack.c.l.b16 %v1354
      %v1804 = vunpack.c.l.b16 %v1355
      %v1805 = vunpack.c.l.b16 %v1356
      %v1806 = vunpack.c.l.b16 %v1357
      %v1807 = vunpack.c.l.b16 %v1358
      %v1808 = vunpack.c.l.b16 %v1359
      %v1809 = vunpack.c.l.b16 %v1360
      %v1810 = vunpack.c.l.b16 %v1361
      %v1811 = vunpack.c.l.b16 %v1362
      %v1812 = vunpack.c.l.b16 %v1363
      %v1813 = vunpack.c.l.b16 %v1364
      %v1814 = vunpack.c.l.b16 %v1365
      %v1815 = vunpack.c.l.b16 %v1366
      %v1816 = vunpack.c.l.b16 %v1367
      %v1817 = vunpack.c.l.b16 %v1368
      %v1818 = vunpack.c.l.b16 %v1369
      %v1819 = vunpack.c.l.b16 %v1370
      %v1820 = vunpack.c.l.b16 %v1371
      %v1821 = vunpack.c.l.b16 %v1372
      %v1822 = vunpack.c.l.b16 %v1373
      %v1823 = vunpack.c.l.b16 %v1374
      %v1824 = vunpack.c.l.b16 %v1375
      %v1825 = vunpack.c.l.b16 %v1376
      %v1826 = vunpack.c.l.b16 %v1377
      %v1827 = vunpack.c.l.b16 %v1378
      %v1828 = vunpack.c.l.b16 %v1379
      %v1829 = vunpack.c.l.b16 %v1380
      %v1830 = vunpack.c.l.b16 %v1381
      %v1831 = vunpack.c.l.b16 %v1382
      %v1832 = vunpack.c.l.b16 %v1383
      %v1833 = vunpack.c.l.b16 %v1384
      %v1834 = vunpack.c.l.b16 %v1385
      %v1835 = vunpack.c.l.b16 %v1386
      %v1836 = vunpack.c.l.b16 %v1387
      %v1837 = vunpack.c.l.b16 %v1388
      %v1838 = vunpack.c.l.b16 %v1389
      %v1839 = vunpack.c.l.b16 %v1390
      %v1840 = vunpack.c.l.b16 %v1391
      %v1841 = vunpack.c.l.b16 %v1392
      %v1842 = vunpack.c.l.b16 %v1393
      %v1843 = vunpack.c.l.b16 %v1394
      %v1844 = vunpack.c.l.b16 %v1395
      %v1845 = vunpack.c.l.b16 %v1396
      %v1846 = vunpack.c.l.b16 %v1397
      %v1847 = vunpack.c.l.b16 %v1398
      %v1848 = vunpack.c.l.b16 %v1399
      %v1849 = vunpack.c.l.b16 %v1400
      %v1850 = vunpack.c.l.b16 %v1401
      %v1851 = vunpack.c.l.b16 %v1402
      %v1852 = vunpack.c.l.b16 %v1403
      %v1853 = vunpack.c.l.b16 %v1404
      %v1854 = vunpack.c.l.b16 %v1405
      %v1855 = vunpack.c.l.b16 %v1406
      %v1856 = vunpack.c.l.b16 %v1407
      %v1857 = vunpack.c.l.b16 %v1408
      %v1858 = vunpack.c.l.b16 %v1409
      %v1859 = vunpack.c.l.b16 %v1410
      %v1860 = vunpack.c.l.b16 %v1411
      %v1861 = vunpack.c.l.b16 %v1412
      %v1862 = vunpack.c.l.b16 %v1413
      %v1863 = vunpack.c.l.b16 %v1414
      %v1864 = vunpack.c.l.b16 %v1415
      %v1865 = vunpack.c.l.b16 %v1416
      %v1866 = vunpack.c.l.b16 %v1417
      %v1867 = vunpack.c.l.b16 %v1418
      %v1868 = vunpack.c.l.b16 %v1419
      %v1869 = vunpack.c.l.b16 %v1420
      %v1870 = vunpack.c.l.b16 %v1421
      %v1871 = vunpack.c.l.b16 %v1422
      %v1872 = vunpack.c.l.b16 %v1423
      %v1873 = vunpack.c.l.b16 %v1424
      %v1874 = vunpack.c.l.b16 %v1425
      %v1875 = vunpack.c.l.b16 %v1426
      %v1876 = vunpack.c.l.b16 %v1427
      %v1877 = vunpack.c.l.b16 %v1428
      %v1878 = vunpack.c.l.b16 %v1429
      %v1879 = vunpack.c.l.b16 %v1430
      %v1880 = vunpack.c.l.b16 %v1431
      %v1881 = vunpack.c.l.b16 %v1432
      %v1882 = vunpack.c.l.b16 %v1433
      %v1883 = vunpack.c.l.b16 %v1434
      %v1884 = vunpack.c.l.b16 %v1435
      %v1885 = vunpack.c.l.b16 %v1436
      %v1886 = vunpack.c.l.b16 %v1437
      %v1887 = vunpack.c.l.b16 %v1438
      %v1888 = vunpack.c.l.b16 %v1439
      %v1889 = vunpack.c.l.b16 %v1440
      %v1890 = vunpack.c.l.b16 %v1441
      %v1891 = vunpack.c.l.b16 %v1442
      %v1892 = vunpack.c.l.b16 %v1443
      %v1893 = vunpack.c.l.b16 %v1444
      %v1894 = vunpack.c.l.b16 %v1445
      %v1895 = vunpack.c.l.b16 %v1446
      %v1896 = vunpack.c.l.b16 %v1447
      %v1897 = vunpack.c.l.b16 %v1448
      %v1898 = vunpack.c.l.b16 %v1449
      %v1899 = vunpack.c.l.b16 %v1450
      %v1900 = vunpack.c.l.b16 %v1451
      %v1901 = vunpack.c.l.b16 %v1452
      %v1902 = vunpack.c.l.b16 %v1453
      %v1903 = vunpack.c.l.b16 %v1454
      %v1904 = vunpack.c.l.b16 %v1455
      %v1905 = vunpack.c.l.b16 %v1456
      %v1906 = vunpack.c.l.b16 %v1457
      %v1907 = vunpack.c.l.b16 %v1458
      %v1908 = vunpack.c.l.b16 %v1459
      %v1909 = vunpack.c.l.b16 %v1460
      %v1910 = vunpack.c.l.b16 %v1461
      %v1911 = vunpack.c.l.b16 %v1462
      %v1912 = vunpack.c.l.b16 %v1463
      %v1913 = vunpack.c.l.b16 %v1464
      %v1914 = vunpack.c.l.b16 %v1465
      %v1915 = vunpack.c.l.b16 %v1466
      %v1916 = vunpack.c.l.b16 %v1467
      %v1917 = vunpack.c.l.b16 %v1468
      %v1918 = vunpack.c.l.b16 %v1469
      %v1919 = vunpack.c.l.b16 %v1470
      %v1920 = vunpack.c.l.b16 %v1471
      %v1921 = vunpack.c.l.b16 %v1472
      %v1922 = vunpack.c.l.b16 %v1473
      %v1923 = vunpack.c.l.b16 %v1474
      %v1924 = vunpack.c.l.b16 %v1475
      %v1925 = vunpack.c.l.b16 %v1476
      %v1926 = vunpack.c.l.b16 %v1477
      %v1927 = vunpack.c.l.b16 %v1478
      %v1928 = vunpack.c.l.b16 %v1479
      %v1929 = vunpack.c.l.b16 %v1480
      %v1930 = vunpack.c.l.b16 %v1481
      %v1931 = vunpack.c.l.b16 %v1482
      %v1932 = vunpack.c.l.b16 %v1483
      %v1933 = vunpack.c.l.b16 %v1484
      %v1934 = vunpack.c.l.b16 %v1485
      %v1935 = vunpack.c.l.b16 %v1486
      %v1936 = vunpack.c.l.b16 %v1487
      %v1937 = vunpack.c.l.b16 %v1488
      %v1938 = vunpack.c.l.b16 %v1489
      %v1939 = vunpack.c.l.b16 %v1490
      %v1940 = vunpack.c.l.b16 %v1491
      %v1941 = vunpack.c.l.b16 %v1492
      %v1942 = vunpack.c.l.b16 %v1493
      %v1943 = vunpack.c.l.b16 %v1494
      %v1944 = vunpack.c.l.b16 %v1495
      %v1945 = vunpack.c.l.b16 %v1496
      %v1946 = vunpack.c.l.b16 %v1497
      %v1947 = vunpack.c.l.b16 %v1498
      %v1948 = vunpack.c.l.b16 %v1499
      %v1949 = vunpack.c.l.b16 %v1500
      %v1950 = vunpack.c.l.b16 %v1501
      %v1951 = vunpack.c.l.b16 %v1502
      %v1952 = vunpack.c.l.b16 %v1503
      %v1953 = vunpack.c.l.b16 %v1504
      %v1954 = vunpack.c.l.b16 %v1505
      %v1955 = vunpack.c.l.b16 %v1506
      %v1956 = vunpack.c.l.b16 %v1507
      %v1957 = vpack.c.b16 %v1766, %v1765
      %v1958 = vpack.c.b16 %v1768, %v1767
      %v1959 = vpack.c.b16 %v1770, %v1769
      %v1960 = vpack.c.b16 %v1772, %v1771
      %v1961 = vpack.c.b16 %v1774, %v1773
      %v1962 = vpack.c.b16 %v1776, %v1775
      %v1963 = vpack.c.b16 %v1778, %v1777
      %v1964 = vpack.c.b16 %v1780, %v1779
      %v1965 = vpack.c.b16 %v1782, %v1781
      %v1966 = vpack.c.b16 %v1784, %v1783
      %v1967 = vpack.c.b16 %v1786, %v1785
      %v1968 = vpack.c.b16 %v1788, %v1787
      %v1969 = vpack.c.b16 %v1790, %v1789
      %v1970 = vpack.c.b16 %v1792, %v1791
      %v1971 = vpack.c.b16 %v1794, %v1793
      %v1972 = vpack.c.b16 %v1796, %v1795
      %v1973 = vpack.c.b16 %v1798, %v1797
      %v1974 = vpack.c.b16 %v1800, %v1799
      %v1975 = vpack.c.b16 %v1802, %v1801
      %v1976 = vpack.c.b16 %v1804, %v1803
      %v1977 = vpack.c.b16 %v1806, %v1805
      %v1978 = vpack.c.b16 %v1808, %v1807
      %v1979 = vpack.c.b16 %v1810, %v1809
      %v1980 = vpack.c.b16 %v1812, %v1811
      %v1981 = vpack.c.b16 %v1814, %v1813
      %v1982 = vpack.c.b16 %v1816, %v1815
      %v1983 = vpack.c.b16 %v1818, %v1817
      %v1984 = vpack.c.b16 %v1820, %v1819
      %v1985 = vpack.c.b16 %v1822, %v1821
      %v1986 = vpack.c.b16 %v1824, %v1823
      %v1987 = vpack.c.b16 %v1826, %v1825
      %v1988 = vpack.c.b16 %v1828, %v1827
      %v1989 = vpack.c.b16 %v1830, %v1829
      %v1990 = vpack.c.b16 %v1832, %v1831
      %v1991 = vpack.c.b16 %v1834, %v1833
      %v1992 = vpack.c.b16 %v1836, %v1835
      %v1993 = vpack.c.b16 %v1838, %v1837
      %v1994 = vpack.c.b16 %v1840, %v1839
      %v1995 = vpack.c.b16 %v1842, %v1841
      %v1996 = vpack.c.b16 %v1844, %v1843
      %v1997 = vpack.c.b16 %v1846, %v1845
      %v1998 = vpack.c.b16 %v1848, %v1847
      %v1999 = vpack.c.b16 %v1850, %v1849
      %v2000 = vpack.c.b16 %v1852, %v1851
      %v2001 = vpack.c.b16 %v1854, %v1853
      %v2002 = vpack.c.b16 %v1856, %v1855
      %v2003 = vpack.c.b16 %v1858, %v1857
      %v2004 = vpack.c.b16 %v1860, %v1859
      %v2005 = vpack.c.b16 %v1862, %v1861
      %v2006 = vpack.c.b16 %v1864, %v1863
      %v2007 = vpack.c.b16 %v1866, %v1865
      %v2008 = vpack.c.b16 %v1868, %v1867
      %v2009 = vpack.c.b16 %v1870, %v1869
      %v2010 = vpack.c.b16 %v1872, %v1871
      %v2011 = vpack.c.b16 %v1874, %v1873
      %v2012 = vpack.c.b16 %v1876, %v1875
      %v2013 = vpack.c.b16 %v1878, %v1877
      %v2014 = vpack.c.b16 %v1880, %v1879
      %v2015 = vpack.c.b16 %v1882, %v1881
      %v2016 = vpack.c.b16 %v1884, %v1883
      %v2017 = vpack.c.b16 %v1886, %v1885
      %v2018 = vpack.c.b16 %v1888, %v1887
      %v2019 = vpack.c.b16 %v1890, %v1889
      %v2020 = vpack.c.b16 %v1892, %v1891
      %v2021 = vpack.c.b16 %v1894, %v1893
      %v2022 = vpack.c.b16 %v1896, %v1895
      %v2023 = vpack.c.b16 %v1898, %v1897
      %v2024 = vpack.c.b16 %v1900, %v1899
      %v2025 = vpack.c.b16 %v1902, %v1901
      %v2026 = vpack.c.b16 %v1904, %v1903
      %v2027 = vpack.c.b16 %v1906, %v1905
      %v2028 = vpack.c.b16 %v1908, %v1907
      %v2029 = vpack.c.b16 %v1910, %v1909
      %v2030 = vpack.c.b16 %v1912, %v1911
      %v2031 = vpack.c.b16 %v1914, %v1913
      %v2032 = vpack.c.b16 %v1916, %v1915
      %v2033 = vpack.c.b16 %v1918, %v1917
      %v2034 = vpack.c.b16 %v1920, %v1919
      %v2035 = vpack.c.b16 %v1922, %v1921
      %v2036 = vpack.c.b16 %v1924, %v1923
      %v2037 = vpack.c.b16 %v1926, %v1925
      %v2038 = vpack.c.b16 %v1928, %v1927
      %v2039 = vpack.c.b16 %v1930, %v1929
      %v2040 = vpack.c.b16 %v1932, %v1931
      %v2041 = vpack.c.b16 %v1934, %v1933
      %v2042 = vpack.c.b16 %v1936, %v1935
      %v2043 = vpack.c.b16 %v1938, %v1937
      %v2044 = vpack.c.b16 %v1940, %v1939
      %v2045 = vpack.c.b16 %v1942, %v1941
      %v2046 = vpack.c.b16 %v1944, %v1943
      %v2047 = vpack.c.b16 %v1946, %v1945
      %v2048 = vpack.c.b16 %v1948, %v1947
      %v2049 = vpack.c.b16 %v1950, %v1949
      %v2050 = vpack.c.b16 %v1952, %v1951
      %v2051 = vpack.c.b16 %v1954, %v1953
      %v2052 = vpack.c.b16 %v1956, %v1955
      %2149 = vmatprep.subr.bf16.mxu0 0
      %2150 = vmatpush1.bf16.msra.mxu0 %v1957
      %2151 = vmatprep.subr.bf16.mxu0 0
      %2152 = vmatpush1.bf16.msra.mxu0 %v1958
      %2153 = vmatprep.subr.bf16.mxu0 0
      %2154 = vmatpush1.bf16.msra.mxu0 %v1959
      %2155 = vmatprep.subr.bf16.mxu0 0
      %2156 = vmatpush1.bf16.msra.mxu0 %v1960
      %2157 = vmatprep.subr.bf16.mxu0 0
      %2158 = vmatpush1.bf16.msra.mxu0 %v1961
      %2159 = vmatprep.subr.bf16.mxu0 0
      %2160 = vmatpush1.bf16.msra.mxu0 %v1962
      %2161 = vmatprep.subr.bf16.mxu0 0
      %2162 = vmatpush1.bf16.msra.mxu0 %v1963
      %2163 = vmatprep.subr.bf16.mxu0 0
      %2164 = vmatpush1.bf16.msra.mxu0 %v1964
      %2165 = vmatprep.subr.bf16.mxu0 0
      %2166 = vmatpush1.bf16.msra.mxu0 %v1965
      %2167 = vmatprep.subr.bf16.mxu0 0
      %2168 = vmatpush1.bf16.msra.mxu0 %v1966
      %2169 = vmatprep.subr.bf16.mxu0 0
      %2170 = vmatpush1.bf16.msra.mxu0 %v1967
      %2171 = vmatprep.subr.bf16.mxu0 0
      %2172 = vmatpush1.bf16.msra.mxu0 %v1968
      %2173 = vmatprep.subr.bf16.mxu0 0
      %2174 = vmatpush1.bf16.msra.mxu0 %v1969
      %2175 = vmatprep.subr.bf16.mxu0 0
      %2176 = vmatpush1.bf16.msra.mxu0 %v1970
      %2177 = vmatprep.subr.bf16.mxu0 0
      %2178 = vmatpush1.bf16.msra.mxu0 %v1971
      %2179 = vmatprep.subr.bf16.mxu0 0
      %2180 = vmatpush1.bf16.msra.mxu0 %v1972
      %2181 = vmatprep.mubr.bf16.mxu0 %v1550
      %2182 = vmatmul.mubr.bf16.gmra.mrb[0].mxu0 %v1549
      %v2183 = vpop.f32.mrb[0].mxu0
      %v2184 = vadd.f32 %v1512, %v2183
      %v2185 = vpop.f32.mrb[0].mxu0
      %v2186 = vpop.f32.mrb[0].mxu0
      %v2187 = vadd.f32 %v1512, %v2186
      %v2188 = vpop.f32.mrb[0].mxu0
      %2189 = vdwg.mxu0
      %2190 = vmatprep.subr.bf16.mxu0 0
      %2191 = vmatpush1.bf16.msra.mxu0 %v1973
      %2192 = vmatprep.subr.bf16.mxu0 0
      %2193 = vmatpush1.bf16.msra.mxu0 %v1974
      %2194 = vmatprep.subr.bf16.mxu0 0
      %2195 = vmatpush1.bf16.msra.mxu0 %v1975
      %2196 = vmatprep.subr.bf16.mxu0 0
      %2197 = vmatpush1.bf16.msra.mxu0 %v1976
      %2198 = vmatprep.subr.bf16.mxu0 0
      %2199 = vmatpush1.bf16.msra.mxu0 %v1977
      %2200 = vmatprep.subr.bf16.mxu0 0
      %2201 = vmatpush1.bf16.msra.mxu0 %v1978
      %2202 = vmatprep.subr.bf16.mxu0 0
      %2203 = vmatpush1.bf16.msra.mxu0 %v1979
      %2204 = vmatprep.subr.bf16.mxu0 0
      %2205 = vmatpush1.bf16.msra.mxu0 %v1980
      %2206 = vmatprep.subr.bf16.mxu0 0
      %2207 = vmatpush1.bf16.msra.mxu0 %v1981
      %2208 = vmatprep.subr.bf16.mxu0 0
      %2209 = vmatpush1.bf16.msra.mxu0 %v1982
      %2210 = vmatprep.subr.bf16.mxu0 0
      %2211 = vmatpush1.bf16.msra.mxu0 %v1983
      %2212 = vmatprep.subr.bf16.mxu0 0
      %2213 = vmatpush1.bf16.msra.mxu0 %v1984
      %2214 = vmatprep.subr.bf16.mxu0 0
      %2215 = vmatpush1.bf16.msra.mxu0 %v1985
      %2216 = vmatprep.subr.bf16.mxu0 0
      %2217 = vmatpush1.bf16.msra.mxu0 %v1986
      %2218 = vmatprep.subr.bf16.mxu0 0
      %2219 = vmatpush1.bf16.msra.mxu0 %v1987
      %2220 = vmatprep.subr.bf16.mxu0 0
      %2221 = vmatpush1.bf16.msra.mxu0 %v1988
      %2222 = vmatprep.mubr.bf16.mxu0 %v1552
      %2223 = vmatmul.mubr.bf16.gmra.mrb[0].mxu0 %v1551
      %v2224 = vpop.f32.mrb[0].mxu0
      %v2225 = vadd.f32 %v2184, %v2224
      %v2226 = vpop.f32.mrb[0].mxu0
      %v2227 = vpop.f32.mrb[0].mxu0
      %v2228 = vadd.f32 %v2187, %v2227
      %v2229 = vpop.f32.mrb[0].mxu0
      %2230 = vdwg.mxu0
      %2231 = vmatprep.subr.bf16.mxu0 0
      %2232 = vmatpush1.bf16.msra.mxu0 %v1989
      %2233 = vmatprep.subr.bf16.mxu0 0
      %2234 = vmatpush1.bf16.msra.mxu0 %v1990
      %2235 = vmatprep.subr.bf16.mxu0 0
      %2236 = vmatpush1.bf16.msra.mxu0 %v1991
      %2237 = vmatprep.subr.bf16.mxu0 0
      %2238 = vmatpush1.bf16.msra.mxu0 %v1992
      %2239 = vmatprep.subr.bf16.mxu0 0
      %2240 = vmatpush1.bf16.msra.mxu0 %v1993
      %2241 = vmatprep.subr.bf16.mxu0 0
      %2242 = vmatpush1.bf16.msra.mxu0 %v1994
      %2243 = vmatprep.subr.bf16.mxu0 0
      %2244 = vmatpush1.bf16.msra.mxu0 %v1995
      %2245 = vmatprep.subr.bf16.mxu0 0
      %2246 = vmatpush1.bf16.msra.mxu0 %v1996
      %2247 = vmatprep.subr.bf16.mxu0 0
      %2248 = vmatpush1.bf16.msra.mxu0 %v1997
      %2249 = vmatprep.subr.bf16.mxu0 0
      %2250 = vmatpush1.bf16.msra.mxu0 %v1998
      %2251 = vmatprep.subr.bf16.mxu0 0
      %2252 = vmatpush1.bf16.msra.mxu0 %v1999
      %2253 = vmatprep.subr.bf16.mxu0 0
      %2254 = vmatpush1.bf16.msra.mxu0 %v2000
      %2255 = vmatprep.subr.bf16.mxu0 0
      %2256 = vmatpush1.bf16.msra.mxu0 %v2001
      %2257 = vmatprep.subr.bf16.mxu0 0
      %2258 = vmatpush1.bf16.msra.mxu0 %v2002
      %2259 = vmatprep.subr.bf16.mxu0 0
      %2260 = vmatpush1.bf16.msra.mxu0 %v2003
      %2261 = vmatprep.subr.bf16.mxu0 0
      %2262 = vmatpush1.bf16.msra.mxu0 %v2004
      %2263 = vmatprep.mubr.bf16.mxu0 %v1554
      %2264 = vmatmul.mubr.bf16.gmra.mrb[0].mxu0 %v1553
      %v2265 = vpop.f32.mrb[0].mxu0
      %v2266 = vadd.f32 %v2225, %v2265
      %v2267 = vpop.f32.mrb[0].mxu0
      %v2268 = vpop.f32.mrb[0].mxu0
      %v2269 = vadd.f32 %v2228, %v2268
      %v2270 = vpop.f32.mrb[0].mxu0
      %2271 = vdwg.mxu0
      %2272 = vmatprep.subr.bf16.mxu0 0
      %2273 = vmatpush1.bf16.msra.mxu0 %v2005
      %2274 = vmatprep.subr.bf16.mxu0 0
      %2275 = vmatpush1.bf16.msra.mxu0 %v2006
      %2276 = vmatprep.subr.bf16.mxu0 0
      %2277 = vmatpush1.bf16.msra.mxu0 %v2007
      %2278 = vmatprep.subr.bf16.mxu0 0
      %2279 = vmatpush1.bf16.msra.mxu0 %v2008
      %2280 = vmatprep.subr.bf16.mxu0 0
      %2281 = vmatpush1.bf16.msra.mxu0 %v2009
      %2282 = vmatprep.subr.bf16.mxu0 0
      %2283 = vmatpush1.bf16.msra.mxu0 %v2010
      %2284 = vmatprep.subr.bf16.mxu0 0
      %2285 = vmatpush1.bf16.msra.mxu0 %v2011
      %2286 = vmatprep.subr.bf16.mxu0 0
      %2287 = vmatpush1.bf16.msra.mxu0 %v2012
      %2288 = vmatprep.subr.bf16.mxu0 0
      %2289 = vmatpush1.bf16.msra.mxu0 %v2013
      %2290 = vmatprep.subr.bf16.mxu0 0
      %2291 = vmatpush1.bf16.msra.mxu0 %v2014
      %2292 = vmatprep.subr.bf16.mxu0 0
      %2293 = vmatpush1.bf16.msra.mxu0 %v2015
      %2294 = vmatprep.subr.bf16.mxu0 0
      %2295 = vmatpush1.bf16.msra.mxu0 %v2016
      %2296 = vmatprep.subr.bf16.mxu0 0
      %2297 = vmatpush1.bf16.msra.mxu0 %v2017
      %2298 = vmatprep.subr.bf16.mxu0 0
      %2299 = vmatpush1.bf16.msra.mxu0 %v2018
      %2300 = vmatprep.subr.bf16.mxu0 0
      %2301 = vmatpush1.bf16.msra.mxu0 %v2019
      %2302 = vmatprep.subr.bf16.mxu0 0
      %2303 = vmatpush1.bf16.msra.mxu0 %v2020
      %2304 = vmatprep.mubr.bf16.mxu0 %v1556
      %2305 = vmatmul.mubr.bf16.gmra.mrb[0].mxu0 %v1555
      %v2306 = vpop.f32.mrb[0].mxu0
      %v2307 = vadd.f32 %v2266, %v2306
      %v2308 = vpop.f32.mrb[0].mxu0
      %v2309 = vpop.f32.mrb[0].mxu0
      %v2310 = vadd.f32 %v2269, %v2309
      %v2311 = vpop.f32.mrb[0].mxu0
      %2312 = vdwg.mxu0
      %2313 = vmatprep.subr.bf16.mxu0 0
      %2314 = vmatpush1.bf16.msra.mxu0 %v2021
      %2315 = vmatprep.subr.bf16.mxu0 0
      %2316 = vmatpush1.bf16.msra.mxu0 %v2022
      %2317 = vmatprep.subr.bf16.mxu0 0
      %2318 = vmatpush1.bf16.msra.mxu0 %v2023
      %2319 = vmatprep.subr.bf16.mxu0 0
      %2320 = vmatpush1.bf16.msra.mxu0 %v2024
      %2321 = vmatprep.subr.bf16.mxu0 0
      %2322 = vmatpush1.bf16.msra.mxu0 %v2025
      %2323 = vmatprep.subr.bf16.mxu0 0
      %2324 = vmatpush1.bf16.msra.mxu0 %v2026
      %2325 = vmatprep.subr.bf16.mxu0 0
      %2326 = vmatpush1.bf16.msra.mxu0 %v2027
      %2327 = vmatprep.subr.bf16.mxu0 0
      %2328 = vmatpush1.bf16.msra.mxu0 %v2028
      %2329 = vmatprep.subr.bf16.mxu0 0
      %2330 = vmatpush1.bf16.msra.mxu0 %v2029
      %2331 = vmatprep.subr.bf16.mxu0 0
      %2332 = vmatpush1.bf16.msra.mxu0 %v2030
      %2333 = vmatprep.subr.bf16.mxu0 0
      %2334 = vmatpush1.bf16.msra.mxu0 %v2031
      %2335 = vmatprep.subr.bf16.mxu0 0
      %2336 = vmatpush1.bf16.msra.mxu0 %v2032
      %2337 = vmatprep.subr.bf16.mxu0 0
      %2338 = vmatpush1.bf16.msra.mxu0 %v2033
      %2339 = vmatprep.subr.bf16.mxu0 0
      %2340 = vmatpush1.bf16.msra.mxu0 %v2034
      %2341 = vmatprep.subr.bf16.mxu0 0
      %2342 = vmatpush1.bf16.msra.mxu0 %v2035
      %2343 = vmatprep.subr.bf16.mxu0 0
      %2344 = vmatpush1.bf16.msra.mxu0 %v2036
      %2345 = vmatprep.mubr.bf16.mxu0 %v1558
      %2346 = vmatmul.mubr.bf16.gmra.mrb[0].mxu0 %v1557
      %v2347 = vpop.f32.mrb[0].mxu0
      %v2348 = vadd.f32 %v2307, %v2347
      %v2349 = vpop.f32.mrb[0].mxu0
      %v2350 = vpop.f32.mrb[0].mxu0
      %v2351 = vadd.f32 %v2310, %v2350
      %v2352 = vpop.f32.mrb[0].mxu0
      %2353 = vdwg.mxu0
      %2354 = vmatprep.subr.bf16.mxu0 0
      %2355 = vmatpush1.bf16.msra.mxu0 %v2037
      %2356 = vmatprep.subr.bf16.mxu0 0
      %2357 = vmatpush1.bf16.msra.mxu0 %v2038
      %2358 = vmatprep.subr.bf16.mxu0 0
      %2359 = vmatpush1.bf16.msra.mxu0 %v2039
      %2360 = vmatprep.subr.bf16.mxu0 0
      %2361 = vmatpush1.bf16.msra.mxu0 %v2040
      %2362 = vmatprep.subr.bf16.mxu0 0
      %2363 = vmatpush1.bf16.msra.mxu0 %v2041
      %2364 = vmatprep.subr.bf16.mxu0 0
      %2365 = vmatpush1.bf16.msra.mxu0 %v2042
      %2366 = vmatprep.subr.bf16.mxu0 0
      %2367 = vmatpush1.bf16.msra.mxu0 %v2043
      %2368 = vmatprep.subr.bf16.mxu0 0
      %2369 = vmatpush1.bf16.msra.mxu0 %v2044
      %2370 = vmatprep.subr.bf16.mxu0 0
      %2371 = vmatpush1.bf16.msra.mxu0 %v2045
      %2372 = vmatprep.subr.bf16.mxu0 0
      %2373 = vmatpush1.bf16.msra.mxu0 %v2046
      %2374 = vmatprep.subr.bf16.mxu0 0
      %2375 = vmatpush1.bf16.msra.mxu0 %v2047
      %2376 = vmatprep.subr.bf16.mxu0 0
      %2377 = vmatpush1.bf16.msra.mxu0 %v2048
      %2378 = vmatprep.subr.bf16.mxu0 0
      %2379 = vmatpush1.bf16.msra.mxu0 %v2049
      %2380 = vmatprep.subr.bf16.mxu0 0
      %2381 = vmatpush1.bf16.msra.mxu0 %v2050
      %2382 = vmatprep.subr.bf16.mxu0 0
      %2383 = vmatpush1.bf16.msra.mxu0 %v2051
      %2384 = vmatprep.subr.bf16.mxu0 0
      %2385 = vmatpush1.bf16.msra.mxu0 %v2052
      %2386 = vmatprep.mubr.bf16.mxu0 %v1560
      %2387 = vmatmul.mubr.bf16.gmra.mrb[0].mxu0 %v1559
      %v2388 = vpop.f32.mrb[0].mxu0
      %v2389 = vadd.f32 %v2348, %v2388
      %v2390 = vpop.f32.mrb[0].mxu0
      %v2391 = vpop.f32.mrb[0].mxu0
      %v2392 = vadd.f32 %v2351, %v2391
      %v2393 = vpop.f32.mrb[0].mxu0
      %2394 = vdwg.mxu0
      %v2395 = vmax.f32 %v2389, 0.0
      %v2396 = vmax.f32 %v2392, 0.0
      %2397 = vset.pattern.permute.xlu0 1
      %2398 = vperm.xlu0 %2397, %v1277
      %v2399 = vpop.permute.xlu0 %2398
      %2401 = vset.pattern.permute.xlu0 1
      %2402 = vperm.xlu0 %2401, %v1278
      %v2403 = vpop.permute.xlu0 %2402
      %v2405 = vmul.f32 %v2395, %v2399
      %v2406 = vmul.f32 %v2396, %v2403
      %v2407 = vsel %vm1291, %v2405, -inf
      %v2408 = vsel %vm1291, %v2406, -inf
      %v2409 = vmax.f32 %v2407, %v2408
      %v2410 = vrot.slane %v2409, 4
      %v2411 = vmax.f32 %v2409, %v2410
      %v2412 = vrot.slane %v2411, 2
      %v2413 = vmax.f32 %v2411, %v2412
      %v2414 = vrot.slane %v2413, 1
      %v2415 = vmax.f32 %v2413, %v2414
      %v2416 = vld [vmem:[%s10 + $0x1] sm:$0x1]
      %v2417 = vmul.f32 %v2415, %v2416
      %v2418 = vadd.f32 %v1303, %v2417
      %v2419 = vld [vmem:[%s423] sm:$0xff]
      %v2420 = vld [vmem:[%s423 + $0x8] sm:$0xff]
      %v2421 = vld [vmem:[%s423 + $0x10] sm:$0xff]
      %v2422 = vld [vmem:[%s423 + $0x18] sm:$0xff]
      %v2423 = vld [vmem:[%s423 + $0x20] sm:$0xff]
      %v2424 = vld [vmem:[%s423 + $0x28] sm:$0xff]
      %v2425 = vld [vmem:[%s423 + $0x30] sm:$0xff]
      %v2426 = vld [vmem:[%s423 + $0x38] sm:$0xf]
      %v2427 = vld [vmem:[%s423 + $0x3c] sm:$0xff]
      %v2428 = vld [vmem:[%s423 + $0x44] sm:$0xff]
      %v2429 = vld [vmem:[%s423 + $0x4c] sm:$0xff]
      %v2430 = vld [vmem:[%s423 + $0x54] sm:$0xff]
      %v2431 = vld [vmem:[%s423 + $0x5c] sm:$0xff]
      %v2432 = vld [vmem:[%s423 + $0x64] sm:$0xff]
      %v2433 = vld [vmem:[%s423 + $0x6c] sm:$0xff]
      %v2434 = vld [vmem:[%s423 + $0x74] sm:$0xf]
      %v2435 = vld [vmem:[%s4] sm:$0xf]
      %v2436 = vld [vmem:[%s4 + $0x4] sm:$0xf]
      %v2437 = vld [vmem:[%s4 + $0x8] sm:$0xf]
      %v2438 = vld [vmem:[%s4 + $0xc] sm:$0xf]
      %v2439 = vld [vmem:[%s4 + $0x10] sm:$0xf]
      %v2440 = vld [vmem:[%s4 + $0x14] sm:$0xf]
      %v2441 = vld [vmem:[%s4 + $0x18] sm:$0xf]
      %v2442 = vld [vmem:[%s4 + $0x1c] sm:$0xf]
      %v2443 = vld [vmem:[%s4 + $0x20] sm:$0xf]
      %v2444 = vld [vmem:[%s4 + $0x24] sm:$0xf]
      %v2445 = vld [vmem:[%s4 + $0x28] sm:$0xf]
      %v2446 = vld [vmem:[%s4 + $0x2c] sm:$0xf]
      %v2447 = vld [vmem:[%s4 + $0x30] sm:$0xf]
      %v2448 = vld [vmem:[%s4 + $0x34] sm:$0xf]
      %v2449 = vld [vmem:[%s4 + $0x38] sm:$0xf]
      %v2450 = vld [vmem:[%s4 + $0x3c] sm:$0xf]
      %v2451 = vld [vmem:[%s4 + $0x40] sm:$0xf]
      %v2452 = vld [vmem:[%s4 + $0x44] sm:$0xf]
      %v2453 = vld [vmem:[%s4 + $0x48] sm:$0xf]
      %v2454 = vld [vmem:[%s4 + $0x4c] sm:$0xf]
      %v2455 = vld [vmem:[%s4 + $0x50] sm:$0xf]
      %v2456 = vld [vmem:[%s4 + $0x54] sm:$0xf]
      %v2457 = vld [vmem:[%s4 + $0x58] sm:$0xf]
      %v2458 = vld [vmem:[%s4 + $0x5c] sm:$0xf]
      %v2459 = vld [vmem:[%s4 + $0x60] sm:$0xf]
      %v2460 = vld [vmem:[%s4 + $0x64] sm:$0xf]
      %v2461 = vld [vmem:[%s4 + $0x68] sm:$0xf]
      %v2462 = vld [vmem:[%s4 + $0x6c] sm:$0xf]
      %v2463 = vld [vmem:[%s4 + $0x70] sm:$0xf]
      %v2464 = vld [vmem:[%s4 + $0x74] sm:$0xf]
      %v2465 = vld [vmem:[%s4 + $0x78] sm:$0xf]
      %v2466 = vld [vmem:[%s4 + $0x7c] sm:$0xf]
      %v2467 = vld [vmem:[%s4 + $0x80] sm:$0xf]
      %v2468 = vld [vmem:[%s4 + $0x84] sm:$0xf]
      %v2469 = vld [vmem:[%s4 + $0x88] sm:$0xf]
      %v2470 = vld [vmem:[%s4 + $0x8c] sm:$0xf]
      %v2471 = vld [vmem:[%s4 + $0x90] sm:$0xf]
      %v2472 = vld [vmem:[%s4 + $0x94] sm:$0xf]
      %v2473 = vld [vmem:[%s4 + $0x98] sm:$0xf]
      %v2474 = vld [vmem:[%s4 + $0x9c] sm:$0xf]
      %v2475 = vld [vmem:[%s4 + $0xa0] sm:$0xf]
      %v2476 = vld [vmem:[%s4 + $0xa4] sm:$0xf]
      %v2477 = vld [vmem:[%s4 + $0xa8] sm:$0xf]
      %v2478 = vld [vmem:[%s4 + $0xac] sm:$0xf]
      %v2479 = vld [vmem:[%s4 + $0xb0] sm:$0xf]
      %v2480 = vld [vmem:[%s4 + $0xb4] sm:$0xf]
      %v2481 = vld [vmem:[%s4 + $0xb8] sm:$0xf]
      %v2482 = vld [vmem:[%s4 + $0xbc] sm:$0xf]
      %v2483 = vld [vmem:[%s4 + $0xc0] sm:$0xf]
      %v2484 = vld [vmem:[%s4 + $0xc4] sm:$0xf]
      %v2485 = vld [vmem:[%s4 + $0xc8] sm:$0xf]
      %v2486 = vld [vmem:[%s4 + $0xcc] sm:$0xf]
      %v2487 = vld [vmem:[%s4 + $0xd0] sm:$0xf]
      %v2488 = vld [vmem:[%s4 + $0xd4] sm:$0xf]
      %v2489 = vld [vmem:[%s4 + $0xd8] sm:$0xf]
      %v2490 = vld [vmem:[%s4 + $0xdc] sm:$0xf]
      %v2491 = vld [vmem:[%s4 + $0xe0] sm:$0xf]
      %v2492 = vld [vmem:[%s4 + $0xe4] sm:$0xf]
      %v2493 = vld [vmem:[%s4 + $0xe8] sm:$0xf]
      %v2494 = vld [vmem:[%s4 + $0xec] sm:$0xf]
      %v2495 = vld [vmem:[%s4 + $0xf0] sm:$0xf]
      %v2496 = vld [vmem:[%s4 + $0xf4] sm:$0xf]
      %v2497 = vld [vmem:[%s4 + $0xf8] sm:$0xf]
      %v2498 = vld [vmem:[%s4 + $0xfc] sm:$0xf]
      %v2499 = vld [vmem:[%s4 + $0x100] sm:$0xf]
      %v2500 = vld [vmem:[%s4 + $0x104] sm:$0xf]
      %v2501 = vld [vmem:[%s4 + $0x108] sm:$0xf]
      %v2502 = vld [vmem:[%s4 + $0x10c] sm:$0xf]
      %v2503 = vld [vmem:[%s4 + $0x110] sm:$0xf]
      %v2504 = vld [vmem:[%s4 + $0x114] sm:$0xf]
      %v2505 = vld [vmem:[%s4 + $0x118] sm:$0xf]
      %v2506 = vld [vmem:[%s4 + $0x11c] sm:$0xf]
      %v2507 = vld [vmem:[%s4 + $0x120] sm:$0xf]
      %v2508 = vld [vmem:[%s4 + $0x124] sm:$0xf]
      %v2509 = vld [vmem:[%s4 + $0x128] sm:$0xf]
      %v2510 = vld [vmem:[%s4 + $0x12c] sm:$0xf]
      %v2511 = vld [vmem:[%s4 + $0x130] sm:$0xf]
      %v2512 = vld [vmem:[%s4 + $0x134] sm:$0xf]
      %v2513 = vld [vmem:[%s4 + $0x138] sm:$0xf]
      %v2514 = vld [vmem:[%s4 + $0x13c] sm:$0xf]
      %v2515 = vld [vmem:[%s4 + $0x140] sm:$0xf]
      %v2516 = vld [vmem:[%s4 + $0x144] sm:$0xf]
      %v2517 = vld [vmem:[%s4 + $0x148] sm:$0xf]
      %v2518 = vld [vmem:[%s4 + $0x14c] sm:$0xf]
      %v2519 = vld [vmem:[%s4 + $0x150] sm:$0xf]
      %v2520 = vld [vmem:[%s4 + $0x154] sm:$0xf]
      %v2521 = vld [vmem:[%s4 + $0x158] sm:$0xf]
      %v2522 = vld [vmem:[%s4 + $0x15c] sm:$0xf]
      %v2523 = vld [vmem:[%s4 + $0x160] sm:$0xf]
      %v2524 = vld [vmem:[%s4 + $0x164] sm:$0xf]
      %v2525 = vld [vmem:[%s4 + $0x168] sm:$0xf]
      %v2526 = vld [vmem:[%s4 + $0x16c] sm:$0xf]
      %v2527 = vld [vmem:[%s4 + $0x170] sm:$0xf]
      %v2528 = vld [vmem:[%s4 + $0x174] sm:$0xf]
      %v2529 = vld [vmem:[%s4 + $0x178] sm:$0xf]
      %v2530 = vld [vmem:[%s4 + $0x17c] sm:$0xf]
      %v2531 = vld [vmem:[%s4 + $0x180] sm:$0xf]
      %v2532 = vld [vmem:[%s4 + $0x184] sm:$0xf]
      %v2533 = vld [vmem:[%s4 + $0x188] sm:$0xf]
      %v2534 = vld [vmem:[%s4 + $0x18c] sm:$0xf]
      %v2535 = vld [vmem:[%s4 + $0x190] sm:$0xf]
      %v2536 = vld [vmem:[%s4 + $0x194] sm:$0xf]
      %v2537 = vld [vmem:[%s4 + $0x198] sm:$0xf]
      %v2538 = vld [vmem:[%s4 + $0x19c] sm:$0xf]
      %v2539 = vld [vmem:[%s4 + $0x1a0] sm:$0xf]
      %v2540 = vld [vmem:[%s4 + $0x1a4] sm:$0xf]
      %v2541 = vld [vmem:[%s4 + $0x1a8] sm:$0xf]
      %v2542 = vld [vmem:[%s4 + $0x1ac] sm:$0xf]
      %v2543 = vld [vmem:[%s4 + $0x1b0] sm:$0xf]
      %v2544 = vld [vmem:[%s4 + $0x1b4] sm:$0xf]
      %v2545 = vld [vmem:[%s4 + $0x1b8] sm:$0xf]
      %v2546 = vld [vmem:[%s4 + $0x1bc] sm:$0xf]
      %v2547 = vld [vmem:[%s4 + $0x1c0] sm:$0xf]
      %v2548 = vld [vmem:[%s4 + $0x1c4] sm:$0xf]
      %v2549 = vld [vmem:[%s4 + $0x1c8] sm:$0xf]
      %v2550 = vld [vmem:[%s4 + $0x1cc] sm:$0xf]
      %v2551 = vld [vmem:[%s4 + $0x1d0] sm:$0xf]
      %v2552 = vld [vmem:[%s4 + $0x1d4] sm:$0xf]
      %v2553 = vld [vmem:[%s4 + $0x1d8] sm:$0xf]
      %v2554 = vld [vmem:[%s4 + $0x1dc] sm:$0xf]
      %v2555 = vld [vmem:[%s4 + $0x1e0] sm:$0xf]
      %v2556 = vld [vmem:[%s4 + $0x1e4] sm:$0xf]
      %v2557 = vld [vmem:[%s4 + $0x1e8] sm:$0xf]
      %v2558 = vld [vmem:[%s4 + $0x1ec] sm:$0xf]
      %v2559 = vld [vmem:[%s4 + $0x1f0] sm:$0xf]
      %v2560 = vld [vmem:[%s4 + $0x1f4] sm:$0xf]
      %v2561 = vld [vmem:[%s4 + $0x1f8] sm:$0xf]
      %v2562 = vld [vmem:[%s4 + $0x1fc] sm:$0xf]
      %v2563 = vld [vmem:[%s4 + $0x200] sm:$0xf]
      %v2564 = vld [vmem:[%s4 + $0x204] sm:$0xf]
      %v2565 = vld [vmem:[%s4 + $0x208] sm:$0xf]
      %v2566 = vld [vmem:[%s4 + $0x20c] sm:$0xf]
      %v2567 = vld [vmem:[%s4 + $0x210] sm:$0xf]
      %v2568 = vld [vmem:[%s4 + $0x214] sm:$0xf]
      %v2569 = vld [vmem:[%s4 + $0x218] sm:$0xf]
      %v2570 = vld [vmem:[%s4 + $0x21c] sm:$0xf]
      %v2571 = vld [vmem:[%s4 + $0x220] sm:$0xf]
      %v2572 = vld [vmem:[%s4 + $0x224] sm:$0xf]
      %v2573 = vld [vmem:[%s4 + $0x228] sm:$0xf]
      %v2574 = vld [vmem:[%s4 + $0x22c] sm:$0xf]
      %v2575 = vld [vmem:[%s4 + $0x230] sm:$0xf]
      %v2576 = vld [vmem:[%s4 + $0x234] sm:$0xf]
      %v2577 = vld [vmem:[%s4 + $0x238] sm:$0xf]
      %v2578 = vld [vmem:[%s4 + $0x23c] sm:$0xf]
      %v2579 = vld [vmem:[%s4 + $0x240] sm:$0xf]
      %v2580 = vld [vmem:[%s4 + $0x244] sm:$0xf]
      %v2581 = vld [vmem:[%s4 + $0x248] sm:$0xf]
      %v2582 = vld [vmem:[%s4 + $0x24c] sm:$0xf]
      %v2583 = vld [vmem:[%s4 + $0x250] sm:$0xf]
      %v2584 = vld [vmem:[%s4 + $0x254] sm:$0xf]
      %v2585 = vld [vmem:[%s4 + $0x258] sm:$0xf]
      %v2586 = vld [vmem:[%s4 + $0x25c] sm:$0xf]
      %v2587 = vld [vmem:[%s4 + $0x260] sm:$0xf]
      %v2588 = vld [vmem:[%s4 + $0x264] sm:$0xf]
      %v2589 = vld [vmem:[%s4 + $0x268] sm:$0xf]
      %v2590 = vld [vmem:[%s4 + $0x26c] sm:$0xf]
      %v2591 = vld [vmem:[%s4 + $0x270] sm:$0xf]
      %v2592 = vld [vmem:[%s4 + $0x274] sm:$0xf]
      %v2593 = vld [vmem:[%s4 + $0x278] sm:$0xf]
      %v2594 = vld [vmem:[%s4 + $0x27c] sm:$0xf]
      %v2595 = vld [vmem:[%s4 + $0x280] sm:$0xf]
      %v2596 = vld [vmem:[%s4 + $0x284] sm:$0xf]
      %v2597 = vld [vmem:[%s4 + $0x288] sm:$0xf]
      %v2598 = vld [vmem:[%s4 + $0x28c] sm:$0xf]
      %v2599 = vld [vmem:[%s4 + $0x290] sm:$0xf]
      %v2600 = vld [vmem:[%s4 + $0x294] sm:$0xf]
      %v2601 = vld [vmem:[%s4 + $0x298] sm:$0xf]
      %v2602 = vld [vmem:[%s4 + $0x29c] sm:$0xf]
      %v2603 = vld [vmem:[%s4 + $0x2a0] sm:$0xf]
      %v2604 = vld [vmem:[%s4 + $0x2a4] sm:$0xf]
      %v2605 = vld [vmem:[%s4 + $0x2a8] sm:$0xf]
      %v2606 = vld [vmem:[%s4 + $0x2ac] sm:$0xf]
      %v2607 = vld [vmem:[%s4 + $0x2b0] sm:$0xf]
      %v2608 = vld [vmem:[%s4 + $0x2b4] sm:$0xf]
      %v2609 = vld [vmem:[%s4 + $0x2b8] sm:$0xf]
      %v2610 = vld [vmem:[%s4 + $0x2bc] sm:$0xf]
      %v2611 = vld [vmem:[%s4 + $0x2c0] sm:$0xf]
      %v2612 = vld [vmem:[%s4 + $0x2c4] sm:$0xf]
      %v2613 = vld [vmem:[%s4 + $0x2c8] sm:$0xf]
      %v2614 = vld [vmem:[%s4 + $0x2cc] sm:$0xf]
      %v2615 = vld [vmem:[%s4 + $0x2d0] sm:$0xf]
      %v2616 = vld [vmem:[%s4 + $0x2d4] sm:$0xf]
      %v2617 = vld [vmem:[%s4 + $0x2d8] sm:$0xf]
      %v2618 = vld [vmem:[%s4 + $0x2dc] sm:$0xf]
      %v2619 = vld [vmem:[%s4 + $0x2e0] sm:$0xf]
      %v2620 = vld [vmem:[%s4 + $0x2e4] sm:$0xf]
      %v2621 = vld [vmem:[%s4 + $0x2e8] sm:$0xf]
      %v2622 = vld [vmem:[%s4 + $0x2ec] sm:$0xf]
      %v2623 = vld [vmem:[%s4 + $0x2f0] sm:$0xf]
      %v2624 = vld [vmem:[%s4 + $0x2f4] sm:$0xf]
      %v2625 = vld [vmem:[%s4 + $0x2f8] sm:$0xf]
      %v2626 = vld [vmem:[%s4 + $0x2fc] sm:$0xf]
      %v2627 = vld [vmem:[%s4 + $0x300] sm:$0xf]
      %v2628 = vld [vmem:[%s4 + $0x304] sm:$0xf]
      %v2629 = vld [vmem:[%s4 + $0x308] sm:$0xf]
      %v2630 = vld [vmem:[%s4 + $0x30c] sm:$0xf]
      %v2631 = vld [vmem:[%s4 + $0x310] sm:$0xf]
      %v2632 = vld [vmem:[%s4 + $0x314] sm:$0xf]
      %v2633 = vld [vmem:[%s4 + $0x318] sm:$0xf]
      %v2634 = vld [vmem:[%s4 + $0x31c] sm:$0xf]
      %v2635 = vld [vmem:[%s4 + $0x320] sm:$0xf]
      %v2636 = vld [vmem:[%s4 + $0x324] sm:$0xf]
      %v2637 = vld [vmem:[%s4 + $0x328] sm:$0xf]
      %v2638 = vld [vmem:[%s4 + $0x32c] sm:$0xf]
      %v2639 = vld [vmem:[%s4 + $0x330] sm:$0xf]
      %v2640 = vld [vmem:[%s4 + $0x334] sm:$0xf]
      %v2641 = vld [vmem:[%s4 + $0x338] sm:$0xf]
      %v2642 = vld [vmem:[%s4 + $0x33c] sm:$0xf]
      %v2643 = vld [vmem:[%s4 + $0x340] sm:$0xf]
      %v2644 = vld [vmem:[%s4 + $0x344] sm:$0xf]
      %v2645 = vld [vmem:[%s4 + $0x348] sm:$0xf]
      %v2646 = vld [vmem:[%s4 + $0x34c] sm:$0xf]
      %v2647 = vld [vmem:[%s4 + $0x350] sm:$0xf]
      %v2648 = vld [vmem:[%s4 + $0x354] sm:$0xf]
      %v2649 = vld [vmem:[%s4 + $0x358] sm:$0xf]
      %v2650 = vld [vmem:[%s4 + $0x35c] sm:$0xf]
      %v2651 = vld [vmem:[%s4 + $0x360] sm:$0xf]
      %v2652 = vld [vmem:[%s4 + $0x364] sm:$0xf]
      %v2653 = vld [vmem:[%s4 + $0x368] sm:$0xf]
      %v2654 = vld [vmem:[%s4 + $0x36c] sm:$0xf]
      %v2655 = vld [vmem:[%s4 + $0x370] sm:$0xf]
      %v2656 = vld [vmem:[%s4 + $0x374] sm:$0xf]
      %v2657 = vld [vmem:[%s4 + $0x378] sm:$0xf]
      %v2658 = vld [vmem:[%s4 + $0x37c] sm:$0xf]
      %v2659 = vld [vmem:[%s4 + $0x380] sm:$0xf]
      %v2660 = vld [vmem:[%s4 + $0x384] sm:$0xf]
      %v2661 = vld [vmem:[%s4 + $0x388] sm:$0xf]
      %v2662 = vld [vmem:[%s4 + $0x38c] sm:$0xf]
      %v2663 = vld [vmem:[%s4 + $0x390] sm:$0xf]
      %v2664 = vld [vmem:[%s4 + $0x394] sm:$0xf]
      %v2665 = vld [vmem:[%s4 + $0x398] sm:$0xf]
      %v2666 = vld [vmem:[%s4 + $0x39c] sm:$0xf]
      %v2667 = vld [vmem:[%s4 + $0x3a0] sm:$0xf]
      %v2668 = vld [vmem:[%s4 + $0x3a4] sm:$0xf]
      %v2669 = vld [vmem:[%s4 + $0x3a8] sm:$0xf]
      %v2670 = vld [vmem:[%s4 + $0x3ac] sm:$0xf]
      %v2671 = vld [vmem:[%s4 + $0x3b0] sm:$0xf]
      %v2672 = vld [vmem:[%s4 + $0x3b4] sm:$0xf]
      %v2673 = vld [vmem:[%s4 + $0x3b8] sm:$0xf]
      %v2674 = vld [vmem:[%s4 + $0x3bc] sm:$0xf]
      %v2675 = vld [vmem:[%s9 + $0x2] sm:$0x1]
      %v2676 = vlaneseq
      %v2677 = vshrl.u32 %v2676, 7
      %v2678 = vsub.s32 0, %v2677
      %v2679 = vrot.slane %v2675, %v2678
      %v2696 = vunpack.c.l.b16 %v2419
      %v2697 = vunpack.c.h.b16 %v2419
      %v2698 = vunpack.c.l.b16 %v2420
      %v2699 = vunpack.c.h.b16 %v2420
      %v2700 = vunpack.c.l.b16 %v2421
      %v2701 = vunpack.c.h.b16 %v2421
      %v2702 = vunpack.c.l.b16 %v2422
      %v2703 = vunpack.c.h.b16 %v2422
      %v2704 = vunpack.c.l.b16 %v2423
      %v2705 = vunpack.c.h.b16 %v2423
      %v2706 = vunpack.c.l.b16 %v2424
      %v2707 = vunpack.c.h.b16 %v2424
      %v2708 = vunpack.c.l.b16 %v2425
      %v2709 = vunpack.c.h.b16 %v2425
      %v2710 = vunpack.c.l.b16 %v2426
      %v2711 = vunpack.c.l.b16 %v2427
      %v2712 = vunpack.c.h.b16 %v2427
      %v2713 = vunpack.c.l.b16 %v2428
      %v2714 = vunpack.c.h.b16 %v2428
      %v2715 = vunpack.c.l.b16 %v2429
      %v2716 = vunpack.c.h.b16 %v2429
      %v2717 = vunpack.c.l.b16 %v2430
      %v2718 = vunpack.c.h.b16 %v2430
      %v2719 = vunpack.c.l.b16 %v2431
      %v2720 = vunpack.c.h.b16 %v2431
      %v2721 = vunpack.c.l.b16 %v2432
      %v2722 = vunpack.c.h.b16 %v2432
      %v2723 = vunpack.c.l.b16 %v2433
      %v2724 = vunpack.c.h.b16 %v2433
      %v2725 = vunpack.c.l.b16 %v2434
      %v2726 = vpack.c.b16 %v2711, %v2696
      %v2727 = vpack.c.b16 %v2712, %v2697
      %v2728 = vpack.c.b16 %v2713, %v2698
      %v2729 = vpack.c.b16 %v2714, %v2699
      %v2730 = vpack.c.b16 %v2715, %v2700
      %v2731 = vpack.c.b16 %v2716, %v2701
      %v2732 = vpack.c.b16 %v2717, %v2702
      %v2733 = vpack.c.b16 %v2718, %v2703
      %v2734 = vpack.c.b16 %v2719, %v2704
      %v2735 = vpack.c.b16 %v2720, %v2705
      %v2736 = vpack.c.b16 %v2721, %v2706
      %v2737 = vpack.c.b16 %v2722, %v2707
      %v2738 = vpack.c.b16 %v2723, %v2708
      %v2739 = vpack.c.b16 %v2724, %v2709
      %v2740 = vpack.c.b16 %v2725, %v2710
      %v2996 = vunpack.c.l.b16 %v2435
      %v2997 = vunpack.c.l.b16 %v2436
      %v2998 = vunpack.c.l.b16 %v2437
      %v2999 = vunpack.c.l.b16 %v2438
      %v3000 = vunpack.c.l.b16 %v2439
      %v3001 = vunpack.c.l.b16 %v2440
      %v3002 = vunpack.c.l.b16 %v2441
      %v3003 = vunpack.c.l.b16 %v2442
      %v3004 = vunpack.c.l.b16 %v2443
      %v3005 = vunpack.c.l.b16 %v2444
      %v3006 = vunpack.c.l.b16 %v2445
      %v3007 = vunpack.c.l.b16 %v2446
      %v3008 = vunpack.c.l.b16 %v2447
      %v3009 = vunpack.c.l.b16 %v2448
      %v3010 = vunpack.c.l.b16 %v2449
      %v3011 = vunpack.c.l.b16 %v2450
      %v3012 = vunpack.c.l.b16 %v2451
      %v3013 = vunpack.c.l.b16 %v2452
      %v3014 = vunpack.c.l.b16 %v2453
      %v3015 = vunpack.c.l.b16 %v2454
      %v3016 = vunpack.c.l.b16 %v2455
      %v3017 = vunpack.c.l.b16 %v2456
      %v3018 = vunpack.c.l.b16 %v2457
      %v3019 = vunpack.c.l.b16 %v2458
      %v3020 = vunpack.c.l.b16 %v2459
      %v3021 = vunpack.c.l.b16 %v2460
      %v3022 = vunpack.c.l.b16 %v2461
      %v3023 = vunpack.c.l.b16 %v2462
      %v3024 = vunpack.c.l.b16 %v2463
      %v3025 = vunpack.c.l.b16 %v2464
      %v3026 = vunpack.c.l.b16 %v2465
      %v3027 = vunpack.c.l.b16 %v2466
      %v3028 = vunpack.c.l.b16 %v2467
      %v3029 = vunpack.c.l.b16 %v2468
      %v3030 = vunpack.c.l.b16 %v2469
      %v3031 = vunpack.c.l.b16 %v2470
      %v3032 = vunpack.c.l.b16 %v2471
      %v3033 = vunpack.c.l.b16 %v2472
      %v3034 = vunpack.c.l.b16 %v2473
      %v3035 = vunpack.c.l.b16 %v2474
      %v3036 = vunpack.c.l.b16 %v2475
      %v3037 = vunpack.c.l.b16 %v2476
      %v3038 = vunpack.c.l.b16 %v2477
      %v3039 = vunpack.c.l.b16 %v2478
      %v3040 = vunpack.c.l.b16 %v2479
      %v3041 = vunpack.c.l.b16 %v2480
      %v3042 = vunpack.c.l.b16 %v2481
      %v3043 = vunpack.c.l.b16 %v2482
      %v3044 = vunpack.c.l.b16 %v2483
      %v3045 = vunpack.c.l.b16 %v2484
      %v3046 = vunpack.c.l.b16 %v2485
      %v3047 = vunpack.c.l.b16 %v2486
      %v3048 = vunpack.c.l.b16 %v2487
      %v3049 = vunpack.c.l.b16 %v2488
      %v3050 = vunpack.c.l.b16 %v2489
      %v3051 = vunpack.c.l.b16 %v2490
      %v3052 = vunpack.c.l.b16 %v2491
      %v3053 = vunpack.c.l.b16 %v2492
      %v3054 = vunpack.c.l.b16 %v2493
      %v3055 = vunpack.c.l.b16 %v2494
      %v3056 = vunpack.c.l.b16 %v2495
      %v3057 = vunpack.c.l.b16 %v2496
      %v3058 = vunpack.c.l.b16 %v2497
      %v3059 = vunpack.c.l.b16 %v2498
      %v3060 = vunpack.c.l.b16 %v2499
      %v3061 = vunpack.c.l.b16 %v2500
      %v3062 = vunpack.c.l.b16 %v2501
      %v3063 = vunpack.c.l.b16 %v2502
      %v3064 = vunpack.c.l.b16 %v2503
      %v3065 = vunpack.c.l.b16 %v2504
      %v3066 = vunpack.c.l.b16 %v2505
      %v3067 = vunpack.c.l.b16 %v2506
      %v3068 = vunpack.c.l.b16 %v2507
      %v3069 = vunpack.c.l.b16 %v2508
      %v3070 = vunpack.c.l.b16 %v2509
      %v3071 = vunpack.c.l.b16 %v2510
      %v3072 = vunpack.c.l.b16 %v2511
      %v3073 = vunpack.c.l.b16 %v2512
      %v3074 = vunpack.c.l.b16 %v2513
      %v3075 = vunpack.c.l.b16 %v2514
      %v3076 = vunpack.c.l.b16 %v2515
      %v3077 = vunpack.c.l.b16 %v2516
      %v3078 = vunpack.c.l.b16 %v2517
      %v3079 = vunpack.c.l.b16 %v2518
      %v3080 = vunpack.c.l.b16 %v2519
      %v3081 = vunpack.c.l.b16 %v2520
      %v3082 = vunpack.c.l.b16 %v2521
      %v3083 = vunpack.c.l.b16 %v2522
      %v3084 = vunpack.c.l.b16 %v2523
      %v3085 = vunpack.c.l.b16 %v2524
      %v3086 = vunpack.c.l.b16 %v2525
      %v3087 = vunpack.c.l.b16 %v2526
      %v3088 = vunpack.c.l.b16 %v2527
      %v3089 = vunpack.c.l.b16 %v2528
      %v3090 = vunpack.c.l.b16 %v2529
      %v3091 = vunpack.c.l.b16 %v2530
      %v3092 = vunpack.c.l.b16 %v2531
      %v3093 = vunpack.c.l.b16 %v2532
      %v3094 = vunpack.c.l.b16 %v2533
      %v3095 = vunpack.c.l.b16 %v2534
      %v3096 = vunpack.c.l.b16 %v2535
      %v3097 = vunpack.c.l.b16 %v2536
      %v3098 = vunpack.c.l.b16 %v2537
      %v3099 = vunpack.c.l.b16 %v2538
      %v3100 = vunpack.c.l.b16 %v2539
      %v3101 = vunpack.c.l.b16 %v2540
      %v3102 = vunpack.c.l.b16 %v2541
      %v3103 = vunpack.c.l.b16 %v2542
      %v3104 = vunpack.c.l.b16 %v2543
      %v3105 = vunpack.c.l.b16 %v2544
      %v3106 = vunpack.c.l.b16 %v2545
      %v3107 = vunpack.c.l.b16 %v2546
      %v3108 = vunpack.c.l.b16 %v2547
      %v3109 = vunpack.c.l.b16 %v2548
      %v3110 = vunpack.c.l.b16 %v2549
      %v3111 = vunpack.c.l.b16 %v2550
      %v3112 = vunpack.c.l.b16 %v2551
      %v3113 = vunpack.c.l.b16 %v2552
      %v3114 = vunpack.c.l.b16 %v2553
      %v3115 = vunpack.c.l.b16 %v2554
      %v3116 = vunpack.c.l.b16 %v2555
      %v3117 = vunpack.c.l.b16 %v2556
      %v3118 = vunpack.c.l.b16 %v2557
      %v3119 = vunpack.c.l.b16 %v2558
      %v3120 = vunpack.c.l.b16 %v2559
      %v3121 = vunpack.c.l.b16 %v2560
      %v3122 = vunpack.c.l.b16 %v2561
      %v3123 = vunpack.c.l.b16 %v2562
      %v3124 = vunpack.c.l.b16 %v2563
      %v3125 = vunpack.c.l.b16 %v2564
      %v3126 = vunpack.c.l.b16 %v2565
      %v3127 = vunpack.c.l.b16 %v2566
      %v3128 = vunpack.c.l.b16 %v2567
      %v3129 = vunpack.c.l.b16 %v2568
      %v3130 = vunpack.c.l.b16 %v2569
      %v3131 = vunpack.c.l.b16 %v2570
      %v3132 = vunpack.c.l.b16 %v2571
      %v3133 = vunpack.c.l.b16 %v2572
      %v3134 = vunpack.c.l.b16 %v2573
      %v3135 = vunpack.c.l.b16 %v2574
      %v3136 = vunpack.c.l.b16 %v2575
      %v3137 = vunpack.c.l.b16 %v2576
      %v3138 = vunpack.c.l.b16 %v2577
      %v3139 = vunpack.c.l.b16 %v2578
      %v3140 = vunpack.c.l.b16 %v2579
      %v3141 = vunpack.c.l.b16 %v2580
      %v3142 = vunpack.c.l.b16 %v2581
      %v3143 = vunpack.c.l.b16 %v2582
      %v3144 = vunpack.c.l.b16 %v2583
      %v3145 = vunpack.c.l.b16 %v2584
      %v3146 = vunpack.c.l.b16 %v2585
      %v3147 = vunpack.c.l.b16 %v2586
      %v3148 = vunpack.c.l.b16 %v2587
      %v3149 = vunpack.c.l.b16 %v2588
      %v3150 = vunpack.c.l.b16 %v2589
      %v3151 = vunpack.c.l.b16 %v2590
      %v3152 = vunpack.c.l.b16 %v2591
      %v3153 = vunpack.c.l.b16 %v2592
      %v3154 = vunpack.c.l.b16 %v2593
      %v3155 = vunpack.c.l.b16 %v2594
      %v3156 = vunpack.c.l.b16 %v2595
      %v3157 = vunpack.c.l.b16 %v2596
      %v3158 = vunpack.c.l.b16 %v2597
      %v3159 = vunpack.c.l.b16 %v2598
      %v3160 = vunpack.c.l.b16 %v2599
      %v3161 = vunpack.c.l.b16 %v2600
      %v3162 = vunpack.c.l.b16 %v2601
      %v3163 = vunpack.c.l.b16 %v2602
      %v3164 = vunpack.c.l.b16 %v2603
      %v3165 = vunpack.c.l.b16 %v2604
      %v3166 = vunpack.c.l.b16 %v2605
      %v3167 = vunpack.c.l.b16 %v2606
      %v3168 = vunpack.c.l.b16 %v2607
      %v3169 = vunpack.c.l.b16 %v2608
      %v3170 = vunpack.c.l.b16 %v2609
      %v3171 = vunpack.c.l.b16 %v2610
      %v3172 = vunpack.c.l.b16 %v2611
      %v3173 = vunpack.c.l.b16 %v2612
      %v3174 = vunpack.c.l.b16 %v2613
      %v3175 = vunpack.c.l.b16 %v2614
      %v3176 = vunpack.c.l.b16 %v2615
      %v3177 = vunpack.c.l.b16 %v2616
      %v3178 = vunpack.c.l.b16 %v2617
      %v3179 = vunpack.c.l.b16 %v2618
      %v3180 = vunpack.c.l.b16 %v2619
      %v3181 = vunpack.c.l.b16 %v2620
      %v3182 = vunpack.c.l.b16 %v2621
      %v3183 = vunpack.c.l.b16 %v2622
      %v3184 = vunpack.c.l.b16 %v2623
      %v3185 = vunpack.c.l.b16 %v2624
      %v3186 = vunpack.c.l.b16 %v2625
      %v3187 = vunpack.c.l.b16 %v2626
      %v3188 = vunpack.c.l.b16 %v2627
      %v3189 = vunpack.c.l.b16 %v2628
      %v3190 = vunpack.c.l.b16 %v2629
      %v3191 = vunpack.c.l.b16 %v2630
      %v3192 = vunpack.c.l.b16 %v2631
      %v3193 = vunpack.c.l.b16 %v2632
      %v3194 = vunpack.c.l.b16 %v2633
      %v3195 = vunpack.c.l.b16 %v2634
      %v3196 = vunpack.c.l.b16 %v2635
      %v3197 = vunpack.c.l.b16 %v2636
      %v3198 = vunpack.c.l.b16 %v2637
      %v3199 = vunpack.c.l.b16 %v2638
      %v3200 = vunpack.c.l.b16 %v2639
      %v3201 = vunpack.c.l.b16 %v2640
      %v3202 = vunpack.c.l.b16 %v2641
      %v3203 = vunpack.c.l.b16 %v2642
      %v3204 = vunpack.c.l.b16 %v2643
      %v3205 = vunpack.c.l.b16 %v2644
      %v3206 = vunpack.c.l.b16 %v2645
      %v3207 = vunpack.c.l.b16 %v2646
      %v3208 = vunpack.c.l.b16 %v2647
      %v3209 = vunpack.c.l.b16 %v2648
      %v3210 = vunpack.c.l.b16 %v2649
      %v3211 = vunpack.c.l.b16 %v2650
      %v3212 = vunpack.c.l.b16 %v2651
      %v3213 = vunpack.c.l.b16 %v2652
      %v3214 = vunpack.c.l.b16 %v2653
      %v3215 = vunpack.c.l.b16 %v2654
      %v3216 = vunpack.c.l.b16 %v2655
      %v3217 = vunpack.c.l.b16 %v2656
      %v3218 = vunpack.c.l.b16 %v2657
      %v3219 = vunpack.c.l.b16 %v2658
      %v3220 = vunpack.c.l.b16 %v2659
      %v3221 = vunpack.c.l.b16 %v2660
      %v3222 = vunpack.c.l.b16 %v2661
      %v3223 = vunpack.c.l.b16 %v2662
      %v3224 = vunpack.c.l.b16 %v2663
      %v3225 = vunpack.c.l.b16 %v2664
      %v3226 = vunpack.c.l.b16 %v2665
      %v3227 = vunpack.c.l.b16 %v2666
      %v3228 = vunpack.c.l.b16 %v2667
      %v3229 = vunpack.c.l.b16 %v2668
      %v3230 = vunpack.c.l.b16 %v2669
      %v3231 = vunpack.c.l.b16 %v2670
      %v3232 = vunpack.c.l.b16 %v2671
      %v3233 = vunpack.c.l.b16 %v2672
      %v3234 = vunpack.c.l.b16 %v2673
      %v3235 = vunpack.c.l.b16 %v2674
      %v3236 = vpack.c.b16 %v2997, %v2996
      %v3237 = vpack.c.b16 %v2999, %v2998
      %v3238 = vpack.c.b16 %v3001, %v3000
      %v3239 = vpack.c.b16 %v3003, %v3002
      %v3240 = vpack.c.b16 %v3005, %v3004
      %v3241 = vpack.c.b16 %v3007, %v3006
      %v3242 = vpack.c.b16 %v3009, %v3008
      %v3243 = vpack.c.b16 %v3011, %v3010
      %v3244 = vpack.c.b16 %v3013, %v3012
      %v3245 = vpack.c.b16 %v3015, %v3014
      %v3246 = vpack.c.b16 %v3017, %v3016
      %v3247 = vpack.c.b16 %v3019, %v3018
      %v3248 = vpack.c.b16 %v3021, %v3020
      %v3249 = vpack.c.b16 %v3023, %v3022
      %v3250 = vpack.c.b16 %v3025, %v3024
      %v3251 = vpack.c.b16 %v3027, %v3026
      %v3252 = vpack.c.b16 %v3029, %v3028
      %v3253 = vpack.c.b16 %v3031, %v3030
      %v3254 = vpack.c.b16 %v3033, %v3032
      %v3255 = vpack.c.b16 %v3035, %v3034
      %v3256 = vpack.c.b16 %v3037, %v3036
      %v3257 = vpack.c.b16 %v3039, %v3038
      %v3258 = vpack.c.b16 %v3041, %v3040
      %v3259 = vpack.c.b16 %v3043, %v3042
      %v3260 = vpack.c.b16 %v3045, %v3044
      %v3261 = vpack.c.b16 %v3047, %v3046
      %v3262 = vpack.c.b16 %v3049, %v3048
      %v3263 = vpack.c.b16 %v3051, %v3050
      %v3264 = vpack.c.b16 %v3053, %v3052
      %v3265 = vpack.c.b16 %v3055, %v3054
      %v3266 = vpack.c.b16 %v3057, %v3056
      %v3267 = vpack.c.b16 %v3059, %v3058
      %v3268 = vpack.c.b16 %v3061, %v3060
      %v3269 = vpack.c.b16 %v3063, %v3062
      %v3270 = vpack.c.b16 %v3065, %v3064
      %v3271 = vpack.c.b16 %v3067, %v3066
      %v3272 = vpack.c.b16 %v3069, %v3068
      %v3273 = vpack.c.b16 %v3071, %v3070
      %v3274 = vpack.c.b16 %v3073, %v3072
      %v3275 = vpack.c.b16 %v3075, %v3074
      %v3276 = vpack.c.b16 %v3077, %v3076
      %v3277 = vpack.c.b16 %v3079, %v3078
      %v3278 = vpack.c.b16 %v3081, %v3080
      %v3279 = vpack.c.b16 %v3083, %v3082
      %v3280 = vpack.c.b16 %v3085, %v3084
      %v3281 = vpack.c.b16 %v3087, %v3086
      %v3282 = vpack.c.b16 %v3089, %v3088
      %v3283 = vpack.c.b16 %v3091, %v3090
      %v3284 = vpack.c.b16 %v3093, %v3092
      %v3285 = vpack.c.b16 %v3095, %v3094
      %v3286 = vpack.c.b16 %v3097, %v3096
      %v3287 = vpack.c.b16 %v3099, %v3098
      %v3288 = vpack.c.b16 %v3101, %v3100
      %v3289 = vpack.c.b16 %v3103, %v3102
      %v3290 = vpack.c.b16 %v3105, %v3104
      %v3291 = vpack.c.b16 %v3107, %v3106
      %v3292 = vpack.c.b16 %v3109, %v3108
      %v3293 = vpack.c.b16 %v3111, %v3110
      %v3294 = vpack.c.b16 %v3113, %v3112
      %v3295 = vpack.c.b16 %v3115, %v3114
      %v3296 = vpack.c.b16 %v3117, %v3116
      %v3297 = vpack.c.b16 %v3119, %v3118
      %v3298 = vpack.c.b16 %v3121, %v3120
      %v3299 = vpack.c.b16 %v3123, %v3122
      %v3300 = vpack.c.b16 %v3125, %v3124
      %v3301 = vpack.c.b16 %v3127, %v3126
      %v3302 = vpack.c.b16 %v3129, %v3128
      %v3303 = vpack.c.b16 %v3131, %v3130
      %v3304 = vpack.c.b16 %v3133, %v3132
      %v3305 = vpack.c.b16 %v3135, %v3134
      %v3306 = vpack.c.b16 %v3137, %v3136
      %v3307 = vpack.c.b16 %v3139, %v3138
      %v3308 = vpack.c.b16 %v3141, %v3140
      %v3309 = vpack.c.b16 %v3143, %v3142
      %v3310 = vpack.c.b16 %v3145, %v3144
      %v3311 = vpack.c.b16 %v3147, %v3146
      %v3312 = vpack.c.b16 %v3149, %v3148
      %v3313 = vpack.c.b16 %v3151, %v3150
      %v3314 = vpack.c.b16 %v3153, %v3152
      %v3315 = vpack.c.b16 %v3155, %v3154
      %v3316 = vpack.c.b16 %v3157, %v3156
      %v3317 = vpack.c.b16 %v3159, %v3158
      %v3318 = vpack.c.b16 %v3161, %v3160
      %v3319 = vpack.c.b16 %v3163, %v3162
      %v3320 = vpack.c.b16 %v3165, %v3164
      %v3321 = vpack.c.b16 %v3167, %v3166
      %v3322 = vpack.c.b16 %v3169, %v3168
      %v3323 = vpack.c.b16 %v3171, %v3170
      %v3324 = vpack.c.b16 %v3173, %v3172
      %v3325 = vpack.c.b16 %v3175, %v3174
      %v3326 = vpack.c.b16 %v3177, %v3176
      %v3327 = vpack.c.b16 %v3179, %v3178
      %v3328 = vpack.c.b16 %v3181, %v3180
      %v3329 = vpack.c.b16 %v3183, %v3182
      %v3330 = vpack.c.b16 %v3185, %v3184
      %v3331 = vpack.c.b16 %v3187, %v3186
      %v3332 = vpack.c.b16 %v3189, %v3188
      %v3333 = vpack.c.b16 %v3191, %v3190
      %v3334 = vpack.c.b16 %v3193, %v3192
      %v3335 = vpack.c.b16 %v3195, %v3194
      %v3336 = vpack.c.b16 %v3197, %v3196
      %v3337 = vpack.c.b16 %v3199, %v3198
      %v3338 = vpack.c.b16 %v3201, %v3200
      %v3339 = vpack.c.b16 %v3203, %v3202
      %v3340 = vpack.c.b16 %v3205, %v3204
      %v3341 = vpack.c.b16 %v3207, %v3206
      %v3342 = vpack.c.b16 %v3209, %v3208
      %v3343 = vpack.c.b16 %v3211, %v3210
      %v3344 = vpack.c.b16 %v3213, %v3212
      %v3345 = vpack.c.b16 %v3215, %v3214
      %v3346 = vpack.c.b16 %v3217, %v3216
      %v3347 = vpack.c.b16 %v3219, %v3218
      %v3348 = vpack.c.b16 %v3221, %v3220
      %v3349 = vpack.c.b16 %v3223, %v3222
      %v3350 = vpack.c.b16 %v3225, %v3224
      %v3351 = vpack.c.b16 %v3227, %v3226
      %v3352 = vpack.c.b16 %v3229, %v3228
      %v3353 = vpack.c.b16 %v3231, %v3230
      %v3354 = vpack.c.b16 %v3233, %v3232
      %v3355 = vpack.c.b16 %v3235, %v3234
      %3476 = vmatprep.subr.bf16.mxu0 0
      %3477 = vmatpush1.bf16.msra.mxu0 %v3236
      %3478 = vmatprep.subr.bf16.mxu0 0
      %3479 = vmatpush1.bf16.msra.mxu0 %v3237
      %3480 = vmatprep.subr.bf16.mxu0 0
      %3481 = vmatpush1.bf16.msra.mxu0 %v3238
      %3482 = vmatprep.subr.bf16.mxu0 0
      %3483 = vmatpush1.bf16.msra.mxu0 %v3239
      %3484 = vmatprep.subr.bf16.mxu0 0
      %3485 = vmatpush1.bf16.msra.mxu0 %v3240
      %3486 = vmatprep.subr.bf16.mxu0 0
      %3487 = vmatpush1.bf16.msra.mxu0 %v3241
      %3488 = vmatprep.subr.bf16.mxu0 0
      %3489 = vmatpush1.bf16.msra.mxu0 %v3242
      %3490 = vmatprep.subr.bf16.mxu0 0
      %3491 = vmatpush1.bf16.msra.mxu0 %v3243
      %3492 = vmatprep.subr.bf16.mxu0 0
      %3493 = vmatpush1.bf16.msra.mxu0 %v3244
      %3494 = vmatprep.subr.bf16.mxu0 0
      %3495 = vmatpush1.bf16.msra.mxu0 %v3245
      %3496 = vmatprep.subr.bf16.mxu0 0
      %3497 = vmatpush1.bf16.msra.mxu0 %v3246
      %3498 = vmatprep.subr.bf16.mxu0 0
      %3499 = vmatpush1.bf16.msra.mxu0 %v3247
      %3500 = vmatprep.subr.bf16.mxu0 0
      %3501 = vmatpush1.bf16.msra.mxu0 %v3248
      %3502 = vmatprep.subr.bf16.mxu0 0
      %3503 = vmatpush1.bf16.msra.mxu0 %v3249
      %3504 = vmatprep.subr.bf16.mxu0 0
      %3505 = vmatpush1.bf16.msra.mxu0 %v3250
      %3506 = vmatprep.subr.bf16.mxu0 0
      %3507 = vmatpush1.bf16.msra.mxu0 %v3251
      %3508 = vmatprep.mubr.bf16.mxu0 %v2727
      %3509 = vmatmul.mubr.bf16.gmra.mrb[0].mxu0 %v2726
      %v3510 = vpop.f32.mrb[0].mxu0
      %v3511 = vadd.f32 %v2679, %v3510
      %v3512 = vpop.f32.mrb[0].mxu0
      %v3513 = vpop.f32.mrb[0].mxu0
      %v3514 = vadd.f32 %v2679, %v3513
      %v3515 = vpop.f32.mrb[0].mxu0
      %3516 = vdwg.mxu0
      %3517 = vmatprep.subr.bf16.mxu0 0
      %3518 = vmatpush1.bf16.msra.mxu0 %v3252
      %3519 = vmatprep.subr.bf16.mxu0 0
      %3520 = vmatpush1.bf16.msra.mxu0 %v3253
      %3521 = vmatprep.subr.bf16.mxu0 0
      %3522 = vmatpush1.bf16.msra.mxu0 %v3254
      %3523 = vmatprep.subr.bf16.mxu0 0
      %3524 = vmatpush1.bf16.msra.mxu0 %v3255
      %3525 = vmatprep.subr.bf16.mxu0 0
      %3526 = vmatpush1.bf16.msra.mxu0 %v3256
      %3527 = vmatprep.subr.bf16.mxu0 0
      %3528 = vmatpush1.bf16.msra.mxu0 %v3257
      %3529 = vmatprep.subr.bf16.mxu0 0
      %3530 = vmatpush1.bf16.msra.mxu0 %v3258
      %3531 = vmatprep.subr.bf16.mxu0 0
      %3532 = vmatpush1.bf16.msra.mxu0 %v3259
      %3533 = vmatprep.subr.bf16.mxu0 0
      %3534 = vmatpush1.bf16.msra.mxu0 %v3260
      %3535 = vmatprep.subr.bf16.mxu0 0
      %3536 = vmatpush1.bf16.msra.mxu0 %v3261
      %3537 = vmatprep.subr.bf16.mxu0 0
      %3538 = vmatpush1.bf16.msra.mxu0 %v3262
      %3539 = vmatprep.subr.bf16.mxu0 0
      %3540 = vmatpush1.bf16.msra.mxu0 %v3263
      %3541 = vmatprep.subr.bf16.mxu0 0
      %3542 = vmatpush1.bf16.msra.mxu0 %v3264
      %3543 = vmatprep.subr.bf16.mxu0 0
      %3544 = vmatpush1.bf16.msra.mxu0 %v3265
      %3545 = vmatprep.subr.bf16.mxu0 0
      %3546 = vmatpush1.bf16.msra.mxu0 %v3266
      %3547 = vmatprep.subr.bf16.mxu0 0
      %3548 = vmatpush1.bf16.msra.mxu0 %v3267
      %3549 = vmatprep.mubr.bf16.mxu0 %v2729
      %3550 = vmatmul.mubr.bf16.gmra.mrb[0].mxu0 %v2728
      %v3551 = vpop.f32.mrb[0].mxu0
      %v3552 = vadd.f32 %v3511, %v3551
      %v3553 = vpop.f32.mrb[0].mxu0
      %v3554 = vpop.f32.mrb[0].mxu0
      %v3555 = vadd.f32 %v3514, %v3554
      %v3556 = vpop.f32.mrb[0].mxu0
      %3557 = vdwg.mxu0
      %3558 = vmatprep.subr.bf16.mxu0 0
      %3559 = vmatpush1.bf16.msra.mxu0 %v3268
      %3560 = vmatprep.subr.bf16.mxu0 0
      %3561 = vmatpush1.bf16.msra.mxu0 %v3269
      %3562 = vmatprep.subr.bf16.mxu0 0
      %3563 = vmatpush1.bf16.msra.mxu0 %v3270
      %3564 = vmatprep.subr.bf16.mxu0 0
      %3565 = vmatpush1.bf16.msra.mxu0 %v3271
      %3566 = vmatprep.subr.bf16.mxu0 0
      %3567 = vmatpush1.bf16.msra.mxu0 %v3272
      %3568 = vmatprep.subr.bf16.mxu0 0
      %3569 = vmatpush1.bf16.msra.mxu0 %v3273
      %3570 = vmatprep.subr.bf16.mxu0 0
      %3571 = vmatpush1.bf16.msra.mxu0 %v3274
      %3572 = vmatprep.subr.bf16.mxu0 0
      %3573 = vmatpush1.bf16.msra.mxu0 %v3275
      %3574 = vmatprep.subr.bf16.mxu0 0
      %3575 = vmatpush1.bf16.msra.mxu0 %v3276
      %3576 = vmatprep.subr.bf16.mxu0 0
      %3577 = vmatpush1.bf16.msra.mxu0 %v3277
      %3578 = vmatprep.subr.bf16.mxu0 0
      %3579 = vmatpush1.bf16.msra.mxu0 %v3278
      %3580 = vmatprep.subr.bf16.mxu0 0
      %3581 = vmatpush1.bf16.msra.mxu0 %v3279
      %3582 = vmatprep.subr.bf16.mxu0 0
      %3583 = vmatpush1.bf16.msra.mxu0 %v3280
      %3584 = vmatprep.subr.bf16.mxu0 0
      %3585 = vmatpush1.bf16.msra.mxu0 %v3281
      %3586 = vmatprep.subr.bf16.mxu0 0
      %3587 = vmatpush1.bf16.msra.mxu0 %v3282
      %3588 = vmatprep.subr.bf16.mxu0 0
      %3589 = vmatpush1.bf16.msra.mxu0 %v3283
      %3590 = vmatprep.mubr.bf16.mxu0 %v2731
      %3591 = vmatmul.mubr.bf16.gmra.mrb[0].mxu0 %v2730
      %v3592 = vpop.f32.mrb[0].mxu0
      %v3593 = vadd.f32 %v3552, %v3592
      %v3594 = vpop.f32.mrb[0].mxu0
      %v3595 = vpop.f32.mrb[0].mxu0
      %v3596 = vadd.f32 %v3555, %v3595
      %v3597 = vpop.f32.mrb[0].mxu0
      %3598 = vdwg.mxu0
      %3599 = vmatprep.subr.bf16.mxu0 0
      %3600 = vmatpush1.bf16.msra.mxu0 %v3284
      %3601 = vmatprep.subr.bf16.mxu0 0
      %3602 = vmatpush1.bf16.msra.mxu0 %v3285
      %3603 = vmatprep.subr.bf16.mxu0 0
      %3604 = vmatpush1.bf16.msra.mxu0 %v3286
      %3605 = vmatprep.subr.bf16.mxu0 0
      %3606 = vmatpush1.bf16.msra.mxu0 %v3287
      %3607 = vmatprep.subr.bf16.mxu0 0
      %3608 = vmatpush1.bf16.msra.mxu0 %v3288
      %3609 = vmatprep.subr.bf16.mxu0 0
      %3610 = vmatpush1.bf16.msra.mxu0 %v3289
      %3611 = vmatprep.subr.bf16.mxu0 0
      %3612 = vmatpush1.bf16.msra.mxu0 %v3290
      %3613 = vmatprep.subr.bf16.mxu0 0
      %3614 = vmatpush1.bf16.msra.mxu0 %v3291
      %3615 = vmatprep.subr.bf16.mxu0 0
      %3616 = vmatpush1.bf16.msra.mxu0 %v3292
      %3617 = vmatprep.subr.bf16.mxu0 0
      %3618 = vmatpush1.bf16.msra.mxu0 %v3293
      %3619 = vmatprep.subr.bf16.mxu0 0
      %3620 = vmatpush1.bf16.msra.mxu0 %v3294
      %3621 = vmatprep.subr.bf16.mxu0 0
      %3622 = vmatpush1.bf16.msra.mxu0 %v3295
      %3623 = vmatprep.subr.bf16.mxu0 0
      %3624 = vmatpush1.bf16.msra.mxu0 %v3296
      %3625 = vmatprep.subr.bf16.mxu0 0
      %3626 = vmatpush1.bf16.msra.mxu0 %v3297
      %3627 = vmatprep.subr.bf16.mxu0 0
      %3628 = vmatpush1.bf16.msra.mxu0 %v3298
      %3629 = vmatprep.subr.bf16.mxu0 0
      %3630 = vmatpush1.bf16.msra.mxu0 %v3299
      %3631 = vmatprep.mubr.bf16.mxu0 %v2733
      %3632 = vmatmul.mubr.bf16.gmra.mrb[0].mxu0 %v2732
      %v3633 = vpop.f32.mrb[0].mxu0
      %v3634 = vadd.f32 %v3593, %v3633
      %v3635 = vpop.f32.mrb[0].mxu0
      %v3636 = vpop.f32.mrb[0].mxu0
      %v3637 = vadd.f32 %v3596, %v3636
      %v3638 = vpop.f32.mrb[0].mxu0
      %3639 = vdwg.mxu0
      %3640 = vmatprep.subr.bf16.mxu0 0
      %3641 = vmatpush1.bf16.msra.mxu0 %v3300
      %3642 = vmatprep.subr.bf16.mxu0 0
      %3643 = vmatpush1.bf16.msra.mxu0 %v3301
      %3644 = vmatprep.subr.bf16.mxu0 0
      %3645 = vmatpush1.bf16.msra.mxu0 %v3302
      %3646 = vmatprep.subr.bf16.mxu0 0
      %3647 = vmatpush1.bf16.msra.mxu0 %v3303
      %3648 = vmatprep.subr.bf16.mxu0 0
      %3649 = vmatpush1.bf16.msra.mxu0 %v3304
      %3650 = vmatprep.subr.bf16.mxu0 0
      %3651 = vmatpush1.bf16.msra.mxu0 %v3305
      %3652 = vmatprep.subr.bf16.mxu0 0
      %3653 = vmatpush1.bf16.msra.mxu0 %v3306
      %3654 = vmatprep.subr.bf16.mxu0 0
      %3655 = vmatpush1.bf16.msra.mxu0 %v3307
      %3656 = vmatprep.subr.bf16.mxu0 0
      %3657 = vmatpush1.bf16.msra.mxu0 %v3308
      %3658 = vmatprep.subr.bf16.mxu0 0
      %3659 = vmatpush1.bf16.msra.mxu0 %v3309
      %3660 = vmatprep.subr.bf16.mxu0 0
      %3661 = vmatpush1.bf16.msra.mxu0 %v3310
      %3662 = vmatprep.subr.bf16.mxu0 0
      %3663 = vmatpush1.bf16.msra.mxu0 %v3311
      %3664 = vmatprep.subr.bf16.mxu0 0
      %3665 = vmatpush1.bf16.msra.mxu0 %v3312
      %3666 = vmatprep.subr.bf16.mxu0 0
      %3667 = vmatpush1.bf16.msra.mxu0 %v3313
      %3668 = vmatprep.subr.bf16.mxu0 0
      %3669 = vmatpush1.bf16.msra.mxu0 %v3314
      %3670 = vmatprep.subr.bf16.mxu0 0
      %3671 = vmatpush1.bf16.msra.mxu0 %v3315
      %3672 = vmatprep.mubr.bf16.mxu0 %v2735
      %3673 = vmatmul.mubr.bf16.gmra.mrb[0].mxu0 %v2734
      %v3674 = vpop.f32.mrb[0].mxu0
      %v3675 = vadd.f32 %v3634, %v3674
      %v3676 = vpop.f32.mrb[0].mxu0
      %v3677 = vpop.f32.mrb[0].mxu0
      %v3678 = vadd.f32 %v3637, %v3677
      %v3679 = vpop.f32.mrb[0].mxu0
      %3680 = vdwg.mxu0
      %3681 = vmatprep.subr.bf16.mxu0 0
      %3682 = vmatpush1.bf16.msra.mxu0 %v3316
      %3683 = vmatprep.subr.bf16.mxu0 0
      %3684 = vmatpush1.bf16.msra.mxu0 %v3317
      %3685 = vmatprep.subr.bf16.mxu0 0
      %3686 = vmatpush1.bf16.msra.mxu0 %v3318
      %3687 = vmatprep.subr.bf16.mxu0 0
      %3688 = vmatpush1.bf16.msra.mxu0 %v3319
      %3689 = vmatprep.subr.bf16.mxu0 0
      %3690 = vmatpush1.bf16.msra.mxu0 %v3320
      %3691 = vmatprep.subr.bf16.mxu0 0
      %3692 = vmatpush1.bf16.msra.mxu0 %v3321
      %3693 = vmatprep.subr.bf16.mxu0 0
      %3694 = vmatpush1.bf16.msra.mxu0 %v3322
      %3695 = vmatprep.subr.bf16.mxu0 0
      %3696 = vmatpush1.bf16.msra.mxu0 %v3323
      %3697 = vmatprep.subr.bf16.mxu0 0
      %3698 = vmatpush1.bf16.msra.mxu0 %v3324
      %3699 = vmatprep.subr.bf16.mxu0 0
      %3700 = vmatpush1.bf16.msra.mxu0 %v3325
      %3701 = vmatprep.subr.bf16.mxu0 0
      %3702 = vmatpush1.bf16.msra.mxu0 %v3326
      %3703 = vmatprep.subr.bf16.mxu0 0
      %3704 = vmatpush1.bf16.msra.mxu0 %v3327
      %3705 = vmatprep.subr.bf16.mxu0 0
      %3706 = vmatpush1.bf16.msra.mxu0 %v3328
      %3707 = vmatprep.subr.bf16.mxu0 0
      %3708 = vmatpush1.bf16.msra.mxu0 %v3329
      %3709 = vmatprep.subr.bf16.mxu0 0
      %3710 = vmatpush1.bf16.msra.mxu0 %v3330
      %3711 = vmatprep.subr.bf16.mxu0 0
      %3712 = vmatpush1.bf16.msra.mxu0 %v3331
      %3713 = vmatprep.mubr.bf16.mxu0 %v2737
      %3714 = vmatmul.mubr.bf16.gmra.mrb[0].mxu0 %v2736
      %v3715 = vpop.f32.mrb[0].mxu0
      %v3716 = vadd.f32 %v3675, %v3715
      %v3717 = vpop.f32.mrb[0].mxu0
      %v3718 = vpop.f32.mrb[0].mxu0
      %v3719 = vadd.f32 %v3678, %v3718
      %v3720 = vpop.f32.mrb[0].mxu0
      %3721 = vdwg.mxu0
      %3722 = vmatprep.subr.bf16.mxu0 0
      %3723 = vmatpush1.bf16.msra.mxu0 %v3332
      %3724 = vmatprep.subr.bf16.mxu0 0
      %3725 = vmatpush1.bf16.msra.mxu0 %v3333
      %3726 = vmatprep.subr.bf16.mxu0 0
      %3727 = vmatpush1.bf16.msra.mxu0 %v3334
      %3728 = vmatprep.subr.bf16.mxu0 0
      %3729 = vmatpush1.bf16.msra.mxu0 %v3335
      %3730 = vmatprep.subr.bf16.mxu0 0
      %3731 = vmatpush1.bf16.msra.mxu0 %v3336
      %3732 = vmatprep.subr.bf16.mxu0 0
      %3733 = vmatpush1.bf16.msra.mxu0 %v3337
      %3734 = vmatprep.subr.bf16.mxu0 0
      %3735 = vmatpush1.bf16.msra.mxu0 %v3338
      %3736 = vmatprep.subr.bf16.mxu0 0
      %3737 = vmatpush1.bf16.msra.mxu0 %v3339
      %3738 = vmatprep.subr.bf16.mxu0 0
      %3739 = vmatpush1.bf16.msra.mxu0 %v3340
      %3740 = vmatprep.subr.bf16.mxu0 0
      %3741 = vmatpush1.bf16.msra.mxu0 %v3341
      %3742 = vmatprep.subr.bf16.mxu0 0
      %3743 = vmatpush1.bf16.msra.mxu0 %v3342
      %3744 = vmatprep.subr.bf16.mxu0 0
      %3745 = vmatpush1.bf16.msra.mxu0 %v3343
      %3746 = vmatprep.subr.bf16.mxu0 0
      %3747 = vmatpush1.bf16.msra.mxu0 %v3344
      %3748 = vmatprep.subr.bf16.mxu0 0
      %3749 = vmatpush1.bf16.msra.mxu0 %v3345
      %3750 = vmatprep.subr.bf16.mxu0 0
      %3751 = vmatpush1.bf16.msra.mxu0 %v3346
      %3752 = vmatprep.subr.bf16.mxu0 0
      %3753 = vmatpush1.bf16.msra.mxu0 %v3347
      %3754 = vmatprep.mubr.bf16.mxu0 %v2739
      %3755 = vmatmul.mubr.bf16.gmra.mrb[0].mxu0 %v2738
      %v3756 = vpop.f32.mrb[0].mxu0
      %v3757 = vadd.f32 %v3716, %v3756
      %v3758 = vpop.f32.mrb[0].mxu0
      %v3759 = vpop.f32.mrb[0].mxu0
      %v3760 = vadd.f32 %v3719, %v3759
      %v3761 = vpop.f32.mrb[0].mxu0
      %3762 = vdwg.mxu0
      %3763 = vmatprep.subr.bf16.mxu0 0
      %3764 = vmatpush1.bf16.msra.mxu0 %v3348
      %3765 = vmatprep.subr.bf16.mxu0 0
      %3766 = vmatpush1.bf16.msra.mxu0 %v3349
      %3767 = vmatprep.subr.bf16.mxu0 0
      %3768 = vmatpush1.bf16.msra.mxu0 %v3350
      %3769 = vmatprep.subr.bf16.mxu0 0
      %3770 = vmatpush1.bf16.msra.mxu0 %v3351
      %3771 = vmatprep.subr.bf16.mxu0 0
      %3772 = vmatpush1.bf16.msra.mxu0 %v3352
      %3773 = vmatprep.subr.bf16.mxu0 0
      %3774 = vmatpush1.bf16.msra.mxu0 %v3353
      %3775 = vmatprep.subr.bf16.mxu0 0
      %3776 = vmatpush1.bf16.msra.mxu0 %v3354
      %3777 = vmatprep.subr.bf16.mxu0 0
      %3778 = vmatpush1.bf16.msra.mxu0 %v3355
      %3779 = vmatprep.subr.bf16.mxu0 0
      %3780 = vmatpush1.bf16.msra.mxu0 0
      %3781 = vmatprep.subr.bf16.mxu0 0
      %3782 = vmatpush1.bf16.msra.mxu0 0
      %3783 = vmatprep.subr.bf16.mxu0 0
      %3784 = vmatpush1.bf16.msra.mxu0 0
      %3785 = vmatprep.subr.bf16.mxu0 0
      %3786 = vmatpush1.bf16.msra.mxu0 0
      %3787 = vmatprep.subr.bf16.mxu0 0
      %3788 = vmatpush1.bf16.msra.mxu0 0
      %3789 = vmatprep.subr.bf16.mxu0 0
      %3790 = vmatpush1.bf16.msra.mxu0 0
      %3791 = vmatprep.subr.bf16.mxu0 0
      %3792 = vmatpush1.bf16.msra.mxu0 0
      %3793 = vmatprep.subr.bf16.mxu0 0
      %3794 = vmatpush1.bf16.msra.mxu0 0
      %3795 = vmatprep.mubr.bf16.mxu0 0
      %3796 = vmatmul.mubr.bf16.gmra.mrb[0].mxu0 %v2740
      %v3797 = vpop.f32.mrb[0].mxu0
      %v3798 = vadd.f32 %v3757, %v3797
      %v3799 = vpop.f32.mrb[0].mxu0
      %v3800 = vpop.f32.mrb[0].mxu0
      %v3801 = vadd.f32 %v3760, %v3800
      %v3802 = vpop.f32.mrb[0].mxu0
      %3803 = vdwg.mxu0
      %v3804 = vmax.f32 %v3798, 0.0
      %v3805 = vmax.f32 %v3801, 0.0
      %3806 = vset.pattern.permute.xlu0 2
      %3807 = vperm.xlu0 %3806, %v1277
      %v3808 = vpop.permute.xlu0 %3807
      %3810 = vset.pattern.permute.xlu0 2
      %3811 = vperm.xlu0 %3810, %v1278
      %v3812 = vpop.permute.xlu0 %3811
      %v3814 = vmul.f32 %v3804, %v3808
      %v3815 = vmul.f32 %v3805, %v3812
      %v3816 = vsel %vm1291, %v3814, -inf
      %v3817 = vsel %vm1291, %v3815, -inf
      %v3818 = vmax.f32 %v3816, %v3817
      %v3819 = vrot.slane %v3818, 4
      %v3820 = vmax.f32 %v3818, %v3819
      %v3821 = vrot.slane %v3820, 2
      %v3822 = vmax.f32 %v3820, %v3821
      %v3823 = vrot.slane %v3822, 1
      %v3824 = vmax.f32 %v3822, %v3823
      %v3825 = vld [vmem:[%s10 + $0x2] sm:$0x1]
      %v3826 = vmul.f32 %v3824, %v3825
      %v3827 = vadd.f32 %v2418, %v3826
      %v3828 = vld [vmem:[%s428 + $0xc] sm:$0xff]
      %v3829 = vld [vmem:[%s428 + $0x14] sm:$0xff]
      %v3830 = vld [vmem:[%s428 + $0x1c] sm:$0xff]
      %v3831 = vld [vmem:[%s428 + $0x24] sm:$0xff]
      %v3832 = vld [vmem:[%s428 + $0x2c] sm:$0xf]
      %v3833 = vld [vmem:[%s428 + $0x48] sm:$0xff]
      %v3834 = vld [vmem:[%s428 + $0x50] sm:$0xff]
      %v3835 = vld [vmem:[%s428 + $0x58] sm:$0xff]
      %v3836 = vld [vmem:[%s428 + $0x60] sm:$0xff]
      %v3837 = vld [vmem:[%s428 + $0x68] sm:$0xf]
      %v3838 = vld [vmem:[%s5] sm:$0xf]
      %v3839 = vld [vmem:[%s5 + $0x4] sm:$0xf]
      %v3840 = vld [vmem:[%s5 + $0x8] sm:$0xf]
      %v3841 = vld [vmem:[%s5 + $0xc] sm:$0xf]
      %v3842 = vld [vmem:[%s5 + $0x10] sm:$0xf]
      %v3843 = vld [vmem:[%s5 + $0x14] sm:$0xf]
      %v3844 = vld [vmem:[%s5 + $0x18] sm:$0xf]
      %v3845 = vld [vmem:[%s5 + $0x1c] sm:$0xf]
      %v3846 = vld [vmem:[%s5 + $0x20] sm:$0xf]
      %v3847 = vld [vmem:[%s5 + $0x24] sm:$0xf]
      %v3848 = vld [vmem:[%s5 + $0x28] sm:$0xf]
      %v3849 = vld [vmem:[%s5 + $0x2c] sm:$0xf]
      %v3850 = vld [vmem:[%s5 + $0x30] sm:$0xf]
      %v3851 = vld [vmem:[%s5 + $0x34] sm:$0xf]
      %v3852 = vld [vmem:[%s5 + $0x38] sm:$0xf]
      %v3853 = vld [vmem:[%s5 + $0x3c] sm:$0xf]
      %v3854 = vld [vmem:[%s5 + $0x40] sm:$0xf]
      %v3855 = vld [vmem:[%s5 + $0x44] sm:$0xf]
      %v3856 = vld [vmem:[%s5 + $0x48] sm:$0xf]
      %v3857 = vld [vmem:[%s5 + $0x4c] sm:$0xf]
      %v3858 = vld [vmem:[%s5 + $0x50] sm:$0xf]
      %v3859 = vld [vmem:[%s5 + $0x54] sm:$0xf]
      %v3860 = vld [vmem:[%s5 + $0x58] sm:$0xf]
      %v3861 = vld [vmem:[%s5 + $0x5c] sm:$0xf]
      %v3862 = vld [vmem:[%s5 + $0x60] sm:$0xf]
      %v3863 = vld [vmem:[%s5 + $0x64] sm:$0xf]
      %v3864 = vld [vmem:[%s5 + $0x68] sm:$0xf]
      %v3865 = vld [vmem:[%s5 + $0x6c] sm:$0xf]
      %v3866 = vld [vmem:[%s5 + $0x70] sm:$0xf]
      %v3867 = vld [vmem:[%s5 + $0x74] sm:$0xf]
      %v3868 = vld [vmem:[%s5 + $0x78] sm:$0xf]
      %v3869 = vld [vmem:[%s5 + $0x7c] sm:$0xf]
      %v3870 = vld [vmem:[%s5 + $0x80] sm:$0xf]
      %v3871 = vld [vmem:[%s5 + $0x84] sm:$0xf]
      %v3872 = vld [vmem:[%s5 + $0x88] sm:$0xf]
      %v3873 = vld [vmem:[%s5 + $0x8c] sm:$0xf]
      %v3874 = vld [vmem:[%s5 + $0x90] sm:$0xf]
      %v3875 = vld [vmem:[%s5 + $0x94] sm:$0xf]
      %v3876 = vld [vmem:[%s5 + $0x98] sm:$0xf]
      %v3877 = vld [vmem:[%s5 + $0x9c] sm:$0xf]
      %v3878 = vld [vmem:[%s5 + $0xa0] sm:$0xf]
      %v3879 = vld [vmem:[%s5 + $0xa4] sm:$0xf]
      %v3880 = vld [vmem:[%s5 + $0xa8] sm:$0xf]
      %v3881 = vld [vmem:[%s5 + $0xac] sm:$0xf]
      %v3882 = vld [vmem:[%s5 + $0xb0] sm:$0xf]
      %v3883 = vld [vmem:[%s5 + $0xb4] sm:$0xf]
      %v3884 = vld [vmem:[%s5 + $0xb8] sm:$0xf]
      %v3885 = vld [vmem:[%s5 + $0xbc] sm:$0xf]
      %v3886 = vld [vmem:[%s5 + $0xc0] sm:$0xf]
      %v3887 = vld [vmem:[%s5 + $0xc4] sm:$0xf]
      %v3888 = vld [vmem:[%s5 + $0xc8] sm:$0xf]
      %v3889 = vld [vmem:[%s5 + $0xcc] sm:$0xf]
      %v3890 = vld [vmem:[%s5 + $0xd0] sm:$0xf]
      %v3891 = vld [vmem:[%s5 + $0xd4] sm:$0xf]
      %v3892 = vld [vmem:[%s5 + $0xd8] sm:$0xf]
      %v3893 = vld [vmem:[%s5 + $0xdc] sm:$0xf]
      %v3894 = vld [vmem:[%s5 + $0xe0] sm:$0xf]
      %v3895 = vld [vmem:[%s5 + $0xe4] sm:$0xf]
      %v3896 = vld [vmem:[%s5 + $0xe8] sm:$0xf]
      %v3897 = vld [vmem:[%s5 + $0xec] sm:$0xf]
      %v3898 = vld [vmem:[%s5 + $0xf0] sm:$0xf]
      %v3899 = vld [vmem:[%s5 + $0xf4] sm:$0xf]
      %v3900 = vld [vmem:[%s5 + $0xf8] sm:$0xf]
      %v3901 = vld [vmem:[%s5 + $0xfc] sm:$0xf]
      %v3902 = vld [vmem:[%s5 + $0x100] sm:$0xf]
      %v3903 = vld [vmem:[%s5 + $0x104] sm:$0xf]
      %v3904 = vld [vmem:[%s5 + $0x108] sm:$0xf]
      %v3905 = vld [vmem:[%s5 + $0x10c] sm:$0xf]
      %v3906 = vld [vmem:[%s5 + $0x110] sm:$0xf]
      %v3907 = vld [vmem:[%s5 + $0x114] sm:$0xf]
      %v3908 = vld [vmem:[%s5 + $0x118] sm:$0xf]
      %v3909 = vld [vmem:[%s5 + $0x11c] sm:$0xf]
      %v3910 = vld [vmem:[%s5 + $0x120] sm:$0xf]
      %v3911 = vld [vmem:[%s5 + $0x124] sm:$0xf]
      %v3912 = vld [vmem:[%s5 + $0x128] sm:$0xf]
      %v3913 = vld [vmem:[%s5 + $0x12c] sm:$0xf]
      %v3914 = vld [vmem:[%s5 + $0x130] sm:$0xf]
      %v3915 = vld [vmem:[%s5 + $0x134] sm:$0xf]
      %v3916 = vld [vmem:[%s5 + $0x138] sm:$0xf]
      %v3917 = vld [vmem:[%s5 + $0x13c] sm:$0xf]
      %v3918 = vld [vmem:[%s5 + $0x140] sm:$0xf]
      %v3919 = vld [vmem:[%s5 + $0x144] sm:$0xf]
      %v3920 = vld [vmem:[%s5 + $0x148] sm:$0xf]
      %v3921 = vld [vmem:[%s5 + $0x14c] sm:$0xf]
      %v3922 = vld [vmem:[%s5 + $0x150] sm:$0xf]
      %v3923 = vld [vmem:[%s5 + $0x154] sm:$0xf]
      %v3924 = vld [vmem:[%s5 + $0x158] sm:$0xf]
      %v3925 = vld [vmem:[%s5 + $0x15c] sm:$0xf]
      %v3926 = vld [vmem:[%s5 + $0x160] sm:$0xf]
      %v3927 = vld [vmem:[%s5 + $0x164] sm:$0xf]
      %v3928 = vld [vmem:[%s5 + $0x168] sm:$0xf]
      %v3929 = vld [vmem:[%s5 + $0x16c] sm:$0xf]
      %v3930 = vld [vmem:[%s5 + $0x170] sm:$0xf]
      %v3931 = vld [vmem:[%s5 + $0x174] sm:$0xf]
      %v3932 = vld [vmem:[%s5 + $0x178] sm:$0xf]
      %v3933 = vld [vmem:[%s5 + $0x17c] sm:$0xf]
      %v3934 = vld [vmem:[%s5 + $0x180] sm:$0xf]
      %v3935 = vld [vmem:[%s5 + $0x184] sm:$0xf]
      %v3936 = vld [vmem:[%s5 + $0x188] sm:$0xf]
      %v3937 = vld [vmem:[%s5 + $0x18c] sm:$0xf]
      %v3938 = vld [vmem:[%s5 + $0x190] sm:$0xf]
      %v3939 = vld [vmem:[%s5 + $0x194] sm:$0xf]
      %v3940 = vld [vmem:[%s5 + $0x198] sm:$0xf]
      %v3941 = vld [vmem:[%s5 + $0x19c] sm:$0xf]
      %v3942 = vld [vmem:[%s5 + $0x1a0] sm:$0xf]
      %v3943 = vld [vmem:[%s5 + $0x1a4] sm:$0xf]
      %v3944 = vld [vmem:[%s5 + $0x1a8] sm:$0xf]
      %v3945 = vld [vmem:[%s5 + $0x1ac] sm:$0xf]
      %v3946 = vld [vmem:[%s5 + $0x1b0] sm:$0xf]
      %v3947 = vld [vmem:[%s5 + $0x1b4] sm:$0xf]
      %v3948 = vld [vmem:[%s5 + $0x1b8] sm:$0xf]
      %v3949 = vld [vmem:[%s5 + $0x1bc] sm:$0xf]
      %v3950 = vld [vmem:[%s5 + $0x1c0] sm:$0xf]
      %v3951 = vld [vmem:[%s5 + $0x1c4] sm:$0xf]
      %v3952 = vld [vmem:[%s5 + $0x1c8] sm:$0xf]
      %v3953 = vld [vmem:[%s5 + $0x1cc] sm:$0xf]
      %v3954 = vld [vmem:[%s5 + $0x1d0] sm:$0xf]
      %v3955 = vld [vmem:[%s5 + $0x1d4] sm:$0xf]
      %v3956 = vld [vmem:[%s5 + $0x1d8] sm:$0xf]
      %v3957 = vld [vmem:[%s5 + $0x1dc] sm:$0xf]
      %v3958 = vld [vmem:[%s5 + $0x1e0] sm:$0xf]
      %v3959 = vld [vmem:[%s5 + $0x1e4] sm:$0xf]
      %v3960 = vld [vmem:[%s5 + $0x1e8] sm:$0xf]
      %v3961 = vld [vmem:[%s5 + $0x1ec] sm:$0xf]
      %v3962 = vld [vmem:[%s5 + $0x1f0] sm:$0xf]
      %v3963 = vld [vmem:[%s5 + $0x1f4] sm:$0xf]
      %v3964 = vld [vmem:[%s5 + $0x1f8] sm:$0xf]
      %v3965 = vld [vmem:[%s5 + $0x1fc] sm:$0xf]
      %v3966 = vld [vmem:[%s5 + $0x200] sm:$0xf]
      %v3967 = vld [vmem:[%s5 + $0x204] sm:$0xf]
      %v3968 = vld [vmem:[%s5 + $0x208] sm:$0xf]
      %v3969 = vld [vmem:[%s5 + $0x20c] sm:$0xf]
      %v3970 = vld [vmem:[%s5 + $0x210] sm:$0xf]
      %v3971 = vld [vmem:[%s5 + $0x214] sm:$0xf]
      %v3972 = vld [vmem:[%s5 + $0x218] sm:$0xf]
      %v3973 = vld [vmem:[%s5 + $0x21c] sm:$0xf]
      %v3974 = vld [vmem:[%s5 + $0x220] sm:$0xf]
      %v3975 = vld [vmem:[%s5 + $0x224] sm:$0xf]
      %v3976 = vld [vmem:[%s5 + $0x228] sm:$0xf]
      %v3977 = vld [vmem:[%s5 + $0x22c] sm:$0xf]
      %v3978 = vld [vmem:[%s5 + $0x230] sm:$0xf]
      %v3979 = vld [vmem:[%s5 + $0x234] sm:$0xf]
      %v3980 = vld [vmem:[%s5 + $0x238] sm:$0xf]
      %v3981 = vld [vmem:[%s5 + $0x23c] sm:$0xf]
      %v3982 = vld [vmem:[%s9 + $0x3] sm:$0x1]
      %v3983 = vlaneseq
      %v3984 = vshrl.u32 %v3983, 7
      %v3985 = vsub.s32 0, %v3984
      %v3986 = vrot.slane %v3982, %v3985
      %v3997 = vunpack.c.l.b16 %v3828
      %v3998 = vunpack.c.h.b16 %v3828
      %v3999 = vunpack.c.l.b16 %v3829
      %v4000 = vunpack.c.h.b16 %v3829
      %v4001 = vunpack.c.l.b16 %v3830
      %v4002 = vunpack.c.h.b16 %v3830
      %v4003 = vunpack.c.l.b16 %v3831
      %v4004 = vunpack.c.h.b16 %v3831
      %v4005 = vunpack.c.l.b16 %v3832
      %v4006 = vunpack.c.l.b16 %v3833
      %v4007 = vunpack.c.h.b16 %v3833
      %v4008 = vunpack.c.l.b16 %v3834
      %v4009 = vunpack.c.h.b16 %v3834
      %v4010 = vunpack.c.l.b16 %v3835
      %v4011 = vunpack.c.h.b16 %v3835
      %v4012 = vunpack.c.l.b16 %v3836
      %v4013 = vunpack.c.h.b16 %v3836
      %v4014 = vunpack.c.l.b16 %v3837
      %v4015 = vpack.c.b16 %v4006, %v3997
      %v4016 = vpack.c.b16 %v4007, %v3998
      %v4017 = vpack.c.b16 %v4008, %v3999
      %v4018 = vpack.c.b16 %v4009, %v4000
      %v4019 = vpack.c.b16 %v4010, %v4001
      %v4020 = vpack.c.b16 %v4011, %v4002
      %v4021 = vpack.c.b16 %v4012, %v4003
      %v4022 = vpack.c.b16 %v4013, %v4004
      %v4023 = vpack.c.b16 %v4014, %v4005
      %v4177 = vunpack.c.l.b16 %v3838
      %v4178 = vunpack.c.l.b16 %v3839
      %v4179 = vunpack.c.l.b16 %v3840
      %v4180 = vunpack.c.l.b16 %v3841
      %v4181 = vunpack.c.l.b16 %v3842
      %v4182 = vunpack.c.l.b16 %v3843
      %v4183 = vunpack.c.l.b16 %v3844
      %v4184 = vunpack.c.l.b16 %v3845
      %v4185 = vunpack.c.l.b16 %v3846
      %v4186 = vunpack.c.l.b16 %v3847
      %v4187 = vunpack.c.l.b16 %v3848
      %v4188 = vunpack.c.l.b16 %v3849
      %v4189 = vunpack.c.l.b16 %v3850
      %v4190 = vunpack.c.l.b16 %v3851
      %v4191 = vunpack.c.l.b16 %v3852
      %v4192 = vunpack.c.l.b16 %v3853
      %v4193 = vunpack.c.l.b16 %v3854
      %v4194 = vunpack.c.l.b16 %v3855
      %v4195 = vunpack.c.l.b16 %v3856
      %v4196 = vunpack.c.l.b16 %v3857
      %v4197 = vunpack.c.l.b16 %v3858
      %v4198 = vunpack.c.l.b16 %v3859
      %v4199 = vunpack.c.l.b16 %v3860
      %v4200 = vunpack.c.l.b16 %v3861
      %v4201 = vunpack.c.l.b16 %v3862
      %v4202 = vunpack.c.l.b16 %v3863
      %v4203 = vunpack.c.l.b16 %v3864
      %v4204 = vunpack.c.l.b16 %v3865
      %v4205 = vunpack.c.l.b16 %v3866
      %v4206 = vunpack.c.l.b16 %v3867
      %v4207 = vunpack.c.l.b16 %v3868
      %v4208 = vunpack.c.l.b16 %v3869
      %v4209 = vunpack.c.l.b16 %v3870
      %v4210 = vunpack.c.l.b16 %v3871
      %v4211 = vunpack.c.l.b16 %v3872
      %v4212 = vunpack.c.l.b16 %v3873
      %v4213 = vunpack.c.l.b16 %v3874
      %v4214 = vunpack.c.l.b16 %v3875
      %v4215 = vunpack.c.l.b16 %v3876
      %v4216 = vunpack.c.l.b16 %v3877
      %v4217 = vunpack.c.l.b16 %v3878
      %v4218 = vunpack.c.l.b16 %v3879
      %v4219 = vunpack.c.l.b16 %v3880
      %v4220 = vunpack.c.l.b16 %v3881
      %v4221 = vunpack.c.l.b16 %v3882
      %v4222 = vunpack.c.l.b16 %v3883
      %v4223 = vunpack.c.l.b16 %v3884
      %v4224 = vunpack.c.l.b16 %v3885
      %v4225 = vunpack.c.l.b16 %v3886
      %v4226 = vunpack.c.l.b16 %v3887
      %v4227 = vunpack.c.l.b16 %v3888
      %v4228 = vunpack.c.l.b16 %v3889
      %v4229 = vunpack.c.l.b16 %v3890
      %v4230 = vunpack.c.l.b16 %v3891
      %v4231 = vunpack.c.l.b16 %v3892
      %v4232 = vunpack.c.l.b16 %v3893
      %v4233 = vunpack.c.l.b16 %v3894
      %v4234 = vunpack.c.l.b16 %v3895
      %v4235 = vunpack.c.l.b16 %v3896
      %v4236 = vunpack.c.l.b16 %v3897
      %v4237 = vunpack.c.l.b16 %v3898
      %v4238 = vunpack.c.l.b16 %v3899
      %v4239 = vunpack.c.l.b16 %v3900
      %v4240 = vunpack.c.l.b16 %v3901
      %v4241 = vunpack.c.l.b16 %v3902
      %v4242 = vunpack.c.l.b16 %v3903
      %v4243 = vunpack.c.l.b16 %v3904
      %v4244 = vunpack.c.l.b16 %v3905
      %v4245 = vunpack.c.l.b16 %v3906
      %v4246 = vunpack.c.l.b16 %v3907
      %v4247 = vunpack.c.l.b16 %v3908
      %v4248 = vunpack.c.l.b16 %v3909
      %v4249 = vunpack.c.l.b16 %v3910
      %v4250 = vunpack.c.l.b16 %v3911
      %v4251 = vunpack.c.l.b16 %v3912
      %v4252 = vunpack.c.l.b16 %v3913
      %v4253 = vunpack.c.l.b16 %v3914
      %v4254 = vunpack.c.l.b16 %v3915
      %v4255 = vunpack.c.l.b16 %v3916
      %v4256 = vunpack.c.l.b16 %v3917
      %v4257 = vunpack.c.l.b16 %v3918
      %v4258 = vunpack.c.l.b16 %v3919
      %v4259 = vunpack.c.l.b16 %v3920
      %v4260 = vunpack.c.l.b16 %v3921
      %v4261 = vunpack.c.l.b16 %v3922
      %v4262 = vunpack.c.l.b16 %v3923
      %v4263 = vunpack.c.l.b16 %v3924
      %v4264 = vunpack.c.l.b16 %v3925
      %v4265 = vunpack.c.l.b16 %v3926
      %v4266 = vunpack.c.l.b16 %v3927
      %v4267 = vunpack.c.l.b16 %v3928
      %v4268 = vunpack.c.l.b16 %v3929
      %v4269 = vunpack.c.l.b16 %v3930
      %v4270 = vunpack.c.l.b16 %v3931
      %v4271 = vunpack.c.l.b16 %v3932
      %v4272 = vunpack.c.l.b16 %v3933
      %v4273 = vunpack.c.l.b16 %v3934
      %v4274 = vunpack.c.l.b16 %v3935
      %v4275 = vunpack.c.l.b16 %v3936
      %v4276 = vunpack.c.l.b16 %v3937
      %v4277 = vunpack.c.l.b16 %v3938
      %v4278 = vunpack.c.l.b16 %v3939
      %v4279 = vunpack.c.l.b16 %v3940
      %v4280 = vunpack.c.l.b16 %v3941
      %v4281 = vunpack.c.l.b16 %v3942
      %v4282 = vunpack.c.l.b16 %v3943
      %v4283 = vunpack.c.l.b16 %v3944
      %v4284 = vunpack.c.l.b16 %v3945
      %v4285 = vunpack.c.l.b16 %v3946
      %v4286 = vunpack.c.l.b16 %v3947
      %v4287 = vunpack.c.l.b16 %v3948
      %v4288 = vunpack.c.l.b16 %v3949
      %v4289 = vunpack.c.l.b16 %v3950
      %v4290 = vunpack.c.l.b16 %v3951
      %v4291 = vunpack.c.l.b16 %v3952
      %v4292 = vunpack.c.l.b16 %v3953
      %v4293 = vunpack.c.l.b16 %v3954
      %v4294 = vunpack.c.l.b16 %v3955
      %v4295 = vunpack.c.l.b16 %v3956
      %v4296 = vunpack.c.l.b16 %v3957
      %v4297 = vunpack.c.l.b16 %v3958
      %v4298 = vunpack.c.l.b16 %v3959
      %v4299 = vunpack.c.l.b16 %v3960
      %v4300 = vunpack.c.l.b16 %v3961
      %v4301 = vunpack.c.l.b16 %v3962
      %v4302 = vunpack.c.l.b16 %v3963
      %v4303 = vunpack.c.l.b16 %v3964
      %v4304 = vunpack.c.l.b16 %v3965
      %v4305 = vunpack.c.l.b16 %v3966
      %v4306 = vunpack.c.l.b16 %v3967
      %v4307 = vunpack.c.l.b16 %v3968
      %v4308 = vunpack.c.l.b16 %v3969
      %v4309 = vunpack.c.l.b16 %v3970
      %v4310 = vunpack.c.l.b16 %v3971
      %v4311 = vunpack.c.l.b16 %v3972
      %v4312 = vunpack.c.l.b16 %v3973
      %v4313 = vunpack.c.l.b16 %v3974
      %v4314 = vunpack.c.l.b16 %v3975
      %v4315 = vunpack.c.l.b16 %v3976
      %v4316 = vunpack.c.l.b16 %v3977
      %v4317 = vunpack.c.l.b16 %v3978
      %v4318 = vunpack.c.l.b16 %v3979
      %v4319 = vunpack.c.l.b16 %v3980
      %v4320 = vunpack.c.l.b16 %v3981
      %v4321 = vpack.c.b16 %v4178, %v4177
      %v4322 = vpack.c.b16 %v4180, %v4179
      %v4323 = vpack.c.b16 %v4182, %v4181
      %v4324 = vpack.c.b16 %v4184, %v4183
      %v4325 = vpack.c.b16 %v4186, %v4185
      %v4326 = vpack.c.b16 %v4188, %v4187
      %v4327 = vpack.c.b16 %v4190, %v4189
      %v4328 = vpack.c.b16 %v4192, %v4191
      %v4329 = vpack.c.b16 %v4194, %v4193
      %v4330 = vpack.c.b16 %v4196, %v4195
      %v4331 = vpack.c.b16 %v4198, %v4197
      %v4332 = vpack.c.b16 %v4200, %v4199
      %v4333 = vpack.c.b16 %v4202, %v4201
      %v4334 = vpack.c.b16 %v4204, %v4203
      %v4335 = vpack.c.b16 %v4206, %v4205
      %v4336 = vpack.c.b16 %v4208, %v4207
      %v4337 = vpack.c.b16 %v4210, %v4209
      %v4338 = vpack.c.b16 %v4212, %v4211
      %v4339 = vpack.c.b16 %v4214, %v4213
      %v4340 = vpack.c.b16 %v4216, %v4215
      %v4341 = vpack.c.b16 %v4218, %v4217
      %v4342 = vpack.c.b16 %v4220, %v4219
      %v4343 = vpack.c.b16 %v4222, %v4221
      %v4344 = vpack.c.b16 %v4224, %v4223
      %v4345 = vpack.c.b16 %v4226, %v4225
      %v4346 = vpack.c.b16 %v4228, %v4227
      %v4347 = vpack.c.b16 %v4230, %v4229
      %v4348 = vpack.c.b16 %v4232, %v4231
      %v4349 = vpack.c.b16 %v4234, %v4233
      %v4350 = vpack.c.b16 %v4236, %v4235
      %v4351 = vpack.c.b16 %v4238, %v4237
      %v4352 = vpack.c.b16 %v4240, %v4239
      %v4353 = vpack.c.b16 %v4242, %v4241
      %v4354 = vpack.c.b16 %v4244, %v4243
      %v4355 = vpack.c.b16 %v4246, %v4245
      %v4356 = vpack.c.b16 %v4248, %v4247
      %v4357 = vpack.c.b16 %v4250, %v4249
      %v4358 = vpack.c.b16 %v4252, %v4251
      %v4359 = vpack.c.b16 %v4254, %v4253
      %v4360 = vpack.c.b16 %v4256, %v4255
      %v4361 = vpack.c.b16 %v4258, %v4257
      %v4362 = vpack.c.b16 %v4260, %v4259
      %v4363 = vpack.c.b16 %v4262, %v4261
      %v4364 = vpack.c.b16 %v4264, %v4263
      %v4365 = vpack.c.b16 %v4266, %v4265
      %v4366 = vpack.c.b16 %v4268, %v4267
      %v4367 = vpack.c.b16 %v4270, %v4269
      %v4368 = vpack.c.b16 %v4272, %v4271
      %v4369 = vpack.c.b16 %v4274, %v4273
      %v4370 = vpack.c.b16 %v4276, %v4275
      %v4371 = vpack.c.b16 %v4278, %v4277
      %v4372 = vpack.c.b16 %v4280, %v4279
      %v4373 = vpack.c.b16 %v4282, %v4281
      %v4374 = vpack.c.b16 %v4284, %v4283
      %v4375 = vpack.c.b16 %v4286, %v4285
      %v4376 = vpack.c.b16 %v4288, %v4287
      %v4377 = vpack.c.b16 %v4290, %v4289
      %v4378 = vpack.c.b16 %v4292, %v4291
      %v4379 = vpack.c.b16 %v4294, %v4293
      %v4380 = vpack.c.b16 %v4296, %v4295
      %v4381 = vpack.c.b16 %v4298, %v4297
      %v4382 = vpack.c.b16 %v4300, %v4299
      %v4383 = vpack.c.b16 %v4302, %v4301
      %v4384 = vpack.c.b16 %v4304, %v4303
      %v4385 = vpack.c.b16 %v4306, %v4305
      %v4386 = vpack.c.b16 %v4308, %v4307
      %v4387 = vpack.c.b16 %v4310, %v4309
      %v4388 = vpack.c.b16 %v4312, %v4311
      %v4389 = vpack.c.b16 %v4314, %v4313
      %v4390 = vpack.c.b16 %v4316, %v4315
      %v4391 = vpack.c.b16 %v4318, %v4317
      %v4392 = vpack.c.b16 %v4320, %v4319
      %4465 = vmatprep.subr.bf16.mxu0 0
      %4466 = vmatpush1.bf16.msra.mxu0 %v4321
      %4467 = vmatprep.subr.bf16.mxu0 0
      %4468 = vmatpush1.bf16.msra.mxu0 %v4322
      %4469 = vmatprep.subr.bf16.mxu0 0
      %4470 = vmatpush1.bf16.msra.mxu0 %v4323
      %4471 = vmatprep.subr.bf16.mxu0 0
      %4472 = vmatpush1.bf16.msra.mxu0 %v4324
      %4473 = vmatprep.subr.bf16.mxu0 0
      %4474 = vmatpush1.bf16.msra.mxu0 %v4325
      %4475 = vmatprep.subr.bf16.mxu0 0
      %4476 = vmatpush1.bf16.msra.mxu0 %v4326
      %4477 = vmatprep.subr.bf16.mxu0 0
      %4478 = vmatpush1.bf16.msra.mxu0 %v4327
      %4479 = vmatprep.subr.bf16.mxu0 0
      %4480 = vmatpush1.bf16.msra.mxu0 %v4328
      %4481 = vmatprep.subr.bf16.mxu0 0
      %4482 = vmatpush1.bf16.msra.mxu0 %v4329
      %4483 = vmatprep.subr.bf16.mxu0 0
      %4484 = vmatpush1.bf16.msra.mxu0 %v4330
      %4485 = vmatprep.subr.bf16.mxu0 0
      %4486 = vmatpush1.bf16.msra.mxu0 %v4331
      %4487 = vmatprep.subr.bf16.mxu0 0
      %4488 = vmatpush1.bf16.msra.mxu0 %v4332
      %4489 = vmatprep.subr.bf16.mxu0 0
      %4490 = vmatpush1.bf16.msra.mxu0 %v4333
      %4491 = vmatprep.subr.bf16.mxu0 0
      %4492 = vmatpush1.bf16.msra.mxu0 %v4334
      %4493 = vmatprep.subr.bf16.mxu0 0
      %4494 = vmatpush1.bf16.msra.mxu0 %v4335
      %4495 = vmatprep.subr.bf16.mxu0 0
      %4496 = vmatpush1.bf16.msra.mxu0 %v4336
      %4497 = vmatprep.mubr.bf16.mxu0 %v4016
      %4498 = vmatmul.mubr.bf16.gmra.mrb[0].mxu0 %v4015
      %v4499 = vpop.f32.mrb[0].mxu0
      %v4500 = vadd.f32 %v3986, %v4499
      %v4501 = vpop.f32.mrb[0].mxu0
      %v4502 = vpop.f32.mrb[0].mxu0
      %v4503 = vadd.f32 %v3986, %v4502
      %v4504 = vpop.f32.mrb[0].mxu0
      %4505 = vdwg.mxu0
      %4506 = vmatprep.subr.bf16.mxu0 0
      %4507 = vmatpush1.bf16.msra.mxu0 %v4337
      %4508 = vmatprep.subr.bf16.mxu0 0
      %4509 = vmatpush1.bf16.msra.mxu0 %v4338
      %4510 = vmatprep.subr.bf16.mxu0 0
      %4511 = vmatpush1.bf16.msra.mxu0 %v4339
      %4512 = vmatprep.subr.bf16.mxu0 0
      %4513 = vmatpush1.bf16.msra.mxu0 %v4340
      %4514 = vmatprep.subr.bf16.mxu0 0
      %4515 = vmatpush1.bf16.msra.mxu0 %v4341
      %4516 = vmatprep.subr.bf16.mxu0 0
      %4517 = vmatpush1.bf16.msra.mxu0 %v4342
      %4518 = vmatprep.subr.bf16.mxu0 0
      %4519 = vmatpush1.bf16.msra.mxu0 %v4343
      %4520 = vmatprep.subr.bf16.mxu0 0
      %4521 = vmatpush1.bf16.msra.mxu0 %v4344
      %4522 = vmatprep.subr.bf16.mxu0 0
      %4523 = vmatpush1.bf16.msra.mxu0 %v4345
      %4524 = vmatprep.subr.bf16.mxu0 0
      %4525 = vmatpush1.bf16.msra.mxu0 %v4346
      %4526 = vmatprep.subr.bf16.mxu0 0
      %4527 = vmatpush1.bf16.msra.mxu0 %v4347
      %4528 = vmatprep.subr.bf16.mxu0 0
      %4529 = vmatpush1.bf16.msra.mxu0 %v4348
      %4530 = vmatprep.subr.bf16.mxu0 0
      %4531 = vmatpush1.bf16.msra.mxu0 %v4349
      %4532 = vmatprep.subr.bf16.mxu0 0
      %4533 = vmatpush1.bf16.msra.mxu0 %v4350
      %4534 = vmatprep.subr.bf16.mxu0 0
      %4535 = vmatpush1.bf16.msra.mxu0 %v4351
      %4536 = vmatprep.subr.bf16.mxu0 0
      %4537 = vmatpush1.bf16.msra.mxu0 %v4352
      %4538 = vmatprep.mubr.bf16.mxu0 %v4018
      %4539 = vmatmul.mubr.bf16.gmra.mrb[0].mxu0 %v4017
      %v4540 = vpop.f32.mrb[0].mxu0
      %v4541 = vadd.f32 %v4500, %v4540
      %v4542 = vpop.f32.mrb[0].mxu0
      %v4543 = vpop.f32.mrb[0].mxu0
      %v4544 = vadd.f32 %v4503, %v4543
      %v4545 = vpop.f32.mrb[0].mxu0
      %4546 = vdwg.mxu0
      %4547 = vmatprep.subr.bf16.mxu0 0
      %4548 = vmatpush1.bf16.msra.mxu0 %v4353
      %4549 = vmatprep.subr.bf16.mxu0 0
      %4550 = vmatpush1.bf16.msra.mxu0 %v4354
      %4551 = vmatprep.subr.bf16.mxu0 0
      %4552 = vmatpush1.bf16.msra.mxu0 %v4355
      %4553 = vmatprep.subr.bf16.mxu0 0
      %4554 = vmatpush1.bf16.msra.mxu0 %v4356
      %4555 = vmatprep.subr.bf16.mxu0 0
      %4556 = vmatpush1.bf16.msra.mxu0 %v4357
      %4557 = vmatprep.subr.bf16.mxu0 0
      %4558 = vmatpush1.bf16.msra.mxu0 %v4358
      %4559 = vmatprep.subr.bf16.mxu0 0
      %4560 = vmatpush1.bf16.msra.mxu0 %v4359
      %4561 = vmatprep.subr.bf16.mxu0 0
      %4562 = vmatpush1.bf16.msra.mxu0 %v4360
      %4563 = vmatprep.subr.bf16.mxu0 0
      %4564 = vmatpush1.bf16.msra.mxu0 %v4361
      %4565 = vmatprep.subr.bf16.mxu0 0
      %4566 = vmatpush1.bf16.msra.mxu0 %v4362
      %4567 = vmatprep.subr.bf16.mxu0 0
      %4568 = vmatpush1.bf16.msra.mxu0 %v4363
      %4569 = vmatprep.subr.bf16.mxu0 0
      %4570 = vmatpush1.bf16.msra.mxu0 %v4364
      %4571 = vmatprep.subr.bf16.mxu0 0
      %4572 = vmatpush1.bf16.msra.mxu0 %v4365
      %4573 = vmatprep.subr.bf16.mxu0 0
      %4574 = vmatpush1.bf16.msra.mxu0 %v4366
      %4575 = vmatprep.subr.bf16.mxu0 0
      %4576 = vmatpush1.bf16.msra.mxu0 %v4367
      %4577 = vmatprep.subr.bf16.mxu0 0
      %4578 = vmatpush1.bf16.msra.mxu0 %v4368
      %4579 = vmatprep.mubr.bf16.mxu0 %v4020
      %4580 = vmatmul.mubr.bf16.gmra.mrb[0].mxu0 %v4019
      %v4581 = vpop.f32.mrb[0].mxu0
      %v4582 = vadd.f32 %v4541, %v4581
      %v4583 = vpop.f32.mrb[0].mxu0
      %v4584 = vpop.f32.mrb[0].mxu0
      %v4585 = vadd.f32 %v4544, %v4584
      %v4586 = vpop.f32.mrb[0].mxu0
      %4587 = vdwg.mxu0
      %4588 = vmatprep.subr.bf16.mxu0 0
      %4589 = vmatpush1.bf16.msra.mxu0 %v4369
      %4590 = vmatprep.subr.bf16.mxu0 0
      %4591 = vmatpush1.bf16.msra.mxu0 %v4370
      %4592 = vmatprep.subr.bf16.mxu0 0
      %4593 = vmatpush1.bf16.msra.mxu0 %v4371
      %4594 = vmatprep.subr.bf16.mxu0 0
      %4595 = vmatpush1.bf16.msra.mxu0 %v4372
      %4596 = vmatprep.subr.bf16.mxu0 0
      %4597 = vmatpush1.bf16.msra.mxu0 %v4373
      %4598 = vmatprep.subr.bf16.mxu0 0
      %4599 = vmatpush1.bf16.msra.mxu0 %v4374
      %4600 = vmatprep.subr.bf16.mxu0 0
      %4601 = vmatpush1.bf16.msra.mxu0 %v4375
      %4602 = vmatprep.subr.bf16.mxu0 0
      %4603 = vmatpush1.bf16.msra.mxu0 %v4376
      %4604 = vmatprep.subr.bf16.mxu0 0
      %4605 = vmatpush1.bf16.msra.mxu0 %v4377
      %4606 = vmatprep.subr.bf16.mxu0 0
      %4607 = vmatpush1.bf16.msra.mxu0 %v4378
      %4608 = vmatprep.subr.bf16.mxu0 0
      %4609 = vmatpush1.bf16.msra.mxu0 %v4379
      %4610 = vmatprep.subr.bf16.mxu0 0
      %4611 = vmatpush1.bf16.msra.mxu0 %v4380
      %4612 = vmatprep.subr.bf16.mxu0 0
      %4613 = vmatpush1.bf16.msra.mxu0 %v4381
      %4614 = vmatprep.subr.bf16.mxu0 0
      %4615 = vmatpush1.bf16.msra.mxu0 %v4382
      %4616 = vmatprep.subr.bf16.mxu0 0
      %4617 = vmatpush1.bf16.msra.mxu0 %v4383
      %4618 = vmatprep.subr.bf16.mxu0 0
      %4619 = vmatpush1.bf16.msra.mxu0 %v4384
      %4620 = vmatprep.mubr.bf16.mxu0 %v4022
      %4621 = vmatmul.mubr.bf16.gmra.mrb[0].mxu0 %v4021
      %v4622 = vpop.f32.mrb[0].mxu0
      %v4623 = vadd.f32 %v4582, %v4622
      %v4624 = vpop.f32.mrb[0].mxu0
      %v4625 = vpop.f32.mrb[0].mxu0
      %v4626 = vadd.f32 %v4585, %v4625
      %v4627 = vpop.f32.mrb[0].mxu0
      %4628 = vdwg.mxu0
      %4629 = vmatprep.subr.bf16.mxu0 0
      %4630 = vmatpush1.bf16.msra.mxu0 %v4385
      %4631 = vmatprep.subr.bf16.mxu0 0
      %4632 = vmatpush1.bf16.msra.mxu0 %v4386
      %4633 = vmatprep.subr.bf16.mxu0 0
      %4634 = vmatpush1.bf16.msra.mxu0 %v4387
      %4635 = vmatprep.subr.bf16.mxu0 0
      %4636 = vmatpush1.bf16.msra.mxu0 %v4388
      %4637 = vmatprep.subr.bf16.mxu0 0
      %4638 = vmatpush1.bf16.msra.mxu0 %v4389
      %4639 = vmatprep.subr.bf16.mxu0 0
      %4640 = vmatpush1.bf16.msra.mxu0 %v4390
      %4641 = vmatprep.subr.bf16.mxu0 0
      %4642 = vmatpush1.bf16.msra.mxu0 %v4391
      %4643 = vmatprep.subr.bf16.mxu0 0
      %4644 = vmatpush1.bf16.msra.mxu0 %v4392
      %4645 = vmatprep.subr.bf16.mxu0 0
      %4646 = vmatpush1.bf16.msra.mxu0 0
      %4647 = vmatprep.subr.bf16.mxu0 0
      %4648 = vmatpush1.bf16.msra.mxu0 0
      %4649 = vmatprep.subr.bf16.mxu0 0
      %4650 = vmatpush1.bf16.msra.mxu0 0
      %4651 = vmatprep.subr.bf16.mxu0 0
      %4652 = vmatpush1.bf16.msra.mxu0 0
      %4653 = vmatprep.subr.bf16.mxu0 0
      %4654 = vmatpush1.bf16.msra.mxu0 0
      %4655 = vmatprep.subr.bf16.mxu0 0
      %4656 = vmatpush1.bf16.msra.mxu0 0
      %4657 = vmatprep.subr.bf16.mxu0 0
      %4658 = vmatpush1.bf16.msra.mxu0 0
      %4659 = vmatprep.subr.bf16.mxu0 0
      %4660 = vmatpush1.bf16.msra.mxu0 0
      %4661 = vmatprep.mubr.bf16.mxu0 0
      %4662 = vmatmul.mubr.bf16.gmra.mrb[0].mxu0 %v4023
      %v4663 = vpop.f32.mrb[0].mxu0
      %v4664 = vadd.f32 %v4623, %v4663
      %v4665 = vpop.f32.mrb[0].mxu0
      %v4666 = vpop.f32.mrb[0].mxu0
      %v4667 = vadd.f32 %v4626, %v4666
      %v4668 = vpop.f32.mrb[0].mxu0
      %4669 = vdwg.mxu0
      %v4670 = vmax.f32 %v4664, 0.0
      %v4671 = vmax.f32 %v4667, 0.0
      %v4672 = vmul.f32 %v4670, %v1282
      %v4673 = vmul.f32 %v4671, %v1287
      %v4674 = vsel %vm1291, %v4672, -inf
      %v4675 = vsel %vm1291, %v4673, -inf
      %v4676 = vmax.f32 %v4674, %v4675
      %v4677 = vrot.slane %v4676, 4
      %v4678 = vmax.f32 %v4676, %v4677
      %v4679 = vrot.slane %v4678, 2
      %v4680 = vmax.f32 %v4678, %v4679
      %v4681 = vrot.slane %v4680, 1
      %v4682 = vmax.f32 %v4680, %v4681
      %v4683 = vld [vmem:[%s10 + $0x3] sm:$0x1]
      %v4684 = vmul.f32 %v4682, %v4683
      %v4685 = vadd.f32 %v3827, %v4684
      %v4686 = vld [vmem:[%s428] sm:$0xff]
      %v4687 = vld [vmem:[%s428 + $0x8] sm:$0xff]
      %v4688 = vld [vmem:[%s428 + $0x10] sm:$0xff]
      %v4689 = vld [vmem:[%s428 + $0x18] sm:$0xff]
      %v4690 = vld [vmem:[%s428 + $0x20] sm:$0xff]
      %v4691 = vld [vmem:[%s428 + $0x28] sm:$0xff]
      %v4692 = vld [vmem:[%s428 + $0x3c] sm:$0xff]
      %v4693 = vld [vmem:[%s428 + $0x44] sm:$0xff]
      %v4694 = vld [vmem:[%s428 + $0x4c] sm:$0xff]
      %v4695 = vld [vmem:[%s428 + $0x54] sm:$0xff]
      %v4696 = vld [vmem:[%s428 + $0x5c] sm:$0xff]
      %v4697 = vld [vmem:[%s428 + $0x64] sm:$0xff]
      %v4698 = vld [vmem:[%s6] sm:$0xf]
      %v4699 = vld [vmem:[%s6 + $0x4] sm:$0xf]
      %v4700 = vld [vmem:[%s6 + $0x8] sm:$0xf]
      %v4701 = vld [vmem:[%s6 + $0xc] sm:$0xf]
      %v4702 = vld [vmem:[%s6 + $0x10] sm:$0xf]
      %v4703 = vld [vmem:[%s6 + $0x14] sm:$0xf]
      %v4704 = vld [vmem:[%s6 + $0x18] sm:$0xf]
      %v4705 = vld [vmem:[%s6 + $0x1c] sm:$0xf]
      %v4706 = vld [vmem:[%s6 + $0x20] sm:$0xf]
      %v4707 = vld [vmem:[%s6 + $0x24] sm:$0xf]
      %v4708 = vld [vmem:[%s6 + $0x28] sm:$0xf]
      %v4709 = vld [vmem:[%s6 + $0x2c] sm:$0xf]
      %v4710 = vld [vmem:[%s6 + $0x30] sm:$0xf]
      %v4711 = vld [vmem:[%s6 + $0x34] sm:$0xf]
      %v4712 = vld [vmem:[%s6 + $0x38] sm:$0xf]
      %v4713 = vld [vmem:[%s6 + $0x3c] sm:$0xf]
      %v4714 = vld [vmem:[%s6 + $0x40] sm:$0xf]
      %v4715 = vld [vmem:[%s6 + $0x44] sm:$0xf]
      %v4716 = vld [vmem:[%s6 + $0x48] sm:$0xf]
      %v4717 = vld [vmem:[%s6 + $0x4c] sm:$0xf]
      %v4718 = vld [vmem:[%s6 + $0x50] sm:$0xf]
      %v4719 = vld [vmem:[%s6 + $0x54] sm:$0xf]
      %v4720 = vld [vmem:[%s6 + $0x58] sm:$0xf]
      %v4721 = vld [vmem:[%s6 + $0x5c] sm:$0xf]
      %v4722 = vld [vmem:[%s6 + $0x60] sm:$0xf]
      %v4723 = vld [vmem:[%s6 + $0x64] sm:$0xf]
      %v4724 = vld [vmem:[%s6 + $0x68] sm:$0xf]
      %v4725 = vld [vmem:[%s6 + $0x6c] sm:$0xf]
      %v4726 = vld [vmem:[%s6 + $0x70] sm:$0xf]
      %v4727 = vld [vmem:[%s6 + $0x74] sm:$0xf]
      %v4728 = vld [vmem:[%s6 + $0x78] sm:$0xf]
      %v4729 = vld [vmem:[%s6 + $0x7c] sm:$0xf]
      %v4730 = vld [vmem:[%s6 + $0x80] sm:$0xf]
      %v4731 = vld [vmem:[%s6 + $0x84] sm:$0xf]
      %v4732 = vld [vmem:[%s6 + $0x88] sm:$0xf]
      %v4733 = vld [vmem:[%s6 + $0x8c] sm:$0xf]
      %v4734 = vld [vmem:[%s6 + $0x90] sm:$0xf]
      %v4735 = vld [vmem:[%s6 + $0x94] sm:$0xf]
      %v4736 = vld [vmem:[%s6 + $0x98] sm:$0xf]
      %v4737 = vld [vmem:[%s6 + $0x9c] sm:$0xf]
      %v4738 = vld [vmem:[%s6 + $0xa0] sm:$0xf]
      %v4739 = vld [vmem:[%s6 + $0xa4] sm:$0xf]
      %v4740 = vld [vmem:[%s6 + $0xa8] sm:$0xf]
      %v4741 = vld [vmem:[%s6 + $0xac] sm:$0xf]
      %v4742 = vld [vmem:[%s6 + $0xb0] sm:$0xf]
      %v4743 = vld [vmem:[%s6 + $0xb4] sm:$0xf]
      %v4744 = vld [vmem:[%s6 + $0xb8] sm:$0xf]
      %v4745 = vld [vmem:[%s6 + $0xbc] sm:$0xf]
      %v4746 = vld [vmem:[%s6 + $0xc0] sm:$0xf]
      %v4747 = vld [vmem:[%s6 + $0xc4] sm:$0xf]
      %v4748 = vld [vmem:[%s6 + $0xc8] sm:$0xf]
      %v4749 = vld [vmem:[%s6 + $0xcc] sm:$0xf]
      %v4750 = vld [vmem:[%s6 + $0xd0] sm:$0xf]
      %v4751 = vld [vmem:[%s6 + $0xd4] sm:$0xf]
      %v4752 = vld [vmem:[%s6 + $0xd8] sm:$0xf]
      %v4753 = vld [vmem:[%s6 + $0xdc] sm:$0xf]
      %v4754 = vld [vmem:[%s6 + $0xe0] sm:$0xf]
      %v4755 = vld [vmem:[%s6 + $0xe4] sm:$0xf]
      %v4756 = vld [vmem:[%s6 + $0xe8] sm:$0xf]
      %v4757 = vld [vmem:[%s6 + $0xec] sm:$0xf]
      %v4758 = vld [vmem:[%s6 + $0xf0] sm:$0xf]
      %v4759 = vld [vmem:[%s6 + $0xf4] sm:$0xf]
      %v4760 = vld [vmem:[%s6 + $0xf8] sm:$0xf]
      %v4761 = vld [vmem:[%s6 + $0xfc] sm:$0xf]
      %v4762 = vld [vmem:[%s6 + $0x100] sm:$0xf]
      %v4763 = vld [vmem:[%s6 + $0x104] sm:$0xf]
      %v4764 = vld [vmem:[%s6 + $0x108] sm:$0xf]
      %v4765 = vld [vmem:[%s6 + $0x10c] sm:$0xf]
      %v4766 = vld [vmem:[%s6 + $0x110] sm:$0xf]
      %v4767 = vld [vmem:[%s6 + $0x114] sm:$0xf]
      %v4768 = vld [vmem:[%s6 + $0x118] sm:$0xf]
      %v4769 = vld [vmem:[%s6 + $0x11c] sm:$0xf]
      %v4770 = vld [vmem:[%s6 + $0x120] sm:$0xf]
      %v4771 = vld [vmem:[%s6 + $0x124] sm:$0xf]
      %v4772 = vld [vmem:[%s6 + $0x128] sm:$0xf]
      %v4773 = vld [vmem:[%s6 + $0x12c] sm:$0xf]
      %v4774 = vld [vmem:[%s6 + $0x130] sm:$0xf]
      %v4775 = vld [vmem:[%s6 + $0x134] sm:$0xf]
      %v4776 = vld [vmem:[%s6 + $0x138] sm:$0xf]
      %v4777 = vld [vmem:[%s6 + $0x13c] sm:$0xf]
      %v4778 = vld [vmem:[%s6 + $0x140] sm:$0xf]
      %v4779 = vld [vmem:[%s6 + $0x144] sm:$0xf]
      %v4780 = vld [vmem:[%s6 + $0x148] sm:$0xf]
      %v4781 = vld [vmem:[%s6 + $0x14c] sm:$0xf]
      %v4782 = vld [vmem:[%s6 + $0x150] sm:$0xf]
      %v4783 = vld [vmem:[%s6 + $0x154] sm:$0xf]
      %v4784 = vld [vmem:[%s6 + $0x158] sm:$0xf]
      %v4785 = vld [vmem:[%s6 + $0x15c] sm:$0xf]
      %v4786 = vld [vmem:[%s6 + $0x160] sm:$0xf]
      %v4787 = vld [vmem:[%s6 + $0x164] sm:$0xf]
      %v4788 = vld [vmem:[%s6 + $0x168] sm:$0xf]
      %v4789 = vld [vmem:[%s6 + $0x16c] sm:$0xf]
      %v4790 = vld [vmem:[%s6 + $0x170] sm:$0xf]
      %v4791 = vld [vmem:[%s6 + $0x174] sm:$0xf]
      %v4792 = vld [vmem:[%s6 + $0x178] sm:$0xf]
      %v4793 = vld [vmem:[%s6 + $0x17c] sm:$0xf]
      %v4794 = vld [vmem:[%s6 + $0x180] sm:$0xf]
      %v4795 = vld [vmem:[%s6 + $0x184] sm:$0xf]
      %v4796 = vld [vmem:[%s6 + $0x188] sm:$0xf]
      %v4797 = vld [vmem:[%s6 + $0x18c] sm:$0xf]
      %v4798 = vld [vmem:[%s6 + $0x190] sm:$0xf]
      %v4799 = vld [vmem:[%s6 + $0x194] sm:$0xf]
      %v4800 = vld [vmem:[%s6 + $0x198] sm:$0xf]
      %v4801 = vld [vmem:[%s6 + $0x19c] sm:$0xf]
      %v4802 = vld [vmem:[%s6 + $0x1a0] sm:$0xf]
      %v4803 = vld [vmem:[%s6 + $0x1a4] sm:$0xf]
      %v4804 = vld [vmem:[%s6 + $0x1a8] sm:$0xf]
      %v4805 = vld [vmem:[%s6 + $0x1ac] sm:$0xf]
      %v4806 = vld [vmem:[%s6 + $0x1b0] sm:$0xf]
      %v4807 = vld [vmem:[%s6 + $0x1b4] sm:$0xf]
      %v4808 = vld [vmem:[%s6 + $0x1b8] sm:$0xf]
      %v4809 = vld [vmem:[%s6 + $0x1bc] sm:$0xf]
      %v4810 = vld [vmem:[%s6 + $0x1c0] sm:$0xf]
      %v4811 = vld [vmem:[%s6 + $0x1c4] sm:$0xf]
      %v4812 = vld [vmem:[%s6 + $0x1c8] sm:$0xf]
      %v4813 = vld [vmem:[%s6 + $0x1cc] sm:$0xf]
      %v4814 = vld [vmem:[%s6 + $0x1d0] sm:$0xf]
      %v4815 = vld [vmem:[%s6 + $0x1d4] sm:$0xf]
      %v4816 = vld [vmem:[%s6 + $0x1d8] sm:$0xf]
      %v4817 = vld [vmem:[%s6 + $0x1dc] sm:$0xf]
      %v4818 = vld [vmem:[%s6 + $0x1e0] sm:$0xf]
      %v4819 = vld [vmem:[%s6 + $0x1e4] sm:$0xf]
      %v4820 = vld [vmem:[%s6 + $0x1e8] sm:$0xf]
      %v4821 = vld [vmem:[%s6 + $0x1ec] sm:$0xf]
      %v4822 = vld [vmem:[%s6 + $0x1f0] sm:$0xf]
      %v4823 = vld [vmem:[%s6 + $0x1f4] sm:$0xf]
      %v4824 = vld [vmem:[%s6 + $0x1f8] sm:$0xf]
      %v4825 = vld [vmem:[%s6 + $0x1fc] sm:$0xf]
      %v4826 = vld [vmem:[%s6 + $0x200] sm:$0xf]
      %v4827 = vld [vmem:[%s6 + $0x204] sm:$0xf]
      %v4828 = vld [vmem:[%s6 + $0x208] sm:$0xf]
      %v4829 = vld [vmem:[%s6 + $0x20c] sm:$0xf]
      %v4830 = vld [vmem:[%s6 + $0x210] sm:$0xf]
      %v4831 = vld [vmem:[%s6 + $0x214] sm:$0xf]
      %v4832 = vld [vmem:[%s6 + $0x218] sm:$0xf]
      %v4833 = vld [vmem:[%s6 + $0x21c] sm:$0xf]
      %v4834 = vld [vmem:[%s6 + $0x220] sm:$0xf]
      %v4835 = vld [vmem:[%s6 + $0x224] sm:$0xf]
      %v4836 = vld [vmem:[%s6 + $0x228] sm:$0xf]
      %v4837 = vld [vmem:[%s6 + $0x22c] sm:$0xf]
      %v4838 = vld [vmem:[%s6 + $0x230] sm:$0xf]
      %v4839 = vld [vmem:[%s6 + $0x234] sm:$0xf]
      %v4840 = vld [vmem:[%s6 + $0x238] sm:$0xf]
      %v4841 = vld [vmem:[%s6 + $0x23c] sm:$0xf]
      %v4842 = vld [vmem:[%s6 + $0x240] sm:$0xf]
      %v4843 = vld [vmem:[%s6 + $0x244] sm:$0xf]
      %v4844 = vld [vmem:[%s6 + $0x248] sm:$0xf]
      %v4845 = vld [vmem:[%s6 + $0x24c] sm:$0xf]
      %v4846 = vld [vmem:[%s6 + $0x250] sm:$0xf]
      %v4847 = vld [vmem:[%s6 + $0x254] sm:$0xf]
      %v4848 = vld [vmem:[%s6 + $0x258] sm:$0xf]
      %v4849 = vld [vmem:[%s6 + $0x25c] sm:$0xf]
      %v4850 = vld [vmem:[%s6 + $0x260] sm:$0xf]
      %v4851 = vld [vmem:[%s6 + $0x264] sm:$0xf]
      %v4852 = vld [vmem:[%s6 + $0x268] sm:$0xf]
      %v4853 = vld [vmem:[%s6 + $0x26c] sm:$0xf]
      %v4854 = vld [vmem:[%s6 + $0x270] sm:$0xf]
      %v4855 = vld [vmem:[%s6 + $0x274] sm:$0xf]
      %v4856 = vld [vmem:[%s6 + $0x278] sm:$0xf]
      %v4857 = vld [vmem:[%s6 + $0x27c] sm:$0xf]
      %v4858 = vld [vmem:[%s6 + $0x280] sm:$0xf]
      %v4859 = vld [vmem:[%s6 + $0x284] sm:$0xf]
      %v4860 = vld [vmem:[%s6 + $0x288] sm:$0xf]
      %v4861 = vld [vmem:[%s6 + $0x28c] sm:$0xf]
      %v4862 = vld [vmem:[%s6 + $0x290] sm:$0xf]
      %v4863 = vld [vmem:[%s6 + $0x294] sm:$0xf]
      %v4864 = vld [vmem:[%s6 + $0x298] sm:$0xf]
      %v4865 = vld [vmem:[%s6 + $0x29c] sm:$0xf]
      %v4866 = vld [vmem:[%s6 + $0x2a0] sm:$0xf]
      %v4867 = vld [vmem:[%s6 + $0x2a4] sm:$0xf]
      %v4868 = vld [vmem:[%s6 + $0x2a8] sm:$0xf]
      %v4869 = vld [vmem:[%s6 + $0x2ac] sm:$0xf]
      %v4870 = vld [vmem:[%s6 + $0x2b0] sm:$0xf]
      %v4871 = vld [vmem:[%s6 + $0x2b4] sm:$0xf]
      %v4872 = vld [vmem:[%s6 + $0x2b8] sm:$0xf]
      %v4873 = vld [vmem:[%s6 + $0x2bc] sm:$0xf]
      %v4874 = vld [vmem:[%s6 + $0x2c0] sm:$0xf]
      %v4875 = vld [vmem:[%s6 + $0x2c4] sm:$0xf]
      %v4876 = vld [vmem:[%s6 + $0x2c8] sm:$0xf]
      %v4877 = vld [vmem:[%s6 + $0x2cc] sm:$0xf]
      %v4878 = vld [vmem:[%s6 + $0x2d0] sm:$0xf]
      %v4879 = vld [vmem:[%s6 + $0x2d4] sm:$0xf]
      %v4880 = vld [vmem:[%s6 + $0x2d8] sm:$0xf]
      %v4881 = vld [vmem:[%s6 + $0x2dc] sm:$0xf]
      %v4882 = vld [vmem:[%s6 + $0x2e0] sm:$0xf]
      %v4883 = vld [vmem:[%s6 + $0x2e4] sm:$0xf]
      %v4884 = vld [vmem:[%s6 + $0x2e8] sm:$0xf]
      %v4885 = vld [vmem:[%s6 + $0x2ec] sm:$0xf]
      %v4886 = vld [vmem:[%s6 + $0x2f0] sm:$0xf]
      %v4887 = vld [vmem:[%s6 + $0x2f4] sm:$0xf]
      %v4888 = vld [vmem:[%s6 + $0x2f8] sm:$0xf]
      %v4889 = vld [vmem:[%s6 + $0x2fc] sm:$0xf]
      %v4890 = vld [vmem:[%s9 + $0x4] sm:$0x1]
      %v4891 = vlaneseq
      %v4892 = vshrl.u32 %v4891, 7
      %v4893 = vsub.s32 0, %v4892
      %v4894 = vrot.slane %v4890, %v4893
      %v4907 = vunpack.c.l.b16 %v4686
      %v4908 = vunpack.c.h.b16 %v4686
      %v4909 = vunpack.c.l.b16 %v4687
      %v4910 = vunpack.c.h.b16 %v4687
      %v4911 = vunpack.c.l.b16 %v4688
      %v4912 = vunpack.c.h.b16 %v4688
      %v4913 = vunpack.c.l.b16 %v4689
      %v4914 = vunpack.c.h.b16 %v4689
      %v4915 = vunpack.c.l.b16 %v4690
      %v4916 = vunpack.c.h.b16 %v4690
      %v4917 = vunpack.c.l.b16 %v4691
      %v4918 = vunpack.c.h.b16 %v4691
      %v4919 = vunpack.c.l.b16 %v4692
      %v4920 = vunpack.c.h.b16 %v4692
      %v4921 = vunpack.c.l.b16 %v4693
      %v4922 = vunpack.c.h.b16 %v4693
      %v4923 = vunpack.c.l.b16 %v4694
      %v4924 = vunpack.c.h.b16 %v4694
      %v4925 = vunpack.c.l.b16 %v4695
      %v4926 = vunpack.c.h.b16 %v4695
      %v4927 = vunpack.c.l.b16 %v4696
      %v4928 = vunpack.c.h.b16 %v4696
      %v4929 = vunpack.c.l.b16 %v4697
      %v4930 = vunpack.c.h.b16 %v4697
      %v4931 = vpack.c.b16 %v4919, %v4907
      %v4932 = vpack.c.b16 %v4920, %v4908
      %v4933 = vpack.c.b16 %v4921, %v4909
      %v4934 = vpack.c.b16 %v4922, %v4910
      %v4935 = vpack.c.b16 %v4923, %v4911
      %v4936 = vpack.c.b16 %v4924, %v4912
      %v4937 = vpack.c.b16 %v4925, %v4913
      %v4938 = vpack.c.b16 %v4926, %v4914
      %v4939 = vpack.c.b16 %v4927, %v4915
      %v4940 = vpack.c.b16 %v4928, %v4916
      %v4941 = vpack.c.b16 %v4929, %v4917
      %v4942 = vpack.c.b16 %v4930, %v4918
      %v5147 = vunpack.c.l.b16 %v4698
      %v5148 = vunpack.c.l.b16 %v4699
      %v5149 = vunpack.c.l.b16 %v4700
      %v5150 = vunpack.c.l.b16 %v4701
      %v5151 = vunpack.c.l.b16 %v4702
      %v5152 = vunpack.c.l.b16 %v4703
      %v5153 = vunpack.c.l.b16 %v4704
      %v5154 = vunpack.c.l.b16 %v4705
      %v5155 = vunpack.c.l.b16 %v4706
      %v5156 = vunpack.c.l.b16 %v4707
      %v5157 = vunpack.c.l.b16 %v4708
      %v5158 = vunpack.c.l.b16 %v4709
      %v5159 = vunpack.c.l.b16 %v4710
      %v5160 = vunpack.c.l.b16 %v4711
      %v5161 = vunpack.c.l.b16 %v4712
      %v5162 = vunpack.c.l.b16 %v4713
      %v5163 = vunpack.c.l.b16 %v4714
      %v5164 = vunpack.c.l.b16 %v4715
      %v5165 = vunpack.c.l.b16 %v4716
      %v5166 = vunpack.c.l.b16 %v4717
      %v5167 = vunpack.c.l.b16 %v4718
      %v5168 = vunpack.c.l.b16 %v4719
      %v5169 = vunpack.c.l.b16 %v4720
      %v5170 = vunpack.c.l.b16 %v4721
      %v5171 = vunpack.c.l.b16 %v4722
      %v5172 = vunpack.c.l.b16 %v4723
      %v5173 = vunpack.c.l.b16 %v4724
      %v5174 = vunpack.c.l.b16 %v4725
      %v5175 = vunpack.c.l.b16 %v4726
      %v5176 = vunpack.c.l.b16 %v4727
      %v5177 = vunpack.c.l.b16 %v4728
      %v5178 = vunpack.c.l.b16 %v4729
      %v5179 = vunpack.c.l.b16 %v4730
      %v5180 = vunpack.c.l.b16 %v4731
      %v5181 = vunpack.c.l.b16 %v4732
      %v5182 = vunpack.c.l.b16 %v4733
      %v5183 = vunpack.c.l.b16 %v4734
      %v5184 = vunpack.c.l.b16 %v4735
      %v5185 = vunpack.c.l.b16 %v4736
      %v5186 = vunpack.c.l.b16 %v4737
      %v5187 = vunpack.c.l.b16 %v4738
      %v5188 = vunpack.c.l.b16 %v4739
      %v5189 = vunpack.c.l.b16 %v4740
      %v5190 = vunpack.c.l.b16 %v4741
      %v5191 = vunpack.c.l.b16 %v4742
      %v5192 = vunpack.c.l.b16 %v4743
      %v5193 = vunpack.c.l.b16 %v4744
      %v5194 = vunpack.c.l.b16 %v4745
      %v5195 = vunpack.c.l.b16 %v4746
      %v5196 = vunpack.c.l.b16 %v4747
      %v5197 = vunpack.c.l.b16 %v4748
      %v5198 = vunpack.c.l.b16 %v4749
      %v5199 = vunpack.c.l.b16 %v4750
      %v5200 = vunpack.c.l.b16 %v4751
      %v5201 = vunpack.c.l.b16 %v4752
      %v5202 = vunpack.c.l.b16 %v4753
      %v5203 = vunpack.c.l.b16 %v4754
      %v5204 = vunpack.c.l.b16 %v4755
      %v5205 = vunpack.c.l.b16 %v4756
      %v5206 = vunpack.c.l.b16 %v4757
      %v5207 = vunpack.c.l.b16 %v4758
      %v5208 = vunpack.c.l.b16 %v4759
      %v5209 = vunpack.c.l.b16 %v4760
      %v5210 = vunpack.c.l.b16 %v4761
      %v5211 = vunpack.c.l.b16 %v4762
      %v5212 = vunpack.c.l.b16 %v4763
      %v5213 = vunpack.c.l.b16 %v4764
      %v5214 = vunpack.c.l.b16 %v4765
      %v5215 = vunpack.c.l.b16 %v4766
      %v5216 = vunpack.c.l.b16 %v4767
      %v5217 = vunpack.c.l.b16 %v4768
      %v5218 = vunpack.c.l.b16 %v4769
      %v5219 = vunpack.c.l.b16 %v4770
      %v5220 = vunpack.c.l.b16 %v4771
      %v5221 = vunpack.c.l.b16 %v4772
      %v5222 = vunpack.c.l.b16 %v4773
      %v5223 = vunpack.c.l.b16 %v4774
      %v5224 = vunpack.c.l.b16 %v4775
      %v5225 = vunpack.c.l.b16 %v4776
      %v5226 = vunpack.c.l.b16 %v4777
      %v5227 = vunpack.c.l.b16 %v4778
      %v5228 = vunpack.c.l.b16 %v4779
      %v5229 = vunpack.c.l.b16 %v4780
      %v5230 = vunpack.c.l.b16 %v4781
      %v5231 = vunpack.c.l.b16 %v4782
      %v5232 = vunpack.c.l.b16 %v4783
      %v5233 = vunpack.c.l.b16 %v4784
      %v5234 = vunpack.c.l.b16 %v4785
      %v5235 = vunpack.c.l.b16 %v4786
      %v5236 = vunpack.c.l.b16 %v4787
      %v5237 = vunpack.c.l.b16 %v4788
      %v5238 = vunpack.c.l.b16 %v4789
      %v5239 = vunpack.c.l.b16 %v4790
      %v5240 = vunpack.c.l.b16 %v4791
      %v5241 = vunpack.c.l.b16 %v4792
      %v5242 = vunpack.c.l.b16 %v4793
      %v5243 = vunpack.c.l.b16 %v4794
      %v5244 = vunpack.c.l.b16 %v4795
      %v5245 = vunpack.c.l.b16 %v4796
      %v5246 = vunpack.c.l.b16 %v4797
      %v5247 = vunpack.c.l.b16 %v4798
      %v5248 = vunpack.c.l.b16 %v4799
      %v5249 = vunpack.c.l.b16 %v4800
      %v5250 = vunpack.c.l.b16 %v4801
      %v5251 = vunpack.c.l.b16 %v4802
      %v5252 = vunpack.c.l.b16 %v4803
      %v5253 = vunpack.c.l.b16 %v4804
      %v5254 = vunpack.c.l.b16 %v4805
      %v5255 = vunpack.c.l.b16 %v4806
      %v5256 = vunpack.c.l.b16 %v4807
      %v5257 = vunpack.c.l.b16 %v4808
      %v5258 = vunpack.c.l.b16 %v4809
      %v5259 = vunpack.c.l.b16 %v4810
      %v5260 = vunpack.c.l.b16 %v4811
      %v5261 = vunpack.c.l.b16 %v4812
      %v5262 = vunpack.c.l.b16 %v4813
      %v5263 = vunpack.c.l.b16 %v4814
      %v5264 = vunpack.c.l.b16 %v4815
      %v5265 = vunpack.c.l.b16 %v4816
      %v5266 = vunpack.c.l.b16 %v4817
      %v5267 = vunpack.c.l.b16 %v4818
      %v5268 = vunpack.c.l.b16 %v4819
      %v5269 = vunpack.c.l.b16 %v4820
      %v5270 = vunpack.c.l.b16 %v4821
      %v5271 = vunpack.c.l.b16 %v4822
      %v5272 = vunpack.c.l.b16 %v4823
      %v5273 = vunpack.c.l.b16 %v4824
      %v5274 = vunpack.c.l.b16 %v4825
      %v5275 = vunpack.c.l.b16 %v4826
      %v5276 = vunpack.c.l.b16 %v4827
      %v5277 = vunpack.c.l.b16 %v4828
      %v5278 = vunpack.c.l.b16 %v4829
      %v5279 = vunpack.c.l.b16 %v4830
      %v5280 = vunpack.c.l.b16 %v4831
      %v5281 = vunpack.c.l.b16 %v4832
      %v5282 = vunpack.c.l.b16 %v4833
      %v5283 = vunpack.c.l.b16 %v4834
      %v5284 = vunpack.c.l.b16 %v4835
      %v5285 = vunpack.c.l.b16 %v4836
      %v5286 = vunpack.c.l.b16 %v4837
      %v5287 = vunpack.c.l.b16 %v4838
      %v5288 = vunpack.c.l.b16 %v4839
      %v5289 = vunpack.c.l.b16 %v4840
      %v5290 = vunpack.c.l.b16 %v4841
      %v5291 = vunpack.c.l.b16 %v4842
      %v5292 = vunpack.c.l.b16 %v4843
      %v5293 = vunpack.c.l.b16 %v4844
      %v5294 = vunpack.c.l.b16 %v4845
      %v5295 = vunpack.c.l.b16 %v4846
      %v5296 = vunpack.c.l.b16 %v4847
      %v5297 = vunpack.c.l.b16 %v4848
      %v5298 = vunpack.c.l.b16 %v4849
      %v5299 = vunpack.c.l.b16 %v4850
      %v5300 = vunpack.c.l.b16 %v4851
      %v5301 = vunpack.c.l.b16 %v4852
      %v5302 = vunpack.c.l.b16 %v4853
      %v5303 = vunpack.c.l.b16 %v4854
      %v5304 = vunpack.c.l.b16 %v4855
      %v5305 = vunpack.c.l.b16 %v4856
      %v5306 = vunpack.c.l.b16 %v4857
      %v5307 = vunpack.c.l.b16 %v4858
      %v5308 = vunpack.c.l.b16 %v4859
      %v5309 = vunpack.c.l.b16 %v4860
      %v5310 = vunpack.c.l.b16 %v4861
      %v5311 = vunpack.c.l.b16 %v4862
      %v5312 = vunpack.c.l.b16 %v4863
      %v5313 = vunpack.c.l.b16 %v4864
      %v5314 = vunpack.c.l.b16 %v4865
      %v5315 = vunpack.c.l.b16 %v4866
      %v5316 = vunpack.c.l.b16 %v4867
      %v5317 = vunpack.c.l.b16 %v4868
      %v5318 = vunpack.c.l.b16 %v4869
      %v5319 = vunpack.c.l.b16 %v4870
      %v5320 = vunpack.c.l.b16 %v4871
      %v5321 = vunpack.c.l.b16 %v4872
      %v5322 = vunpack.c.l.b16 %v4873
      %v5323 = vunpack.c.l.b16 %v4874
      %v5324 = vunpack.c.l.b16 %v4875
      %v5325 = vunpack.c.l.b16 %v4876
      %v5326 = vunpack.c.l.b16 %v4877
      %v5327 = vunpack.c.l.b16 %v4878
      %v5328 = vunpack.c.l.b16 %v4879
      %v5329 = vunpack.c.l.b16 %v4880
      %v5330 = vunpack.c.l.b16 %v4881
      %v5331 = vunpack.c.l.b16 %v4882
      %v5332 = vunpack.c.l.b16 %v4883
      %v5333 = vunpack.c.l.b16 %v4884
      %v5334 = vunpack.c.l.b16 %v4885
      %v5335 = vunpack.c.l.b16 %v4886
      %v5336 = vunpack.c.l.b16 %v4887
      %v5337 = vunpack.c.l.b16 %v4888
      %v5338 = vunpack.c.l.b16 %v4889
      %v5339 = vpack.c.b16 %v5148, %v5147
      %v5340 = vpack.c.b16 %v5150, %v5149
      %v5341 = vpack.c.b16 %v5152, %v5151
      %v5342 = vpack.c.b16 %v5154, %v5153
      %v5343 = vpack.c.b16 %v5156, %v5155
      %v5344 = vpack.c.b16 %v5158, %v5157
      %v5345 = vpack.c.b16 %v5160, %v5159
      %v5346 = vpack.c.b16 %v5162, %v5161
      %v5347 = vpack.c.b16 %v5164, %v5163
      %v5348 = vpack.c.b16 %v5166, %v5165
      %v5349 = vpack.c.b16 %v5168, %v5167
      %v5350 = vpack.c.b16 %v5170, %v5169
      %v5351 = vpack.c.b16 %v5172, %v5171
      %v5352 = vpack.c.b16 %v5174, %v5173
      %v5353 = vpack.c.b16 %v5176, %v5175
      %v5354 = vpack.c.b16 %v5178, %v5177
      %v5355 = vpack.c.b16 %v5180, %v5179
      %v5356 = vpack.c.b16 %v5182, %v5181
      %v5357 = vpack.c.b16 %v5184, %v5183
      %v5358 = vpack.c.b16 %v5186, %v5185
      %v5359 = vpack.c.b16 %v5188, %v5187
      %v5360 = vpack.c.b16 %v5190, %v5189
      %v5361 = vpack.c.b16 %v5192, %v5191
      %v5362 = vpack.c.b16 %v5194, %v5193
      %v5363 = vpack.c.b16 %v5196, %v5195
      %v5364 = vpack.c.b16 %v5198, %v5197
      %v5365 = vpack.c.b16 %v5200, %v5199
      %v5366 = vpack.c.b16 %v5202, %v5201
      %v5367 = vpack.c.b16 %v5204, %v5203
      %v5368 = vpack.c.b16 %v5206, %v5205
      %v5369 = vpack.c.b16 %v5208, %v5207
      %v5370 = vpack.c.b16 %v5210, %v5209
      %v5371 = vpack.c.b16 %v5212, %v5211
      %v5372 = vpack.c.b16 %v5214, %v5213
      %v5373 = vpack.c.b16 %v5216, %v5215
      %v5374 = vpack.c.b16 %v5218, %v5217
      %v5375 = vpack.c.b16 %v5220, %v5219
      %v5376 = vpack.c.b16 %v5222, %v5221
      %v5377 = vpack.c.b16 %v5224, %v5223
      %v5378 = vpack.c.b16 %v5226, %v5225
      %v5379 = vpack.c.b16 %v5228, %v5227
      %v5380 = vpack.c.b16 %v5230, %v5229
      %v5381 = vpack.c.b16 %v5232, %v5231
      %v5382 = vpack.c.b16 %v5234, %v5233
      %v5383 = vpack.c.b16 %v5236, %v5235
      %v5384 = vpack.c.b16 %v5238, %v5237
      %v5385 = vpack.c.b16 %v5240, %v5239
      %v5386 = vpack.c.b16 %v5242, %v5241
      %v5387 = vpack.c.b16 %v5244, %v5243
      %v5388 = vpack.c.b16 %v5246, %v5245
      %v5389 = vpack.c.b16 %v5248, %v5247
      %v5390 = vpack.c.b16 %v5250, %v5249
      %v5391 = vpack.c.b16 %v5252, %v5251
      %v5392 = vpack.c.b16 %v5254, %v5253
      %v5393 = vpack.c.b16 %v5256, %v5255
      %v5394 = vpack.c.b16 %v5258, %v5257
      %v5395 = vpack.c.b16 %v5260, %v5259
      %v5396 = vpack.c.b16 %v5262, %v5261
      %v5397 = vpack.c.b16 %v5264, %v5263
      %v5398 = vpack.c.b16 %v5266, %v5265
      %v5399 = vpack.c.b16 %v5268, %v5267
      %v5400 = vpack.c.b16 %v5270, %v5269
      %v5401 = vpack.c.b16 %v5272, %v5271
      %v5402 = vpack.c.b16 %v5274, %v5273
      %v5403 = vpack.c.b16 %v5276, %v5275
      %v5404 = vpack.c.b16 %v5278, %v5277
      %v5405 = vpack.c.b16 %v5280, %v5279
      %v5406 = vpack.c.b16 %v5282, %v5281
      %v5407 = vpack.c.b16 %v5284, %v5283
      %v5408 = vpack.c.b16 %v5286, %v5285
      %v5409 = vpack.c.b16 %v5288, %v5287
      %v5410 = vpack.c.b16 %v5290, %v5289
      %v5411 = vpack.c.b16 %v5292, %v5291
      %v5412 = vpack.c.b16 %v5294, %v5293
      %v5413 = vpack.c.b16 %v5296, %v5295
      %v5414 = vpack.c.b16 %v5298, %v5297
      %v5415 = vpack.c.b16 %v5300, %v5299
      %v5416 = vpack.c.b16 %v5302, %v5301
      %v5417 = vpack.c.b16 %v5304, %v5303
      %v5418 = vpack.c.b16 %v5306, %v5305
      %v5419 = vpack.c.b16 %v5308, %v5307
      %v5420 = vpack.c.b16 %v5310, %v5309
      %v5421 = vpack.c.b16 %v5312, %v5311
      %v5422 = vpack.c.b16 %v5314, %v5313
      %v5423 = vpack.c.b16 %v5316, %v5315
      %v5424 = vpack.c.b16 %v5318, %v5317
      %v5425 = vpack.c.b16 %v5320, %v5319
      %v5426 = vpack.c.b16 %v5322, %v5321
      %v5427 = vpack.c.b16 %v5324, %v5323
      %v5428 = vpack.c.b16 %v5326, %v5325
      %v5429 = vpack.c.b16 %v5328, %v5327
      %v5430 = vpack.c.b16 %v5330, %v5329
      %v5431 = vpack.c.b16 %v5332, %v5331
      %v5432 = vpack.c.b16 %v5334, %v5333
      %v5433 = vpack.c.b16 %v5336, %v5335
      %v5434 = vpack.c.b16 %v5338, %v5337
      %5531 = vmatprep.subr.bf16.mxu0 0
      %5532 = vmatpush1.bf16.msra.mxu0 %v5339
      %5533 = vmatprep.subr.bf16.mxu0 0
      %5534 = vmatpush1.bf16.msra.mxu0 %v5340
      %5535 = vmatprep.subr.bf16.mxu0 0
      %5536 = vmatpush1.bf16.msra.mxu0 %v5341
      %5537 = vmatprep.subr.bf16.mxu0 0
      %5538 = vmatpush1.bf16.msra.mxu0 %v5342
      %5539 = vmatprep.subr.bf16.mxu0 0
      %5540 = vmatpush1.bf16.msra.mxu0 %v5343
      %5541 = vmatprep.subr.bf16.mxu0 0
      %5542 = vmatpush1.bf16.msra.mxu0 %v5344
      %5543 = vmatprep.subr.bf16.mxu0 0
      %5544 = vmatpush1.bf16.msra.mxu0 %v5345
      %5545 = vmatprep.subr.bf16.mxu0 0
      %5546 = vmatpush1.bf16.msra.mxu0 %v5346
      %5547 = vmatprep.subr.bf16.mxu0 0
      %5548 = vmatpush1.bf16.msra.mxu0 %v5347
      %5549 = vmatprep.subr.bf16.mxu0 0
      %5550 = vmatpush1.bf16.msra.mxu0 %v5348
      %5551 = vmatprep.subr.bf16.mxu0 0
      %5552 = vmatpush1.bf16.msra.mxu0 %v5349
      %5553 = vmatprep.subr.bf16.mxu0 0
      %5554 = vmatpush1.bf16.msra.mxu0 %v5350
      %5555 = vmatprep.subr.bf16.mxu0 0
      %5556 = vmatpush1.bf16.msra.mxu0 %v5351
      %5557 = vmatprep.subr.bf16.mxu0 0
      %5558 = vmatpush1.bf16.msra.mxu0 %v5352
      %5559 = vmatprep.subr.bf16.mxu0 0
      %5560 = vmatpush1.bf16.msra.mxu0 %v5353
      %5561 = vmatprep.subr.bf16.mxu0 0
      %5562 = vmatpush1.bf16.msra.mxu0 %v5354
      %5563 = vmatprep.mubr.bf16.mxu0 %v4932
      %5564 = vmatmul.mubr.bf16.gmra.mrb[0].mxu0 %v4931
      %v5565 = vpop.f32.mrb[0].mxu0
      %v5566 = vadd.f32 %v4894, %v5565
      %v5567 = vpop.f32.mrb[0].mxu0
      %v5568 = vpop.f32.mrb[0].mxu0
      %v5569 = vadd.f32 %v4894, %v5568
      %v5570 = vpop.f32.mrb[0].mxu0
      %5571 = vdwg.mxu0
      %5572 = vmatprep.subr.bf16.mxu0 0
      %5573 = vmatpush1.bf16.msra.mxu0 %v5355
      %5574 = vmatprep.subr.bf16.mxu0 0
      %5575 = vmatpush1.bf16.msra.mxu0 %v5356
      %5576 = vmatprep.subr.bf16.mxu0 0
      %5577 = vmatpush1.bf16.msra.mxu0 %v5357
      %5578 = vmatprep.subr.bf16.mxu0 0
      %5579 = vmatpush1.bf16.msra.mxu0 %v5358
      %5580 = vmatprep.subr.bf16.mxu0 0
      %5581 = vmatpush1.bf16.msra.mxu0 %v5359
      %5582 = vmatprep.subr.bf16.mxu0 0
      %5583 = vmatpush1.bf16.msra.mxu0 %v5360
      %5584 = vmatprep.subr.bf16.mxu0 0
      %5585 = vmatpush1.bf16.msra.mxu0 %v5361
      %5586 = vmatprep.subr.bf16.mxu0 0
      %5587 = vmatpush1.bf16.msra.mxu0 %v5362
      %5588 = vmatprep.subr.bf16.mxu0 0
      %5589 = vmatpush1.bf16.msra.mxu0 %v5363
      %5590 = vmatprep.subr.bf16.mxu0 0
      %5591 = vmatpush1.bf16.msra.mxu0 %v5364
      %5592 = vmatprep.subr.bf16.mxu0 0
      %5593 = vmatpush1.bf16.msra.mxu0 %v5365
      %5594 = vmatprep.subr.bf16.mxu0 0
      %5595 = vmatpush1.bf16.msra.mxu0 %v5366
      %5596 = vmatprep.subr.bf16.mxu0 0
      %5597 = vmatpush1.bf16.msra.mxu0 %v5367
      %5598 = vmatprep.subr.bf16.mxu0 0
      %5599 = vmatpush1.bf16.msra.mxu0 %v5368
      %5600 = vmatprep.subr.bf16.mxu0 0
      %5601 = vmatpush1.bf16.msra.mxu0 %v5369
      %5602 = vmatprep.subr.bf16.mxu0 0
      %5603 = vmatpush1.bf16.msra.mxu0 %v5370
      %5604 = vmatprep.mubr.bf16.mxu0 %v4934
      %5605 = vmatmul.mubr.bf16.gmra.mrb[0].mxu0 %v4933
      %v5606 = vpop.f32.mrb[0].mxu0
      %v5607 = vadd.f32 %v5566, %v5606
      %v5608 = vpop.f32.mrb[0].mxu0
      %v5609 = vpop.f32.mrb[0].mxu0
      %v5610 = vadd.f32 %v5569, %v5609
      %v5611 = vpop.f32.mrb[0].mxu0
      %5612 = vdwg.mxu0
      %5613 = vmatprep.subr.bf16.mxu0 0
      %5614 = vmatpush1.bf16.msra.mxu0 %v5371
      %5615 = vmatprep.subr.bf16.mxu0 0
      %5616 = vmatpush1.bf16.msra.mxu0 %v5372
      %5617 = vmatprep.subr.bf16.mxu0 0
      %5618 = vmatpush1.bf16.msra.mxu0 %v5373
      %5619 = vmatprep.subr.bf16.mxu0 0
      %5620 = vmatpush1.bf16.msra.mxu0 %v5374
      %5621 = vmatprep.subr.bf16.mxu0 0
      %5622 = vmatpush1.bf16.msra.mxu0 %v5375
      %5623 = vmatprep.subr.bf16.mxu0 0
      %5624 = vmatpush1.bf16.msra.mxu0 %v5376
      %5625 = vmatprep.subr.bf16.mxu0 0
      %5626 = vmatpush1.bf16.msra.mxu0 %v5377
      %5627 = vmatprep.subr.bf16.mxu0 0
      %5628 = vmatpush1.bf16.msra.mxu0 %v5378
      %5629 = vmatprep.subr.bf16.mxu0 0
      %5630 = vmatpush1.bf16.msra.mxu0 %v5379
      %5631 = vmatprep.subr.bf16.mxu0 0
      %5632 = vmatpush1.bf16.msra.mxu0 %v5380
      %5633 = vmatprep.subr.bf16.mxu0 0
      %5634 = vmatpush1.bf16.msra.mxu0 %v5381
      %5635 = vmatprep.subr.bf16.mxu0 0
      %5636 = vmatpush1.bf16.msra.mxu0 %v5382
      %5637 = vmatprep.subr.bf16.mxu0 0
      %5638 = vmatpush1.bf16.msra.mxu0 %v5383
      %5639 = vmatprep.subr.bf16.mxu0 0
      %5640 = vmatpush1.bf16.msra.mxu0 %v5384
      %5641 = vmatprep.subr.bf16.mxu0 0
      %5642 = vmatpush1.bf16.msra.mxu0 %v5385
      %5643 = vmatprep.subr.bf16.mxu0 0
      %5644 = vmatpush1.bf16.msra.mxu0 %v5386
      %5645 = vmatprep.mubr.bf16.mxu0 %v4936
      %5646 = vmatmul.mubr.bf16.gmra.mrb[0].mxu0 %v4935
      %v5647 = vpop.f32.mrb[0].mxu0
      %v5648 = vadd.f32 %v5607, %v5647
      %v5649 = vpop.f32.mrb[0].mxu0
      %v5650 = vpop.f32.mrb[0].mxu0
      %v5651 = vadd.f32 %v5610, %v5650
      %v5652 = vpop.f32.mrb[0].mxu0
      %5653 = vdwg.mxu0
      %5654 = vmatprep.subr.bf16.mxu0 0
      %5655 = vmatpush1.bf16.msra.mxu0 %v5387
      %5656 = vmatprep.subr.bf16.mxu0 0
      %5657 = vmatpush1.bf16.msra.mxu0 %v5388
      %5658 = vmatprep.subr.bf16.mxu0 0
      %5659 = vmatpush1.bf16.msra.mxu0 %v5389
      %5660 = vmatprep.subr.bf16.mxu0 0
      %5661 = vmatpush1.bf16.msra.mxu0 %v5390
      %5662 = vmatprep.subr.bf16.mxu0 0
      %5663 = vmatpush1.bf16.msra.mxu0 %v5391
      %5664 = vmatprep.subr.bf16.mxu0 0
      %5665 = vmatpush1.bf16.msra.mxu0 %v5392
      %5666 = vmatprep.subr.bf16.mxu0 0
      %5667 = vmatpush1.bf16.msra.mxu0 %v5393
      %5668 = vmatprep.subr.bf16.mxu0 0
      %5669 = vmatpush1.bf16.msra.mxu0 %v5394
      %5670 = vmatprep.subr.bf16.mxu0 0
      %5671 = vmatpush1.bf16.msra.mxu0 %v5395
      %5672 = vmatprep.subr.bf16.mxu0 0
      %5673 = vmatpush1.bf16.msra.mxu0 %v5396
      %5674 = vmatprep.subr.bf16.mxu0 0
      %5675 = vmatpush1.bf16.msra.mxu0 %v5397
      %5676 = vmatprep.subr.bf16.mxu0 0
      %5677 = vmatpush1.bf16.msra.mxu0 %v5398
      %5678 = vmatprep.subr.bf16.mxu0 0
      %5679 = vmatpush1.bf16.msra.mxu0 %v5399
      %5680 = vmatprep.subr.bf16.mxu0 0
      %5681 = vmatpush1.bf16.msra.mxu0 %v5400
      %5682 = vmatprep.subr.bf16.mxu0 0
      %5683 = vmatpush1.bf16.msra.mxu0 %v5401
      %5684 = vmatprep.subr.bf16.mxu0 0
      %5685 = vmatpush1.bf16.msra.mxu0 %v5402
      %5686 = vmatprep.mubr.bf16.mxu0 %v4938
      %5687 = vmatmul.mubr.bf16.gmra.mrb[0].mxu0 %v4937
      %v5688 = vpop.f32.mrb[0].mxu0
      %v5689 = vadd.f32 %v5648, %v5688
      %v5690 = vpop.f32.mrb[0].mxu0
      %v5691 = vpop.f32.mrb[0].mxu0
      %v5692 = vadd.f32 %v5651, %v5691
      %v5693 = vpop.f32.mrb[0].mxu0
      %5694 = vdwg.mxu0
      %5695 = vmatprep.subr.bf16.mxu0 0
      %5696 = vmatpush1.bf16.msra.mxu0 %v5403
      %5697 = vmatprep.subr.bf16.mxu0 0
      %5698 = vmatpush1.bf16.msra.mxu0 %v5404
      %5699 = vmatprep.subr.bf16.mxu0 0
      %5700 = vmatpush1.bf16.msra.mxu0 %v5405
      %5701 = vmatprep.subr.bf16.mxu0 0
      %5702 = vmatpush1.bf16.msra.mxu0 %v5406
      %5703 = vmatprep.subr.bf16.mxu0 0
      %5704 = vmatpush1.bf16.msra.mxu0 %v5407
      %5705 = vmatprep.subr.bf16.mxu0 0
      %5706 = vmatpush1.bf16.msra.mxu0 %v5408
      %5707 = vmatprep.subr.bf16.mxu0 0
      %5708 = vmatpush1.bf16.msra.mxu0 %v5409
      %5709 = vmatprep.subr.bf16.mxu0 0
      %5710 = vmatpush1.bf16.msra.mxu0 %v5410
      %5711 = vmatprep.subr.bf16.mxu0 0
      %5712 = vmatpush1.bf16.msra.mxu0 %v5411
      %5713 = vmatprep.subr.bf16.mxu0 0
      %5714 = vmatpush1.bf16.msra.mxu0 %v5412
      %5715 = vmatprep.subr.bf16.mxu0 0
      %5716 = vmatpush1.bf16.msra.mxu0 %v5413
      %5717 = vmatprep.subr.bf16.mxu0 0
      %5718 = vmatpush1.bf16.msra.mxu0 %v5414
      %5719 = vmatprep.subr.bf16.mxu0 0
      %5720 = vmatpush1.bf16.msra.mxu0 %v5415
      %5721 = vmatprep.subr.bf16.mxu0 0
      %5722 = vmatpush1.bf16.msra.mxu0 %v5416
      %5723 = vmatprep.subr.bf16.mxu0 0
      %5724 = vmatpush1.bf16.msra.mxu0 %v5417
      %5725 = vmatprep.subr.bf16.mxu0 0
      %5726 = vmatpush1.bf16.msra.mxu0 %v5418
      %5727 = vmatprep.mubr.bf16.mxu0 %v4940
      %5728 = vmatmul.mubr.bf16.gmra.mrb[0].mxu0 %v4939
      %v5729 = vpop.f32.mrb[0].mxu0
      %v5730 = vadd.f32 %v5689, %v5729
      %v5731 = vpop.f32.mrb[0].mxu0
      %v5732 = vpop.f32.mrb[0].mxu0
      %v5733 = vadd.f32 %v5692, %v5732
      %v5734 = vpop.f32.mrb[0].mxu0
      %5735 = vdwg.mxu0
      %5736 = vmatprep.subr.bf16.mxu0 0
      %5737 = vmatpush1.bf16.msra.mxu0 %v5419
      %5738 = vmatprep.subr.bf16.mxu0 0
      %5739 = vmatpush1.bf16.msra.mxu0 %v5420
      %5740 = vmatprep.subr.bf16.mxu0 0
      %5741 = vmatpush1.bf16.msra.mxu0 %v5421
      %5742 = vmatprep.subr.bf16.mxu0 0
      %5743 = vmatpush1.bf16.msra.mxu0 %v5422
      %5744 = vmatprep.subr.bf16.mxu0 0
      %5745 = vmatpush1.bf16.msra.mxu0 %v5423
      %5746 = vmatprep.subr.bf16.mxu0 0
      %5747 = vmatpush1.bf16.msra.mxu0 %v5424
      %5748 = vmatprep.subr.bf16.mxu0 0
      %5749 = vmatpush1.bf16.msra.mxu0 %v5425
      %5750 = vmatprep.subr.bf16.mxu0 0
      %5751 = vmatpush1.bf16.msra.mxu0 %v5426
      %5752 = vmatprep.subr.bf16.mxu0 0
      %5753 = vmatpush1.bf16.msra.mxu0 %v5427
      %5754 = vmatprep.subr.bf16.mxu0 0
      %5755 = vmatpush1.bf16.msra.mxu0 %v5428
      %5756 = vmatprep.subr.bf16.mxu0 0
      %5757 = vmatpush1.bf16.msra.mxu0 %v5429
      %5758 = vmatprep.subr.bf16.mxu0 0
      %5759 = vmatpush1.bf16.msra.mxu0 %v5430
      %5760 = vmatprep.subr.bf16.mxu0 0
      %5761 = vmatpush1.bf16.msra.mxu0 %v5431
      %5762 = vmatprep.subr.bf16.mxu0 0
      %5763 = vmatpush1.bf16.msra.mxu0 %v5432
      %5764 = vmatprep.subr.bf16.mxu0 0
      %5765 = vmatpush1.bf16.msra.mxu0 %v5433
      %5766 = vmatprep.subr.bf16.mxu0 0
      %5767 = vmatpush1.bf16.msra.mxu0 %v5434
      %5768 = vmatprep.mubr.bf16.mxu0 %v4942
      %5769 = vmatmul.mubr.bf16.gmra.mrb[0].mxu0 %v4941
      %v5770 = vpop.f32.mrb[0].mxu0
      %v5771 = vadd.f32 %v5730, %v5770
      %v5772 = vpop.f32.mrb[0].mxu0
      %v5773 = vpop.f32.mrb[0].mxu0
      %v5774 = vadd.f32 %v5733, %v5773
      %v5775 = vpop.f32.mrb[0].mxu0
      %5776 = vdwg.mxu0
      %v5777 = vmax.f32 %v5771, 0.0
      %v5778 = vmax.f32 %v5774, 0.0
      %v5779 = vmul.f32 %v5777, %v2399
      %v5780 = vmul.f32 %v5778, %v2403
      %v5781 = vsel %vm1291, %v5779, -inf
      %v5782 = vsel %vm1291, %v5780, -inf
      %v5783 = vmax.f32 %v5781, %v5782
      %v5784 = vrot.slane %v5783, 4
      %v5785 = vmax.f32 %v5783, %v5784
      %v5786 = vrot.slane %v5785, 2
      %v5787 = vmax.f32 %v5785, %v5786
      %v5788 = vrot.slane %v5787, 1
      %v5789 = vmax.f32 %v5787, %v5788
      %v5790 = vld [vmem:[%s10 + $0x4] sm:$0x1]
      %v5791 = vmul.f32 %v5789, %v5790
      %v5792 = vadd.f32 %v4685, %v5791
      %v5793 = vld [vmem:[%s428] sm:$0xff]
      %v5794 = vld [vmem:[%s428 + $0x8] sm:$0xff]
      %v5795 = vld [vmem:[%s428 + $0x10] sm:$0xff]
      %v5796 = vld [vmem:[%s428 + $0x18] sm:$0xff]
      %v5797 = vld [vmem:[%s428 + $0x20] sm:$0xff]
      %v5798 = vld [vmem:[%s428 + $0x28] sm:$0xff]
      %v5799 = vld [vmem:[%s428 + $0x30] sm:$0xff]
      %v5800 = vld [vmem:[%s428 + $0x38] sm:$0xf]
      %v5801 = vld [vmem:[%s428 + $0x3c] sm:$0xff]
      %v5802 = vld [vmem:[%s428 + $0x44] sm:$0xff]
      %v5803 = vld [vmem:[%s428 + $0x4c] sm:$0xff]
      %v5804 = vld [vmem:[%s428 + $0x54] sm:$0xff]
      %v5805 = vld [vmem:[%s428 + $0x5c] sm:$0xff]
      %v5806 = vld [vmem:[%s428 + $0x64] sm:$0xff]
      %v5807 = vld [vmem:[%s428 + $0x6c] sm:$0xff]
      %v5808 = vld [vmem:[%s428 + $0x74] sm:$0xf]
      %v5809 = vld [vmem:[%s7] sm:$0xf]
      %v5810 = vld [vmem:[%s7 + $0x4] sm:$0xf]
      %v5811 = vld [vmem:[%s7 + $0x8] sm:$0xf]
      %v5812 = vld [vmem:[%s7 + $0xc] sm:$0xf]
      %v5813 = vld [vmem:[%s7 + $0x10] sm:$0xf]
      %v5814 = vld [vmem:[%s7 + $0x14] sm:$0xf]
      %v5815 = vld [vmem:[%s7 + $0x18] sm:$0xf]
      %v5816 = vld [vmem:[%s7 + $0x1c] sm:$0xf]
      %v5817 = vld [vmem:[%s7 + $0x20] sm:$0xf]
      %v5818 = vld [vmem:[%s7 + $0x24] sm:$0xf]
      %v5819 = vld [vmem:[%s7 + $0x28] sm:$0xf]
      %v5820 = vld [vmem:[%s7 + $0x2c] sm:$0xf]
      %v5821 = vld [vmem:[%s7 + $0x30] sm:$0xf]
      %v5822 = vld [vmem:[%s7 + $0x34] sm:$0xf]
      %v5823 = vld [vmem:[%s7 + $0x38] sm:$0xf]
      %v5824 = vld [vmem:[%s7 + $0x3c] sm:$0xf]
      %v5825 = vld [vmem:[%s7 + $0x40] sm:$0xf]
      %v5826 = vld [vmem:[%s7 + $0x44] sm:$0xf]
      %v5827 = vld [vmem:[%s7 + $0x48] sm:$0xf]
      %v5828 = vld [vmem:[%s7 + $0x4c] sm:$0xf]
      %v5829 = vld [vmem:[%s7 + $0x50] sm:$0xf]
      %v5830 = vld [vmem:[%s7 + $0x54] sm:$0xf]
      %v5831 = vld [vmem:[%s7 + $0x58] sm:$0xf]
      %v5832 = vld [vmem:[%s7 + $0x5c] sm:$0xf]
      %v5833 = vld [vmem:[%s7 + $0x60] sm:$0xf]
      %v5834 = vld [vmem:[%s7 + $0x64] sm:$0xf]
      %v5835 = vld [vmem:[%s7 + $0x68] sm:$0xf]
      %v5836 = vld [vmem:[%s7 + $0x6c] sm:$0xf]
      %v5837 = vld [vmem:[%s7 + $0x70] sm:$0xf]
      %v5838 = vld [vmem:[%s7 + $0x74] sm:$0xf]
      %v5839 = vld [vmem:[%s7 + $0x78] sm:$0xf]
      %v5840 = vld [vmem:[%s7 + $0x7c] sm:$0xf]
      %v5841 = vld [vmem:[%s7 + $0x80] sm:$0xf]
      %v5842 = vld [vmem:[%s7 + $0x84] sm:$0xf]
      %v5843 = vld [vmem:[%s7 + $0x88] sm:$0xf]
      %v5844 = vld [vmem:[%s7 + $0x8c] sm:$0xf]
      %v5845 = vld [vmem:[%s7 + $0x90] sm:$0xf]
      %v5846 = vld [vmem:[%s7 + $0x94] sm:$0xf]
      %v5847 = vld [vmem:[%s7 + $0x98] sm:$0xf]
      %v5848 = vld [vmem:[%s7 + $0x9c] sm:$0xf]
      %v5849 = vld [vmem:[%s7 + $0xa0] sm:$0xf]
      %v5850 = vld [vmem:[%s7 + $0xa4] sm:$0xf]
      %v5851 = vld [vmem:[%s7 + $0xa8] sm:$0xf]
      %v5852 = vld [vmem:[%s7 + $0xac] sm:$0xf]
      %v5853 = vld [vmem:[%s7 + $0xb0] sm:$0xf]
      %v5854 = vld [vmem:[%s7 + $0xb4] sm:$0xf]
      %v5855 = vld [vmem:[%s7 + $0xb8] sm:$0xf]
      %v5856 = vld [vmem:[%s7 + $0xbc] sm:$0xf]
      %v5857 = vld [vmem:[%s7 + $0xc0] sm:$0xf]
      %v5858 = vld [vmem:[%s7 + $0xc4] sm:$0xf]
      %v5859 = vld [vmem:[%s7 + $0xc8] sm:$0xf]
      %v5860 = vld [vmem:[%s7 + $0xcc] sm:$0xf]
      %v5861 = vld [vmem:[%s7 + $0xd0] sm:$0xf]
      %v5862 = vld [vmem:[%s7 + $0xd4] sm:$0xf]
      %v5863 = vld [vmem:[%s7 + $0xd8] sm:$0xf]
      %v5864 = vld [vmem:[%s7 + $0xdc] sm:$0xf]
      %v5865 = vld [vmem:[%s7 + $0xe0] sm:$0xf]
      %v5866 = vld [vmem:[%s7 + $0xe4] sm:$0xf]
      %v5867 = vld [vmem:[%s7 + $0xe8] sm:$0xf]
      %v5868 = vld [vmem:[%s7 + $0xec] sm:$0xf]
      %v5869 = vld [vmem:[%s7 + $0xf0] sm:$0xf]
      %v5870 = vld [vmem:[%s7 + $0xf4] sm:$0xf]
      %v5871 = vld [vmem:[%s7 + $0xf8] sm:$0xf]
      %v5872 = vld [vmem:[%s7 + $0xfc] sm:$0xf]
      %v5873 = vld [vmem:[%s7 + $0x100] sm:$0xf]
      %v5874 = vld [vmem:[%s7 + $0x104] sm:$0xf]
      %v5875 = vld [vmem:[%s7 + $0x108] sm:$0xf]
      %v5876 = vld [vmem:[%s7 + $0x10c] sm:$0xf]
      %v5877 = vld [vmem:[%s7 + $0x110] sm:$0xf]
      %v5878 = vld [vmem:[%s7 + $0x114] sm:$0xf]
      %v5879 = vld [vmem:[%s7 + $0x118] sm:$0xf]
      %v5880 = vld [vmem:[%s7 + $0x11c] sm:$0xf]
      %v5881 = vld [vmem:[%s7 + $0x120] sm:$0xf]
      %v5882 = vld [vmem:[%s7 + $0x124] sm:$0xf]
      %v5883 = vld [vmem:[%s7 + $0x128] sm:$0xf]
      %v5884 = vld [vmem:[%s7 + $0x12c] sm:$0xf]
      %v5885 = vld [vmem:[%s7 + $0x130] sm:$0xf]
      %v5886 = vld [vmem:[%s7 + $0x134] sm:$0xf]
      %v5887 = vld [vmem:[%s7 + $0x138] sm:$0xf]
      %v5888 = vld [vmem:[%s7 + $0x13c] sm:$0xf]
      %v5889 = vld [vmem:[%s7 + $0x140] sm:$0xf]
      %v5890 = vld [vmem:[%s7 + $0x144] sm:$0xf]
      %v5891 = vld [vmem:[%s7 + $0x148] sm:$0xf]
      %v5892 = vld [vmem:[%s7 + $0x14c] sm:$0xf]
      %v5893 = vld [vmem:[%s7 + $0x150] sm:$0xf]
      %v5894 = vld [vmem:[%s7 + $0x154] sm:$0xf]
      %v5895 = vld [vmem:[%s7 + $0x158] sm:$0xf]
      %v5896 = vld [vmem:[%s7 + $0x15c] sm:$0xf]
      %v5897 = vld [vmem:[%s7 + $0x160] sm:$0xf]
      %v5898 = vld [vmem:[%s7 + $0x164] sm:$0xf]
      %v5899 = vld [vmem:[%s7 + $0x168] sm:$0xf]
      %v5900 = vld [vmem:[%s7 + $0x16c] sm:$0xf]
      %v5901 = vld [vmem:[%s7 + $0x170] sm:$0xf]
      %v5902 = vld [vmem:[%s7 + $0x174] sm:$0xf]
      %v5903 = vld [vmem:[%s7 + $0x178] sm:$0xf]
      %v5904 = vld [vmem:[%s7 + $0x17c] sm:$0xf]
      %v5905 = vld [vmem:[%s7 + $0x180] sm:$0xf]
      %v5906 = vld [vmem:[%s7 + $0x184] sm:$0xf]
      %v5907 = vld [vmem:[%s7 + $0x188] sm:$0xf]
      %v5908 = vld [vmem:[%s7 + $0x18c] sm:$0xf]
      %v5909 = vld [vmem:[%s7 + $0x190] sm:$0xf]
      %v5910 = vld [vmem:[%s7 + $0x194] sm:$0xf]
      %v5911 = vld [vmem:[%s7 + $0x198] sm:$0xf]
      %v5912 = vld [vmem:[%s7 + $0x19c] sm:$0xf]
      %v5913 = vld [vmem:[%s7 + $0x1a0] sm:$0xf]
      %v5914 = vld [vmem:[%s7 + $0x1a4] sm:$0xf]
      %v5915 = vld [vmem:[%s7 + $0x1a8] sm:$0xf]
      %v5916 = vld [vmem:[%s7 + $0x1ac] sm:$0xf]
      %v5917 = vld [vmem:[%s7 + $0x1b0] sm:$0xf]
      %v5918 = vld [vmem:[%s7 + $0x1b4] sm:$0xf]
      %v5919 = vld [vmem:[%s7 + $0x1b8] sm:$0xf]
      %v5920 = vld [vmem:[%s7 + $0x1bc] sm:$0xf]
      %v5921 = vld [vmem:[%s7 + $0x1c0] sm:$0xf]
      %v5922 = vld [vmem:[%s7 + $0x1c4] sm:$0xf]
      %v5923 = vld [vmem:[%s7 + $0x1c8] sm:$0xf]
      %v5924 = vld [vmem:[%s7 + $0x1cc] sm:$0xf]
      %v5925 = vld [vmem:[%s7 + $0x1d0] sm:$0xf]
      %v5926 = vld [vmem:[%s7 + $0x1d4] sm:$0xf]
      %v5927 = vld [vmem:[%s7 + $0x1d8] sm:$0xf]
      %v5928 = vld [vmem:[%s7 + $0x1dc] sm:$0xf]
      %v5929 = vld [vmem:[%s7 + $0x1e0] sm:$0xf]
      %v5930 = vld [vmem:[%s7 + $0x1e4] sm:$0xf]
      %v5931 = vld [vmem:[%s7 + $0x1e8] sm:$0xf]
      %v5932 = vld [vmem:[%s7 + $0x1ec] sm:$0xf]
      %v5933 = vld [vmem:[%s7 + $0x1f0] sm:$0xf]
      %v5934 = vld [vmem:[%s7 + $0x1f4] sm:$0xf]
      %v5935 = vld [vmem:[%s7 + $0x1f8] sm:$0xf]
      %v5936 = vld [vmem:[%s7 + $0x1fc] sm:$0xf]
      %v5937 = vld [vmem:[%s7 + $0x200] sm:$0xf]
      %v5938 = vld [vmem:[%s7 + $0x204] sm:$0xf]
      %v5939 = vld [vmem:[%s7 + $0x208] sm:$0xf]
      %v5940 = vld [vmem:[%s7 + $0x20c] sm:$0xf]
      %v5941 = vld [vmem:[%s7 + $0x210] sm:$0xf]
      %v5942 = vld [vmem:[%s7 + $0x214] sm:$0xf]
      %v5943 = vld [vmem:[%s7 + $0x218] sm:$0xf]
      %v5944 = vld [vmem:[%s7 + $0x21c] sm:$0xf]
      %v5945 = vld [vmem:[%s7 + $0x220] sm:$0xf]
      %v5946 = vld [vmem:[%s7 + $0x224] sm:$0xf]
      %v5947 = vld [vmem:[%s7 + $0x228] sm:$0xf]
      %v5948 = vld [vmem:[%s7 + $0x22c] sm:$0xf]
      %v5949 = vld [vmem:[%s7 + $0x230] sm:$0xf]
      %v5950 = vld [vmem:[%s7 + $0x234] sm:$0xf]
      %v5951 = vld [vmem:[%s7 + $0x238] sm:$0xf]
      %v5952 = vld [vmem:[%s7 + $0x23c] sm:$0xf]
      %v5953 = vld [vmem:[%s7 + $0x240] sm:$0xf]
      %v5954 = vld [vmem:[%s7 + $0x244] sm:$0xf]
      %v5955 = vld [vmem:[%s7 + $0x248] sm:$0xf]
      %v5956 = vld [vmem:[%s7 + $0x24c] sm:$0xf]
      %v5957 = vld [vmem:[%s7 + $0x250] sm:$0xf]
      %v5958 = vld [vmem:[%s7 + $0x254] sm:$0xf]
      %v5959 = vld [vmem:[%s7 + $0x258] sm:$0xf]
      %v5960 = vld [vmem:[%s7 + $0x25c] sm:$0xf]
      %v5961 = vld [vmem:[%s7 + $0x260] sm:$0xf]
      %v5962 = vld [vmem:[%s7 + $0x264] sm:$0xf]
      %v5963 = vld [vmem:[%s7 + $0x268] sm:$0xf]
      %v5964 = vld [vmem:[%s7 + $0x26c] sm:$0xf]
      %v5965 = vld [vmem:[%s7 + $0x270] sm:$0xf]
      %v5966 = vld [vmem:[%s7 + $0x274] sm:$0xf]
      %v5967 = vld [vmem:[%s7 + $0x278] sm:$0xf]
      %v5968 = vld [vmem:[%s7 + $0x27c] sm:$0xf]
      %v5969 = vld [vmem:[%s7 + $0x280] sm:$0xf]
      %v5970 = vld [vmem:[%s7 + $0x284] sm:$0xf]
      %v5971 = vld [vmem:[%s7 + $0x288] sm:$0xf]
      %v5972 = vld [vmem:[%s7 + $0x28c] sm:$0xf]
      %v5973 = vld [vmem:[%s7 + $0x290] sm:$0xf]
      %v5974 = vld [vmem:[%s7 + $0x294] sm:$0xf]
      %v5975 = vld [vmem:[%s7 + $0x298] sm:$0xf]
      %v5976 = vld [vmem:[%s7 + $0x29c] sm:$0xf]
      %v5977 = vld [vmem:[%s7 + $0x2a0] sm:$0xf]
      %v5978 = vld [vmem:[%s7 + $0x2a4] sm:$0xf]
      %v5979 = vld [vmem:[%s7 + $0x2a8] sm:$0xf]
      %v5980 = vld [vmem:[%s7 + $0x2ac] sm:$0xf]
      %v5981 = vld [vmem:[%s7 + $0x2b0] sm:$0xf]
      %v5982 = vld [vmem:[%s7 + $0x2b4] sm:$0xf]
      %v5983 = vld [vmem:[%s7 + $0x2b8] sm:$0xf]
      %v5984 = vld [vmem:[%s7 + $0x2bc] sm:$0xf]
      %v5985 = vld [vmem:[%s7 + $0x2c0] sm:$0xf]
      %v5986 = vld [vmem:[%s7 + $0x2c4] sm:$0xf]
      %v5987 = vld [vmem:[%s7 + $0x2c8] sm:$0xf]
      %v5988 = vld [vmem:[%s7 + $0x2cc] sm:$0xf]
      %v5989 = vld [vmem:[%s7 + $0x2d0] sm:$0xf]
      %v5990 = vld [vmem:[%s7 + $0x2d4] sm:$0xf]
      %v5991 = vld [vmem:[%s7 + $0x2d8] sm:$0xf]
      %v5992 = vld [vmem:[%s7 + $0x2dc] sm:$0xf]
      %v5993 = vld [vmem:[%s7 + $0x2e0] sm:$0xf]
      %v5994 = vld [vmem:[%s7 + $0x2e4] sm:$0xf]
      %v5995 = vld [vmem:[%s7 + $0x2e8] sm:$0xf]
      %v5996 = vld [vmem:[%s7 + $0x2ec] sm:$0xf]
      %v5997 = vld [vmem:[%s7 + $0x2f0] sm:$0xf]
      %v5998 = vld [vmem:[%s7 + $0x2f4] sm:$0xf]
      %v5999 = vld [vmem:[%s7 + $0x2f8] sm:$0xf]
      %v6000 = vld [vmem:[%s7 + $0x2fc] sm:$0xf]
      %v6001 = vld [vmem:[%s7 + $0x300] sm:$0xf]
      %v6002 = vld [vmem:[%s7 + $0x304] sm:$0xf]
      %v6003 = vld [vmem:[%s7 + $0x308] sm:$0xf]
      %v6004 = vld [vmem:[%s7 + $0x30c] sm:$0xf]
      %v6005 = vld [vmem:[%s7 + $0x310] sm:$0xf]
      %v6006 = vld [vmem:[%s7 + $0x314] sm:$0xf]
      %v6007 = vld [vmem:[%s7 + $0x318] sm:$0xf]
      %v6008 = vld [vmem:[%s7 + $0x31c] sm:$0xf]
      %v6009 = vld [vmem:[%s7 + $0x320] sm:$0xf]
      %v6010 = vld [vmem:[%s7 + $0x324] sm:$0xf]
      %v6011 = vld [vmem:[%s7 + $0x328] sm:$0xf]
      %v6012 = vld [vmem:[%s7 + $0x32c] sm:$0xf]
      %v6013 = vld [vmem:[%s7 + $0x330] sm:$0xf]
      %v6014 = vld [vmem:[%s7 + $0x334] sm:$0xf]
      %v6015 = vld [vmem:[%s7 + $0x338] sm:$0xf]
      %v6016 = vld [vmem:[%s7 + $0x33c] sm:$0xf]
      %v6017 = vld [vmem:[%s7 + $0x340] sm:$0xf]
      %v6018 = vld [vmem:[%s7 + $0x344] sm:$0xf]
      %v6019 = vld [vmem:[%s7 + $0x348] sm:$0xf]
      %v6020 = vld [vmem:[%s7 + $0x34c] sm:$0xf]
      %v6021 = vld [vmem:[%s7 + $0x350] sm:$0xf]
      %v6022 = vld [vmem:[%s7 + $0x354] sm:$0xf]
      %v6023 = vld [vmem:[%s7 + $0x358] sm:$0xf]
      %v6024 = vld [vmem:[%s7 + $0x35c] sm:$0xf]
      %v6025 = vld [vmem:[%s7 + $0x360] sm:$0xf]
      %v6026 = vld [vmem:[%s7 + $0x364] sm:$0xf]
      %v6027 = vld [vmem:[%s7 + $0x368] sm:$0xf]
      %v6028 = vld [vmem:[%s7 + $0x36c] sm:$0xf]
      %v6029 = vld [vmem:[%s7 + $0x370] sm:$0xf]
      %v6030 = vld [vmem:[%s7 + $0x374] sm:$0xf]
      %v6031 = vld [vmem:[%s7 + $0x378] sm:$0xf]
      %v6032 = vld [vmem:[%s7 + $0x37c] sm:$0xf]
      %v6033 = vld [vmem:[%s7 + $0x380] sm:$0xf]
      %v6034 = vld [vmem:[%s7 + $0x384] sm:$0xf]
      %v6035 = vld [vmem:[%s7 + $0x388] sm:$0xf]
      %v6036 = vld [vmem:[%s7 + $0x38c] sm:$0xf]
      %v6037 = vld [vmem:[%s7 + $0x390] sm:$0xf]
      %v6038 = vld [vmem:[%s7 + $0x394] sm:$0xf]
      %v6039 = vld [vmem:[%s7 + $0x398] sm:$0xf]
      %v6040 = vld [vmem:[%s7 + $0x39c] sm:$0xf]
      %v6041 = vld [vmem:[%s7 + $0x3a0] sm:$0xf]
      %v6042 = vld [vmem:[%s7 + $0x3a4] sm:$0xf]
      %v6043 = vld [vmem:[%s7 + $0x3a8] sm:$0xf]
      %v6044 = vld [vmem:[%s7 + $0x3ac] sm:$0xf]
      %v6045 = vld [vmem:[%s7 + $0x3b0] sm:$0xf]
      %v6046 = vld [vmem:[%s7 + $0x3b4] sm:$0xf]
      %v6047 = vld [vmem:[%s7 + $0x3b8] sm:$0xf]
      %v6048 = vld [vmem:[%s7 + $0x3bc] sm:$0xf]
      %v6049 = vld [vmem:[%s9 + $0x5] sm:$0x1]
      %v6050 = vlaneseq
      %v6051 = vshrl.u32 %v6050, 7
      %v6052 = vsub.s32 0, %v6051
      %v6053 = vrot.slane %v6049, %v6052
      %v6070 = vunpack.c.l.b16 %v5793
      %v6071 = vunpack.c.h.b16 %v5793
      %v6072 = vunpack.c.l.b16 %v5794
      %v6073 = vunpack.c.h.b16 %v5794
      %v6074 = vunpack.c.l.b16 %v5795
      %v6075 = vunpack.c.h.b16 %v5795
      %v6076 = vunpack.c.l.b16 %v5796
      %v6077 = vunpack.c.h.b16 %v5796
      %v6078 = vunpack.c.l.b16 %v5797
      %v6079 = vunpack.c.h.b16 %v5797
      %v6080 = vunpack.c.l.b16 %v5798
      %v6081 = vunpack.c.h.b16 %v5798
      %v6082 = vunpack.c.l.b16 %v5799
      %v6083 = vunpack.c.h.b16 %v5799
      %v6084 = vunpack.c.l.b16 %v5800
      %v6085 = vunpack.c.l.b16 %v5801
      %v6086 = vunpack.c.h.b16 %v5801
      %v6087 = vunpack.c.l.b16 %v5802
      %v6088 = vunpack.c.h.b16 %v5802
      %v6089 = vunpack.c.l.b16 %v5803
      %v6090 = vunpack.c.h.b16 %v5803
      %v6091 = vunpack.c.l.b16 %v5804
      %v6092 = vunpack.c.h.b16 %v5804
      %v6093 = vunpack.c.l.b16 %v5805
      %v6094 = vunpack.c.h.b16 %v5805
      %v6095 = vunpack.c.l.b16 %v5806
      %v6096 = vunpack.c.h.b16 %v5806
      %v6097 = vunpack.c.l.b16 %v5807
      %v6098 = vunpack.c.h.b16 %v5807
      %v6099 = vunpack.c.l.b16 %v5808
      %v6100 = vpack.c.b16 %v6085, %v6070
      %v6101 = vpack.c.b16 %v6086, %v6071
      %v6102 = vpack.c.b16 %v6087, %v6072
      %v6103 = vpack.c.b16 %v6088, %v6073
      %v6104 = vpack.c.b16 %v6089, %v6074
      %v6105 = vpack.c.b16 %v6090, %v6075
      %v6106 = vpack.c.b16 %v6091, %v6076
      %v6107 = vpack.c.b16 %v6092, %v6077
      %v6108 = vpack.c.b16 %v6093, %v6078
      %v6109 = vpack.c.b16 %v6094, %v6079
      %v6110 = vpack.c.b16 %v6095, %v6080
      %v6111 = vpack.c.b16 %v6096, %v6081
      %v6112 = vpack.c.b16 %v6097, %v6082
      %v6113 = vpack.c.b16 %v6098, %v6083
      %v6114 = vpack.c.b16 %v6099, %v6084
      %v6370 = vunpack.c.l.b16 %v5809
      %v6371 = vunpack.c.l.b16 %v5810
      %v6372 = vunpack.c.l.b16 %v5811
      %v6373 = vunpack.c.l.b16 %v5812
      %v6374 = vunpack.c.l.b16 %v5813
      %v6375 = vunpack.c.l.b16 %v5814
      %v6376 = vunpack.c.l.b16 %v5815
      %v6377 = vunpack.c.l.b16 %v5816
      %v6378 = vunpack.c.l.b16 %v5817
      %v6379 = vunpack.c.l.b16 %v5818
      %v6380 = vunpack.c.l.b16 %v5819
      %v6381 = vunpack.c.l.b16 %v5820
      %v6382 = vunpack.c.l.b16 %v5821
      %v6383 = vunpack.c.l.b16 %v5822
      %v6384 = vunpack.c.l.b16 %v5823
      %v6385 = vunpack.c.l.b16 %v5824
      %v6386 = vunpack.c.l.b16 %v5825
      %v6387 = vunpack.c.l.b16 %v5826
      %v6388 = vunpack.c.l.b16 %v5827
      %v6389 = vunpack.c.l.b16 %v5828
      %v6390 = vunpack.c.l.b16 %v5829
      %v6391 = vunpack.c.l.b16 %v5830
      %v6392 = vunpack.c.l.b16 %v5831
      %v6393 = vunpack.c.l.b16 %v5832
      %v6394 = vunpack.c.l.b16 %v5833
      %v6395 = vunpack.c.l.b16 %v5834
      %v6396 = vunpack.c.l.b16 %v5835
      %v6397 = vunpack.c.l.b16 %v5836
      %v6398 = vunpack.c.l.b16 %v5837
      %v6399 = vunpack.c.l.b16 %v5838
      %v6400 = vunpack.c.l.b16 %v5839
      %v6401 = vunpack.c.l.b16 %v5840
      %v6402 = vunpack.c.l.b16 %v5841
      %v6403 = vunpack.c.l.b16 %v5842
      %v6404 = vunpack.c.l.b16 %v5843
      %v6405 = vunpack.c.l.b16 %v5844
      %v6406 = vunpack.c.l.b16 %v5845
      %v6407 = vunpack.c.l.b16 %v5846
      %v6408 = vunpack.c.l.b16 %v5847
      %v6409 = vunpack.c.l.b16 %v5848
      %v6410 = vunpack.c.l.b16 %v5849
      %v6411 = vunpack.c.l.b16 %v5850
      %v6412 = vunpack.c.l.b16 %v5851
      %v6413 = vunpack.c.l.b16 %v5852
      %v6414 = vunpack.c.l.b16 %v5853
      %v6415 = vunpack.c.l.b16 %v5854
      %v6416 = vunpack.c.l.b16 %v5855
      %v6417 = vunpack.c.l.b16 %v5856
      %v6418 = vunpack.c.l.b16 %v5857
      %v6419 = vunpack.c.l.b16 %v5858
      %v6420 = vunpack.c.l.b16 %v5859
      %v6421 = vunpack.c.l.b16 %v5860
      %v6422 = vunpack.c.l.b16 %v5861
      %v6423 = vunpack.c.l.b16 %v5862
      %v6424 = vunpack.c.l.b16 %v5863
      %v6425 = vunpack.c.l.b16 %v5864
      %v6426 = vunpack.c.l.b16 %v5865
      %v6427 = vunpack.c.l.b16 %v5866
      %v6428 = vunpack.c.l.b16 %v5867
      %v6429 = vunpack.c.l.b16 %v5868
      %v6430 = vunpack.c.l.b16 %v5869
      %v6431 = vunpack.c.l.b16 %v5870
      %v6432 = vunpack.c.l.b16 %v5871
      %v6433 = vunpack.c.l.b16 %v5872
      %v6434 = vunpack.c.l.b16 %v5873
      %v6435 = vunpack.c.l.b16 %v5874
      %v6436 = vunpack.c.l.b16 %v5875
      %v6437 = vunpack.c.l.b16 %v5876
      %v6438 = vunpack.c.l.b16 %v5877
      %v6439 = vunpack.c.l.b16 %v5878
      %v6440 = vunpack.c.l.b16 %v5879
      %v6441 = vunpack.c.l.b16 %v5880
      %v6442 = vunpack.c.l.b16 %v5881
      %v6443 = vunpack.c.l.b16 %v5882
      %v6444 = vunpack.c.l.b16 %v5883
      %v6445 = vunpack.c.l.b16 %v5884
      %v6446 = vunpack.c.l.b16 %v5885
      %v6447 = vunpack.c.l.b16 %v5886
      %v6448 = vunpack.c.l.b16 %v5887
      %v6449 = vunpack.c.l.b16 %v5888
      %v6450 = vunpack.c.l.b16 %v5889
      %v6451 = vunpack.c.l.b16 %v5890
      %v6452 = vunpack.c.l.b16 %v5891
      %v6453 = vunpack.c.l.b16 %v5892
      %v6454 = vunpack.c.l.b16 %v5893
      %v6455 = vunpack.c.l.b16 %v5894
      %v6456 = vunpack.c.l.b16 %v5895
      %v6457 = vunpack.c.l.b16 %v5896
      %v6458 = vunpack.c.l.b16 %v5897
      %v6459 = vunpack.c.l.b16 %v5898
      %v6460 = vunpack.c.l.b16 %v5899
      %v6461 = vunpack.c.l.b16 %v5900
      %v6462 = vunpack.c.l.b16 %v5901
      %v6463 = vunpack.c.l.b16 %v5902
      %v6464 = vunpack.c.l.b16 %v5903
      %v6465 = vunpack.c.l.b16 %v5904
      %v6466 = vunpack.c.l.b16 %v5905
      %v6467 = vunpack.c.l.b16 %v5906
      %v6468 = vunpack.c.l.b16 %v5907
      %v6469 = vunpack.c.l.b16 %v5908
      %v6470 = vunpack.c.l.b16 %v5909
      %v6471 = vunpack.c.l.b16 %v5910
      %v6472 = vunpack.c.l.b16 %v5911
      %v6473 = vunpack.c.l.b16 %v5912
      %v6474 = vunpack.c.l.b16 %v5913
      %v6475 = vunpack.c.l.b16 %v5914
      %v6476 = vunpack.c.l.b16 %v5915
      %v6477 = vunpack.c.l.b16 %v5916
      %v6478 = vunpack.c.l.b16 %v5917
      %v6479 = vunpack.c.l.b16 %v5918
      %v6480 = vunpack.c.l.b16 %v5919
      %v6481 = vunpack.c.l.b16 %v5920
      %v6482 = vunpack.c.l.b16 %v5921
      %v6483 = vunpack.c.l.b16 %v5922
      %v6484 = vunpack.c.l.b16 %v5923
      %v6485 = vunpack.c.l.b16 %v5924
      %v6486 = vunpack.c.l.b16 %v5925
      %v6487 = vunpack.c.l.b16 %v5926
      %v6488 = vunpack.c.l.b16 %v5927
      %v6489 = vunpack.c.l.b16 %v5928
      %v6490 = vunpack.c.l.b16 %v5929
      %v6491 = vunpack.c.l.b16 %v5930
      %v6492 = vunpack.c.l.b16 %v5931
      %v6493 = vunpack.c.l.b16 %v5932
      %v6494 = vunpack.c.l.b16 %v5933
      %v6495 = vunpack.c.l.b16 %v5934
      %v6496 = vunpack.c.l.b16 %v5935
      %v6497 = vunpack.c.l.b16 %v5936
      %v6498 = vunpack.c.l.b16 %v5937
      %v6499 = vunpack.c.l.b16 %v5938
      %v6500 = vunpack.c.l.b16 %v5939
      %v6501 = vunpack.c.l.b16 %v5940
      %v6502 = vunpack.c.l.b16 %v5941
      %v6503 = vunpack.c.l.b16 %v5942
      %v6504 = vunpack.c.l.b16 %v5943
      %v6505 = vunpack.c.l.b16 %v5944
      %v6506 = vunpack.c.l.b16 %v5945
      %v6507 = vunpack.c.l.b16 %v5946
      %v6508 = vunpack.c.l.b16 %v5947
      %v6509 = vunpack.c.l.b16 %v5948
      %v6510 = vunpack.c.l.b16 %v5949
      %v6511 = vunpack.c.l.b16 %v5950
      %v6512 = vunpack.c.l.b16 %v5951
      %v6513 = vunpack.c.l.b16 %v5952
      %v6514 = vunpack.c.l.b16 %v5953
      %v6515 = vunpack.c.l.b16 %v5954
      %v6516 = vunpack.c.l.b16 %v5955
      %v6517 = vunpack.c.l.b16 %v5956
      %v6518 = vunpack.c.l.b16 %v5957
      %v6519 = vunpack.c.l.b16 %v5958
      %v6520 = vunpack.c.l.b16 %v5959
      %v6521 = vunpack.c.l.b16 %v5960
      %v6522 = vunpack.c.l.b16 %v5961
      %v6523 = vunpack.c.l.b16 %v5962
      %v6524 = vunpack.c.l.b16 %v5963
      %v6525 = vunpack.c.l.b16 %v5964
      %v6526 = vunpack.c.l.b16 %v5965
      %v6527 = vunpack.c.l.b16 %v5966
      %v6528 = vunpack.c.l.b16 %v5967
      %v6529 = vunpack.c.l.b16 %v5968
      %v6530 = vunpack.c.l.b16 %v5969
      %v6531 = vunpack.c.l.b16 %v5970
      %v6532 = vunpack.c.l.b16 %v5971
      %v6533 = vunpack.c.l.b16 %v5972
      %v6534 = vunpack.c.l.b16 %v5973
      %v6535 = vunpack.c.l.b16 %v5974
      %v6536 = vunpack.c.l.b16 %v5975
      %v6537 = vunpack.c.l.b16 %v5976
      %v6538 = vunpack.c.l.b16 %v5977
      %v6539 = vunpack.c.l.b16 %v5978
      %v6540 = vunpack.c.l.b16 %v5979
      %v6541 = vunpack.c.l.b16 %v5980
      %v6542 = vunpack.c.l.b16 %v5981
      %v6543 = vunpack.c.l.b16 %v5982
      %v6544 = vunpack.c.l.b16 %v5983
      %v6545 = vunpack.c.l.b16 %v5984
      %v6546 = vunpack.c.l.b16 %v5985
      %v6547 = vunpack.c.l.b16 %v5986
      %v6548 = vunpack.c.l.b16 %v5987
      %v6549 = vunpack.c.l.b16 %v5988
      %v6550 = vunpack.c.l.b16 %v5989
      %v6551 = vunpack.c.l.b16 %v5990
      %v6552 = vunpack.c.l.b16 %v5991
      %v6553 = vunpack.c.l.b16 %v5992
      %v6554 = vunpack.c.l.b16 %v5993
      %v6555 = vunpack.c.l.b16 %v5994
      %v6556 = vunpack.c.l.b16 %v5995
      %v6557 = vunpack.c.l.b16 %v5996
      %v6558 = vunpack.c.l.b16 %v5997
      %v6559 = vunpack.c.l.b16 %v5998
      %v6560 = vunpack.c.l.b16 %v5999
      %v6561 = vunpack.c.l.b16 %v6000
      %v6562 = vunpack.c.l.b16 %v6001
      %v6563 = vunpack.c.l.b16 %v6002
      %v6564 = vunpack.c.l.b16 %v6003
      %v6565 = vunpack.c.l.b16 %v6004
      %v6566 = vunpack.c.l.b16 %v6005
      %v6567 = vunpack.c.l.b16 %v6006
      %v6568 = vunpack.c.l.b16 %v6007
      %v6569 = vunpack.c.l.b16 %v6008
      %v6570 = vunpack.c.l.b16 %v6009
      %v6571 = vunpack.c.l.b16 %v6010
      %v6572 = vunpack.c.l.b16 %v6011
      %v6573 = vunpack.c.l.b16 %v6012
      %v6574 = vunpack.c.l.b16 %v6013
      %v6575 = vunpack.c.l.b16 %v6014
      %v6576 = vunpack.c.l.b16 %v6015
      %v6577 = vunpack.c.l.b16 %v6016
      %v6578 = vunpack.c.l.b16 %v6017
      %v6579 = vunpack.c.l.b16 %v6018
      %v6580 = vunpack.c.l.b16 %v6019
      %v6581 = vunpack.c.l.b16 %v6020
      %v6582 = vunpack.c.l.b16 %v6021
      %v6583 = vunpack.c.l.b16 %v6022
      %v6584 = vunpack.c.l.b16 %v6023
      %v6585 = vunpack.c.l.b16 %v6024
      %v6586 = vunpack.c.l.b16 %v6025
      %v6587 = vunpack.c.l.b16 %v6026
      %v6588 = vunpack.c.l.b16 %v6027
      %v6589 = vunpack.c.l.b16 %v6028
      %v6590 = vunpack.c.l.b16 %v6029
      %v6591 = vunpack.c.l.b16 %v6030
      %v6592 = vunpack.c.l.b16 %v6031
      %v6593 = vunpack.c.l.b16 %v6032
      %v6594 = vunpack.c.l.b16 %v6033
      %v6595 = vunpack.c.l.b16 %v6034
      %v6596 = vunpack.c.l.b16 %v6035
      %v6597 = vunpack.c.l.b16 %v6036
      %v6598 = vunpack.c.l.b16 %v6037
      %v6599 = vunpack.c.l.b16 %v6038
      %v6600 = vunpack.c.l.b16 %v6039
      %v6601 = vunpack.c.l.b16 %v6040
      %v6602 = vunpack.c.l.b16 %v6041
      %v6603 = vunpack.c.l.b16 %v6042
      %v6604 = vunpack.c.l.b16 %v6043
      %v6605 = vunpack.c.l.b16 %v6044
      %v6606 = vunpack.c.l.b16 %v6045
      %v6607 = vunpack.c.l.b16 %v6046
      %v6608 = vunpack.c.l.b16 %v6047
      %v6609 = vunpack.c.l.b16 %v6048
      %v6610 = vpack.c.b16 %v6371, %v6370
      %v6611 = vpack.c.b16 %v6373, %v6372
      %v6612 = vpack.c.b16 %v6375, %v6374
      %v6613 = vpack.c.b16 %v6377, %v6376
      %v6614 = vpack.c.b16 %v6379, %v6378
      %v6615 = vpack.c.b16 %v6381, %v6380
      %v6616 = vpack.c.b16 %v6383, %v6382
      %v6617 = vpack.c.b16 %v6385, %v6384
      %v6618 = vpack.c.b16 %v6387, %v6386
      %v6619 = vpack.c.b16 %v6389, %v6388
      %v6620 = vpack.c.b16 %v6391, %v6390
      %v6621 = vpack.c.b16 %v6393, %v6392
      %v6622 = vpack.c.b16 %v6395, %v6394
      %v6623 = vpack.c.b16 %v6397, %v6396
      %v6624 = vpack.c.b16 %v6399, %v6398
      %v6625 = vpack.c.b16 %v6401, %v6400
      %v6626 = vpack.c.b16 %v6403, %v6402
      %v6627 = vpack.c.b16 %v6405, %v6404
      %v6628 = vpack.c.b16 %v6407, %v6406
      %v6629 = vpack.c.b16 %v6409, %v6408
      %v6630 = vpack.c.b16 %v6411, %v6410
      %v6631 = vpack.c.b16 %v6413, %v6412
      %v6632 = vpack.c.b16 %v6415, %v6414
      %v6633 = vpack.c.b16 %v6417, %v6416
      %v6634 = vpack.c.b16 %v6419, %v6418
      %v6635 = vpack.c.b16 %v6421, %v6420
      %v6636 = vpack.c.b16 %v6423, %v6422
      %v6637 = vpack.c.b16 %v6425, %v6424
      %v6638 = vpack.c.b16 %v6427, %v6426
      %v6639 = vpack.c.b16 %v6429, %v6428
      %v6640 = vpack.c.b16 %v6431, %v6430
      %v6641 = vpack.c.b16 %v6433, %v6432
      %v6642 = vpack.c.b16 %v6435, %v6434
      %v6643 = vpack.c.b16 %v6437, %v6436
      %v6644 = vpack.c.b16 %v6439, %v6438
      %v6645 = vpack.c.b16 %v6441, %v6440
      %v6646 = vpack.c.b16 %v6443, %v6442
      %v6647 = vpack.c.b16 %v6445, %v6444
      %v6648 = vpack.c.b16 %v6447, %v6446
      %v6649 = vpack.c.b16 %v6449, %v6448
      %v6650 = vpack.c.b16 %v6451, %v6450
      %v6651 = vpack.c.b16 %v6453, %v6452
      %v6652 = vpack.c.b16 %v6455, %v6454
      %v6653 = vpack.c.b16 %v6457, %v6456
      %v6654 = vpack.c.b16 %v6459, %v6458
      %v6655 = vpack.c.b16 %v6461, %v6460
      %v6656 = vpack.c.b16 %v6463, %v6462
      %v6657 = vpack.c.b16 %v6465, %v6464
      %v6658 = vpack.c.b16 %v6467, %v6466
      %v6659 = vpack.c.b16 %v6469, %v6468
      %v6660 = vpack.c.b16 %v6471, %v6470
      %v6661 = vpack.c.b16 %v6473, %v6472
      %v6662 = vpack.c.b16 %v6475, %v6474
      %v6663 = vpack.c.b16 %v6477, %v6476
      %v6664 = vpack.c.b16 %v6479, %v6478
      %v6665 = vpack.c.b16 %v6481, %v6480
      %v6666 = vpack.c.b16 %v6483, %v6482
      %v6667 = vpack.c.b16 %v6485, %v6484
      %v6668 = vpack.c.b16 %v6487, %v6486
      %v6669 = vpack.c.b16 %v6489, %v6488
      %v6670 = vpack.c.b16 %v6491, %v6490
      %v6671 = vpack.c.b16 %v6493, %v6492
      %v6672 = vpack.c.b16 %v6495, %v6494
      %v6673 = vpack.c.b16 %v6497, %v6496
      %v6674 = vpack.c.b16 %v6499, %v6498
      %v6675 = vpack.c.b16 %v6501, %v6500
      %v6676 = vpack.c.b16 %v6503, %v6502
      %v6677 = vpack.c.b16 %v6505, %v6504
      %v6678 = vpack.c.b16 %v6507, %v6506
      %v6679 = vpack.c.b16 %v6509, %v6508
      %v6680 = vpack.c.b16 %v6511, %v6510
      %v6681 = vpack.c.b16 %v6513, %v6512
      %v6682 = vpack.c.b16 %v6515, %v6514
      %v6683 = vpack.c.b16 %v6517, %v6516
      %v6684 = vpack.c.b16 %v6519, %v6518
      %v6685 = vpack.c.b16 %v6521, %v6520
      %v6686 = vpack.c.b16 %v6523, %v6522
      %v6687 = vpack.c.b16 %v6525, %v6524
      %v6688 = vpack.c.b16 %v6527, %v6526
      %v6689 = vpack.c.b16 %v6529, %v6528
      %v6690 = vpack.c.b16 %v6531, %v6530
      %v6691 = vpack.c.b16 %v6533, %v6532
      %v6692 = vpack.c.b16 %v6535, %v6534
      %v6693 = vpack.c.b16 %v6537, %v6536
      %v6694 = vpack.c.b16 %v6539, %v6538
      %v6695 = vpack.c.b16 %v6541, %v6540
      %v6696 = vpack.c.b16 %v6543, %v6542
      %v6697 = vpack.c.b16 %v6545, %v6544
      %v6698 = vpack.c.b16 %v6547, %v6546
      %v6699 = vpack.c.b16 %v6549, %v6548
      %v6700 = vpack.c.b16 %v6551, %v6550
      %v6701 = vpack.c.b16 %v6553, %v6552
      %v6702 = vpack.c.b16 %v6555, %v6554
      %v6703 = vpack.c.b16 %v6557, %v6556
      %v6704 = vpack.c.b16 %v6559, %v6558
      %v6705 = vpack.c.b16 %v6561, %v6560
      %v6706 = vpack.c.b16 %v6563, %v6562
      %v6707 = vpack.c.b16 %v6565, %v6564
      %v6708 = vpack.c.b16 %v6567, %v6566
      %v6709 = vpack.c.b16 %v6569, %v6568
      %v6710 = vpack.c.b16 %v6571, %v6570
      %v6711 = vpack.c.b16 %v6573, %v6572
      %v6712 = vpack.c.b16 %v6575, %v6574
      %v6713 = vpack.c.b16 %v6577, %v6576
      %v6714 = vpack.c.b16 %v6579, %v6578
      %v6715 = vpack.c.b16 %v6581, %v6580
      %v6716 = vpack.c.b16 %v6583, %v6582
      %v6717 = vpack.c.b16 %v6585, %v6584
      %v6718 = vpack.c.b16 %v6587, %v6586
      %v6719 = vpack.c.b16 %v6589, %v6588
      %v6720 = vpack.c.b16 %v6591, %v6590
      %v6721 = vpack.c.b16 %v6593, %v6592
      %v6722 = vpack.c.b16 %v6595, %v6594
      %v6723 = vpack.c.b16 %v6597, %v6596
      %v6724 = vpack.c.b16 %v6599, %v6598
      %v6725 = vpack.c.b16 %v6601, %v6600
      %v6726 = vpack.c.b16 %v6603, %v6602
      %v6727 = vpack.c.b16 %v6605, %v6604
      %v6728 = vpack.c.b16 %v6607, %v6606
      %v6729 = vpack.c.b16 %v6609, %v6608
      %6850 = vmatprep.subr.bf16.mxu0 0
      %6851 = vmatpush1.bf16.msra.mxu0 %v6610
      %6852 = vmatprep.subr.bf16.mxu0 0
      %6853 = vmatpush1.bf16.msra.mxu0 %v6611
      %6854 = vmatprep.subr.bf16.mxu0 0
      %6855 = vmatpush1.bf16.msra.mxu0 %v6612
      %6856 = vmatprep.subr.bf16.mxu0 0
      %6857 = vmatpush1.bf16.msra.mxu0 %v6613
      %6858 = vmatprep.subr.bf16.mxu0 0
      %6859 = vmatpush1.bf16.msra.mxu0 %v6614
      %6860 = vmatprep.subr.bf16.mxu0 0
      %6861 = vmatpush1.bf16.msra.mxu0 %v6615
      %6862 = vmatprep.subr.bf16.mxu0 0
      %6863 = vmatpush1.bf16.msra.mxu0 %v6616
      %6864 = vmatprep.subr.bf16.mxu0 0
      %6865 = vmatpush1.bf16.msra.mxu0 %v6617
      %6866 = vmatprep.subr.bf16.mxu0 0
      %6867 = vmatpush1.bf16.msra.mxu0 %v6618
      %6868 = vmatprep.subr.bf16.mxu0 0
      %6869 = vmatpush1.bf16.msra.mxu0 %v6619
      %6870 = vmatprep.subr.bf16.mxu0 0
      %6871 = vmatpush1.bf16.msra.mxu0 %v6620
      %6872 = vmatprep.subr.bf16.mxu0 0
      %6873 = vmatpush1.bf16.msra.mxu0 %v6621
      %6874 = vmatprep.subr.bf16.mxu0 0
      %6875 = vmatpush1.bf16.msra.mxu0 %v6622
      %6876 = vmatprep.subr.bf16.mxu0 0
      %6877 = vmatpush1.bf16.msra.mxu0 %v6623
      %6878 = vmatprep.subr.bf16.mxu0 0
      %6879 = vmatpush1.bf16.msra.mxu0 %v6624
      %6880 = vmatprep.subr.bf16.mxu0 0
      %6881 = vmatpush1.bf16.msra.mxu0 %v6625
      %6882 = vmatprep.mubr.bf16.mxu0 %v6101
      %6883 = vmatmul.mubr.bf16.gmra.mrb[0].mxu0 %v6100
      %v6884 = vpop.f32.mrb[0].mxu0
      %v6885 = vadd.f32 %v6053, %v6884
      %v6886 = vpop.f32.mrb[0].mxu0
      %v6887 = vpop.f32.mrb[0].mxu0
      %v6888 = vadd.f32 %v6053, %v6887
      %v6889 = vpop.f32.mrb[0].mxu0
      %6890 = vdwg.mxu0
      %6891 = vmatprep.subr.bf16.mxu0 0
      %6892 = vmatpush1.bf16.msra.mxu0 %v6626
      %6893 = vmatprep.subr.bf16.mxu0 0
      %6894 = vmatpush1.bf16.msra.mxu0 %v6627
      %6895 = vmatprep.subr.bf16.mxu0 0
      %6896 = vmatpush1.bf16.msra.mxu0 %v6628
      %6897 = vmatprep.subr.bf16.mxu0 0
      %6898 = vmatpush1.bf16.msra.mxu0 %v6629
      %6899 = vmatprep.subr.bf16.mxu0 0
      %6900 = vmatpush1.bf16.msra.mxu0 %v6630
      %6901 = vmatprep.subr.bf16.mxu0 0
      %6902 = vmatpush1.bf16.msra.mxu0 %v6631
      %6903 = vmatprep.subr.bf16.mxu0 0
      %6904 = vmatpush1.bf16.msra.mxu0 %v6632
      %6905 = vmatprep.subr.bf16.mxu0 0
      %6906 = vmatpush1.bf16.msra.mxu0 %v6633
      %6907 = vmatprep.subr.bf16.mxu0 0
      %6908 = vmatpush1.bf16.msra.mxu0 %v6634
      %6909 = vmatprep.subr.bf16.mxu0 0
      %6910 = vmatpush1.bf16.msra.mxu0 %v6635
      %6911 = vmatprep.subr.bf16.mxu0 0
      %6912 = vmatpush1.bf16.msra.mxu0 %v6636
      %6913 = vmatprep.subr.bf16.mxu0 0
      %6914 = vmatpush1.bf16.msra.mxu0 %v6637
      %6915 = vmatprep.subr.bf16.mxu0 0
      %6916 = vmatpush1.bf16.msra.mxu0 %v6638
      %6917 = vmatprep.subr.bf16.mxu0 0
      %6918 = vmatpush1.bf16.msra.mxu0 %v6639
      %6919 = vmatprep.subr.bf16.mxu0 0
      %6920 = vmatpush1.bf16.msra.mxu0 %v6640
      %6921 = vmatprep.subr.bf16.mxu0 0
      %6922 = vmatpush1.bf16.msra.mxu0 %v6641
      %6923 = vmatprep.mubr.bf16.mxu0 %v6103
      %6924 = vmatmul.mubr.bf16.gmra.mrb[0].mxu0 %v6102
      %v6925 = vpop.f32.mrb[0].mxu0
      %v6926 = vadd.f32 %v6885, %v6925
      %v6927 = vpop.f32.mrb[0].mxu0
      %v6928 = vpop.f32.mrb[0].mxu0
      %v6929 = vadd.f32 %v6888, %v6928
      %v6930 = vpop.f32.mrb[0].mxu0
      %6931 = vdwg.mxu0
      %6932 = vmatprep.subr.bf16.mxu0 0
      %6933 = vmatpush1.bf16.msra.mxu0 %v6642
      %6934 = vmatprep.subr.bf16.mxu0 0
      %6935 = vmatpush1.bf16.msra.mxu0 %v6643
      %6936 = vmatprep.subr.bf16.mxu0 0
      %6937 = vmatpush1.bf16.msra.mxu0 %v6644
      %6938 = vmatprep.subr.bf16.mxu0 0
      %6939 = vmatpush1.bf16.msra.mxu0 %v6645
      %6940 = vmatprep.subr.bf16.mxu0 0
      %6941 = vmatpush1.bf16.msra.mxu0 %v6646
      %6942 = vmatprep.subr.bf16.mxu0 0
      %6943 = vmatpush1.bf16.msra.mxu0 %v6647
      %6944 = vmatprep.subr.bf16.mxu0 0
      %6945 = vmatpush1.bf16.msra.mxu0 %v6648
      %6946 = vmatprep.subr.bf16.mxu0 0
      %6947 = vmatpush1.bf16.msra.mxu0 %v6649
      %6948 = vmatprep.subr.bf16.mxu0 0
      %6949 = vmatpush1.bf16.msra.mxu0 %v6650
      %6950 = vmatprep.subr.bf16.mxu0 0
      %6951 = vmatpush1.bf16.msra.mxu0 %v6651
      %6952 = vmatprep.subr.bf16.mxu0 0
      %6953 = vmatpush1.bf16.msra.mxu0 %v6652
      %6954 = vmatprep.subr.bf16.mxu0 0
      %6955 = vmatpush1.bf16.msra.mxu0 %v6653
      %6956 = vmatprep.subr.bf16.mxu0 0
      %6957 = vmatpush1.bf16.msra.mxu0 %v6654
      %6958 = vmatprep.subr.bf16.mxu0 0
      %6959 = vmatpush1.bf16.msra.mxu0 %v6655
      %6960 = vmatprep.subr.bf16.mxu0 0
      %6961 = vmatpush1.bf16.msra.mxu0 %v6656
      %6962 = vmatprep.subr.bf16.mxu0 0
      %6963 = vmatpush1.bf16.msra.mxu0 %v6657
      %6964 = vmatprep.mubr.bf16.mxu0 %v6105
      %6965 = vmatmul.mubr.bf16.gmra.mrb[0].mxu0 %v6104
      %v6966 = vpop.f32.mrb[0].mxu0
      %v6967 = vadd.f32 %v6926, %v6966
      %v6968 = vpop.f32.mrb[0].mxu0
      %v6969 = vpop.f32.mrb[0].mxu0
      %v6970 = vadd.f32 %v6929, %v6969
      %v6971 = vpop.f32.mrb[0].mxu0
      %6972 = vdwg.mxu0
      %6973 = vmatprep.subr.bf16.mxu0 0
      %6974 = vmatpush1.bf16.msra.mxu0 %v6658
      %6975 = vmatprep.subr.bf16.mxu0 0
      %6976 = vmatpush1.bf16.msra.mxu0 %v6659
      %6977 = vmatprep.subr.bf16.mxu0 0
      %6978 = vmatpush1.bf16.msra.mxu0 %v6660
      %6979 = vmatprep.subr.bf16.mxu0 0
      %6980 = vmatpush1.bf16.msra.mxu0 %v6661
      %6981 = vmatprep.subr.bf16.mxu0 0
      %6982 = vmatpush1.bf16.msra.mxu0 %v6662
      %6983 = vmatprep.subr.bf16.mxu0 0
      %6984 = vmatpush1.bf16.msra.mxu0 %v6663
      %6985 = vmatprep.subr.bf16.mxu0 0
      %6986 = vmatpush1.bf16.msra.mxu0 %v6664
      %6987 = vmatprep.subr.bf16.mxu0 0
      %6988 = vmatpush1.bf16.msra.mxu0 %v6665
      %6989 = vmatprep.subr.bf16.mxu0 0
      %6990 = vmatpush1.bf16.msra.mxu0 %v6666
      %6991 = vmatprep.subr.bf16.mxu0 0
      %6992 = vmatpush1.bf16.msra.mxu0 %v6667
      %6993 = vmatprep.subr.bf16.mxu0 0
      %6994 = vmatpush1.bf16.msra.mxu0 %v6668
      %6995 = vmatprep.subr.bf16.mxu0 0
      %6996 = vmatpush1.bf16.msra.mxu0 %v6669
      %6997 = vmatprep.subr.bf16.mxu0 0
      %6998 = vmatpush1.bf16.msra.mxu0 %v6670
      %6999 = vmatprep.subr.bf16.mxu0 0
      %7000 = vmatpush1.bf16.msra.mxu0 %v6671
      %7001 = vmatprep.subr.bf16.mxu0 0
      %7002 = vmatpush1.bf16.msra.mxu0 %v6672
      %7003 = vmatprep.subr.bf16.mxu0 0
      %7004 = vmatpush1.bf16.msra.mxu0 %v6673
      %7005 = vmatprep.mubr.bf16.mxu0 %v6107
      %7006 = vmatmul.mubr.bf16.gmra.mrb[0].mxu0 %v6106
      %v7007 = vpop.f32.mrb[0].mxu0
      %v7008 = vadd.f32 %v6967, %v7007
      %v7009 = vpop.f32.mrb[0].mxu0
      %v7010 = vpop.f32.mrb[0].mxu0
      %v7011 = vadd.f32 %v6970, %v7010
      %v7012 = vpop.f32.mrb[0].mxu0
      %7013 = vdwg.mxu0
      %7014 = vmatprep.subr.bf16.mxu0 0
      %7015 = vmatpush1.bf16.msra.mxu0 %v6674
      %7016 = vmatprep.subr.bf16.mxu0 0
      %7017 = vmatpush1.bf16.msra.mxu0 %v6675
      %7018 = vmatprep.subr.bf16.mxu0 0
      %7019 = vmatpush1.bf16.msra.mxu0 %v6676
      %7020 = vmatprep.subr.bf16.mxu0 0
      %7021 = vmatpush1.bf16.msra.mxu0 %v6677
      %7022 = vmatprep.subr.bf16.mxu0 0
      %7023 = vmatpush1.bf16.msra.mxu0 %v6678
      %7024 = vmatprep.subr.bf16.mxu0 0
      %7025 = vmatpush1.bf16.msra.mxu0 %v6679
      %7026 = vmatprep.subr.bf16.mxu0 0
      %7027 = vmatpush1.bf16.msra.mxu0 %v6680
      %7028 = vmatprep.subr.bf16.mxu0 0
      %7029 = vmatpush1.bf16.msra.mxu0 %v6681
      %7030 = vmatprep.subr.bf16.mxu0 0
      %7031 = vmatpush1.bf16.msra.mxu0 %v6682
      %7032 = vmatprep.subr.bf16.mxu0 0
      %7033 = vmatpush1.bf16.msra.mxu0 %v6683
      %7034 = vmatprep.subr.bf16.mxu0 0
      %7035 = vmatpush1.bf16.msra.mxu0 %v6684
      %7036 = vmatprep.subr.bf16.mxu0 0
      %7037 = vmatpush1.bf16.msra.mxu0 %v6685
      %7038 = vmatprep.subr.bf16.mxu0 0
      %7039 = vmatpush1.bf16.msra.mxu0 %v6686
      %7040 = vmatprep.subr.bf16.mxu0 0
      %7041 = vmatpush1.bf16.msra.mxu0 %v6687
      %7042 = vmatprep.subr.bf16.mxu0 0
      %7043 = vmatpush1.bf16.msra.mxu0 %v6688
      %7044 = vmatprep.subr.bf16.mxu0 0
      %7045 = vmatpush1.bf16.msra.mxu0 %v6689
      %7046 = vmatprep.mubr.bf16.mxu0 %v6109
      %7047 = vmatmul.mubr.bf16.gmra.mrb[0].mxu0 %v6108
      %v7048 = vpop.f32.mrb[0].mxu0
      %v7049 = vadd.f32 %v7008, %v7048
      %v7050 = vpop.f32.mrb[0].mxu0
      %v7051 = vpop.f32.mrb[0].mxu0
      %v7052 = vadd.f32 %v7011, %v7051
      %v7053 = vpop.f32.mrb[0].mxu0
      %7054 = vdwg.mxu0
      %7055 = vmatprep.subr.bf16.mxu0 0
      %7056 = vmatpush1.bf16.msra.mxu0 %v6690
      %7057 = vmatprep.subr.bf16.mxu0 0
      %7058 = vmatpush1.bf16.msra.mxu0 %v6691
      %7059 = vmatprep.subr.bf16.mxu0 0
      %7060 = vmatpush1.bf16.msra.mxu0 %v6692
      %7061 = vmatprep.subr.bf16.mxu0 0
      %7062 = vmatpush1.bf16.msra.mxu0 %v6693
      %7063 = vmatprep.subr.bf16.mxu0 0
      %7064 = vmatpush1.bf16.msra.mxu0 %v6694
      %7065 = vmatprep.subr.bf16.mxu0 0
      %7066 = vmatpush1.bf16.msra.mxu0 %v6695
      %7067 = vmatprep.subr.bf16.mxu0 0
      %7068 = vmatpush1.bf16.msra.mxu0 %v6696
      %7069 = vmatprep.subr.bf16.mxu0 0
      %7070 = vmatpush1.bf16.msra.mxu0 %v6697
      %7071 = vmatprep.subr.bf16.mxu0 0
      %7072 = vmatpush1.bf16.msra.mxu0 %v6698
      %7073 = vmatprep.subr.bf16.mxu0 0
      %7074 = vmatpush1.bf16.msra.mxu0 %v6699
      %7075 = vmatprep.subr.bf16.mxu0 0
      %7076 = vmatpush1.bf16.msra.mxu0 %v6700
      %7077 = vmatprep.subr.bf16.mxu0 0
      %7078 = vmatpush1.bf16.msra.mxu0 %v6701
      %7079 = vmatprep.subr.bf16.mxu0 0
      %7080 = vmatpush1.bf16.msra.mxu0 %v6702
      %7081 = vmatprep.subr.bf16.mxu0 0
      %7082 = vmatpush1.bf16.msra.mxu0 %v6703
      %7083 = vmatprep.subr.bf16.mxu0 0
      %7084 = vmatpush1.bf16.msra.mxu0 %v6704
      %7085 = vmatprep.subr.bf16.mxu0 0
      %7086 = vmatpush1.bf16.msra.mxu0 %v6705
      %7087 = vmatprep.mubr.bf16.mxu0 %v6111
      %7088 = vmatmul.mubr.bf16.gmra.mrb[0].mxu0 %v6110
      %v7089 = vpop.f32.mrb[0].mxu0
      %v7090 = vadd.f32 %v7049, %v7089
      %v7091 = vpop.f32.mrb[0].mxu0
      %v7092 = vpop.f32.mrb[0].mxu0
      %v7093 = vadd.f32 %v7052, %v7092
      %v7094 = vpop.f32.mrb[0].mxu0
      %7095 = vdwg.mxu0
      %7096 = vmatprep.subr.bf16.mxu0 0
      %7097 = vmatpush1.bf16.msra.mxu0 %v6706
      %7098 = vmatprep.subr.bf16.mxu0 0
      %7099 = vmatpush1.bf16.msra.mxu0 %v6707
      %7100 = vmatprep.subr.bf16.mxu0 0
      %7101 = vmatpush1.bf16.msra.mxu0 %v6708
      %7102 = vmatprep.subr.bf16.mxu0 0
      %7103 = vmatpush1.bf16.msra.mxu0 %v6709
      %7104 = vmatprep.subr.bf16.mxu0 0
      %7105 = vmatpush1.bf16.msra.mxu0 %v6710
      %7106 = vmatprep.subr.bf16.mxu0 0
      %7107 = vmatpush1.bf16.msra.mxu0 %v6711
      %7108 = vmatprep.subr.bf16.mxu0 0
      %7109 = vmatpush1.bf16.msra.mxu0 %v6712
      %7110 = vmatprep.subr.bf16.mxu0 0
      %7111 = vmatpush1.bf16.msra.mxu0 %v6713
      %7112 = vmatprep.subr.bf16.mxu0 0
      %7113 = vmatpush1.bf16.msra.mxu0 %v6714
      %7114 = vmatprep.subr.bf16.mxu0 0
      %7115 = vmatpush1.bf16.msra.mxu0 %v6715
      %7116 = vmatprep.subr.bf16.mxu0 0
      %7117 = vmatpush1.bf16.msra.mxu0 %v6716
      %7118 = vmatprep.subr.bf16.mxu0 0
      %7119 = vmatpush1.bf16.msra.mxu0 %v6717
      %7120 = vmatprep.subr.bf16.mxu0 0
      %7121 = vmatpush1.bf16.msra.mxu0 %v6718
      %7122 = vmatprep.subr.bf16.mxu0 0
      %7123 = vmatpush1.bf16.msra.mxu0 %v6719
      %7124 = vmatprep.subr.bf16.mxu0 0
      %7125 = vmatpush1.bf16.msra.mxu0 %v6720
      %7126 = vmatprep.subr.bf16.mxu0 0
      %7127 = vmatpush1.bf16.msra.mxu0 %v6721
      %7128 = vmatprep.mubr.bf16.mxu0 %v6113
      %7129 = vmatmul.mubr.bf16.gmra.mrb[0].mxu0 %v6112
      %v7130 = vpop.f32.mrb[0].mxu0
      %v7131 = vadd.f32 %v7090, %v7130
      %v7132 = vpop.f32.mrb[0].mxu0
      %v7133 = vpop.f32.mrb[0].mxu0
      %v7134 = vadd.f32 %v7093, %v7133
      %v7135 = vpop.f32.mrb[0].mxu0
      %7136 = vdwg.mxu0
      %7137 = vmatprep.subr.bf16.mxu0 0
      %7138 = vmatpush1.bf16.msra.mxu0 %v6722
      %7139 = vmatprep.subr.bf16.mxu0 0
      %7140 = vmatpush1.bf16.msra.mxu0 %v6723
      %7141 = vmatprep.subr.bf16.mxu0 0
      %7142 = vmatpush1.bf16.msra.mxu0 %v6724
      %7143 = vmatprep.subr.bf16.mxu0 0
      %7144 = vmatpush1.bf16.msra.mxu0 %v6725
      %7145 = vmatprep.subr.bf16.mxu0 0
      %7146 = vmatpush1.bf16.msra.mxu0 %v6726
      %7147 = vmatprep.subr.bf16.mxu0 0
      %7148 = vmatpush1.bf16.msra.mxu0 %v6727
      %7149 = vmatprep.subr.bf16.mxu0 0
      %7150 = vmatpush1.bf16.msra.mxu0 %v6728
      %7151 = vmatprep.subr.bf16.mxu0 0
      %7152 = vmatpush1.bf16.msra.mxu0 %v6729
      %7153 = vmatprep.subr.bf16.mxu0 0
      %7154 = vmatpush1.bf16.msra.mxu0 0
      %7155 = vmatprep.subr.bf16.mxu0 0
      %7156 = vmatpush1.bf16.msra.mxu0 0
      %7157 = vmatprep.subr.bf16.mxu0 0
      %7158 = vmatpush1.bf16.msra.mxu0 0
      %7159 = vmatprep.subr.bf16.mxu0 0
      %7160 = vmatpush1.bf16.msra.mxu0 0
      %7161 = vmatprep.subr.bf16.mxu0 0
      %7162 = vmatpush1.bf16.msra.mxu0 0
      %7163 = vmatprep.subr.bf16.mxu0 0
      %7164 = vmatpush1.bf16.msra.mxu0 0
      %7165 = vmatprep.subr.bf16.mxu0 0
      %7166 = vmatpush1.bf16.msra.mxu0 0
      %7167 = vmatprep.subr.bf16.mxu0 0
      %7168 = vmatpush1.bf16.msra.mxu0 0
      %7169 = vmatprep.mubr.bf16.mxu0 0
      %7170 = vmatmul.mubr.bf16.gmra.mrb[0].mxu0 %v6114
      %v7171 = vpop.f32.mrb[0].mxu0
      %v7172 = vadd.f32 %v7131, %v7171
      %v7173 = vpop.f32.mrb[0].mxu0
      %v7174 = vpop.f32.mrb[0].mxu0
      %v7175 = vadd.f32 %v7134, %v7174
      %v7176 = vpop.f32.mrb[0].mxu0
      %7177 = vdwg.mxu0
      %v7178 = vmax.f32 %v7172, 0.0
      %v7179 = vmax.f32 %v7175, 0.0
      %v7180 = vmul.f32 %v7178, %v3808
      %v7181 = vmul.f32 %v7179, %v3812
      %v7182 = vsel %vm1291, %v7180, -inf
      %v7183 = vsel %vm1291, %v7181, -inf
      %v7184 = vmax.f32 %v7182, %v7183
      %v7185 = vrot.slane %v7184, 4
      %v7186 = vmax.f32 %v7184, %v7185
      %v7187 = vrot.slane %v7186, 2
      %v7188 = vmax.f32 %v7186, %v7187
      %v7189 = vrot.slane %v7188, 1
      %v7190 = vmax.f32 %v7188, %v7189
      %v7191 = vld [vmem:[%s10 + $0x5] sm:$0x1]
      %v7192 = vmul.f32 %v7190, %v7191
      %v7193 = vadd.f32 %v5792, %v7192
      %vm7194 = vcmask 843776
      %v7195 = vsel %vm7194, %v7193, 0.0
      %7196 = vadd.xlane.f32.xlu0 %v7195
      %v7197 = vpop.xlane.xlu0 %7196
      %v7198 = vld [vmem:[#allocation2] sm:$0x1]
      %v7199 = vadd.f32 %v7197, %v7198
      %vm7200 = vcmask 0
      %7201 = vst.msk [vmem:[%s431] sm:$0x1] %vm7200, %v7199
      %p7202 = scmp.lt.s32.totalorder %s25, 1
      %s7203 = scalar_select %p7202, %s25, 1
      %s7204 = scalar_lea.vmem %s12, %s7203
      // Predicated region
      $region69: #{tpu_custom_call.1} parent=67 // pred_check
        %p7205 = pneg %p305
      $region70: #{tpu_custom_call.1} parent=67 // pred_check_branch
        %7207 = sbr.rel (%p7205) target = $region72
      $region71: #{tpu_custom_call.1} parent=67 // pred_region
        _
      $region72: #{tpu_custom_call.1} parent=67 // pred_fallthru
        _
    $region68: #{tpu_custom_call.1} parent=5 // pred_fallthru
      _
    %p7208 = scmp.le.s32.totalorder 2, %s20
    // Predicated region
    $region73: #{tpu_custom_call.1} parent=5 // pred_check
      %p7209 = pneg %p7208
    $region74: #{tpu_custom_call.1} parent=5 // pred_check_branch
      %7211 = sbr.rel (%p7209) target = $region76
    $region75: #{tpu_custom_call.1} parent=5 // pred_region
      %s7212 = ssub.s32 %s20, 2
      // Predicated region
      $region77: #{tpu_custom_call.1} parent=75 // pred_check
        %p7213 = pneg %p311
      $region78: #{tpu_custom_call.1} parent=75 // pred_check_branch
        %7215 = sbr.rel (%p7213) target = $region80
      $region79: #{tpu_custom_call.1} parent=75 // pred_region
        %p7216 = scmp.lt.s32.totalorder %s26, 1
        %s7217 = scalar_select %p7216, %s26, 1
        %s7218 = scalar_lea.vmem %s12, %s7217
      $region80: #{tpu_custom_call.1} parent=75 // pred_fallthru
        _
    $region76: #{tpu_custom_call.1} parent=5 // pred_fallthru
      _
  $region6: #{tpu_custom_call.1} parent=0 // loop_footer
    %s24 = sadd.s32 1, %s20
  $region7: #{tpu_custom_call.1} parent=0 // loop_footer_branch
    %19 = sbr.rel target = $region3
  $region8: #{tpu_custom_call.1} parent=0 // loop_exit
    _

</llo_original>
